<compile_context>
chip_gen: v7x
topology: tpu7x:2x2x1
jax: 0.10.0
libtpu: 0.0.40
codegen_flags: <defaults>
</compile_context>

<pallas_src>
import functools

import numpy as np

import jax
import jax.numpy as jnp
from jax import lax
from jax.experimental import pallas as pl
from jax.experimental.pallas import tpu as pltpu


def _fftconv_kernel(x_ref, g_ref, o_ref, *, block_l, nblk, bsz, cblk, use_bf16):
    """Causal depthwise conv for `cblk` channels via diagonal-stacked matmuls.

    x_ref: (cblk, nblk*B, T)   block-major inputs; row k*B+b = x[b, c, kT:(k+1)T]
    g_ref: (cblk, 1, l_pad+T)  zero-padded filters; g[c, 0, t] = filter[c, t-T]
    o_ref: (cblk, nblk*B, T)   float32 outputs, same row layout as x_ref
    """
    T = block_l

    # Hoisted row iota + per-pass bit masks for the log-shift Toeplitz build
    # (JAX does not CSE broadcast_in_dim -> build once, reuse everywhere).
    row = lax.broadcasted_iota(jnp.int32, (T, 1), 0)
    nbits = (T - 1).bit_length()
    bit_masks = [(row & (1 << b)) != 0 for b in range(nbits)]

    for c in range(cblk):
        for d in range(nblk):
            # ---- Build the (T, T) Toeplitz tile for diagonal offset d:
            #        tile[i, s] = filter[c, d*T + s - i]   (zero outside [0, L))
            # Row i of the (T, 2T) working bank is the filter slab rolled right
            # by i (log2(T) constant-shift XLU rolls selected by the bits of
            # the row index).  Columns [T, 2T) never see the circular
            # wraparound because the max shift is T-1 < T.
            slab = g_ref[c, :, pl.ds(d * T, 2 * T)]              # (1, 2T) f32
            bank = jnp.broadcast_to(slab, (T, 2 * T))
            for b in range(nbits):
                bank = jnp.where(bit_masks[b],
                                 pltpu.roll(bank, shift=1 << b, axis=1),
                                 bank)
            tile = bank[:, T:2 * T]                              # (T, T) f32

            # ---- One MXU matmul per diagonal; every causal block pair
            # (k, k+d) is stacked along M, so M = (nblk - d) * B.
            rows = (nblk - d) * bsz
            lhs = x_ref[c, pl.ds(0, rows), :]                    # (rows, T)
            if use_bf16:
                contrib = jnp.dot(lhs, tile.astype(jnp.bfloat16),
                                  preferred_element_type=jnp.float32)
            else:
                # ~f32-accurate bf16x3 decomposition with f32 accumulation
                # (the MXU multiplies bf16 natively; a_lo@b_lo term dropped).
                l_hi = lhs.astype(jnp.bfloat16)
                l_lo = (lhs - l_hi.astype(jnp.float32)).astype(jnp.bfloat16)
                t_hi = tile.astype(jnp.bfloat16)
                t_lo = (tile - t_hi.astype(jnp.float32)).astype(jnp.bfloat16)
                contrib = (
                    jnp.dot(l_hi, t_hi, preferred_element_type=jnp.float32)
                    + jnp.dot(l_hi, t_lo, preferred_element_type=jnp.float32)
                    + jnp.dot(l_lo, t_hi, preferred_element_type=jnp.float32))

            if d == 0:
                o_ref[c, :, :] = contrib                         # full assign
            else:
                sl = pl.ds(d * bsz, rows)
                o_ref[c, sl, :] = o_ref[c, sl, :] + contrib      # accumulate


def _pick_block_len(l_pad):
    """Native MXU tile: 128 (rows/cols) on v5e, 256 on v6e / v7x."""
    t = 128
    try:
        kind = jax.devices()[0].device_kind.lower()
        if ("v5 lite" not in kind) and ("v5lite" not in kind) and ("v5e" not in kind):
            t = 256
    except Exception:
        t = 128
    if l_pad < t or l_pad % t != 0:
        t = 128
    return t


def _largest_divisor_at_most(n, k):
    k = max(1, min(n, k))
    while n % k:
        k -= 1
    return k


def fused_fftconv(x, filt, *, compute_dtype=jnp.bfloat16):
    """y = irfft(rfft(x, 2L) * rfft(filter, 2L))[..., :L]  (causal depthwise conv).

    x: (B, C, L) float, filt: (C, L) float -> (B, C, L) float32.

    compute_dtype:
      jnp.bfloat16 (default) : native-rate bf16 MXU operands, f32 accumulation.
      jnp.float32            : explicit bf16x3 decomposition (~f32 accuracy).
    """
    B, C, L = x.shape
    assert filt.shape == (C, L), (filt.shape, (C, L))

    x = x.astype(jnp.float32)
    filt = filt.astype(jnp.float32)

    # Lane-dense layout: pad the sequence axis to a multiple of 128; extra zero
    # taps / zero inputs do not change y[..., :L] for a causal conv.
    l_pad = ((L + 127) // 128) * 128
    T = _pick_block_len(l_pad)
    nblk = l_pad // T

    use_bf16 = jnp.dtype(compute_dtype) == jnp.dtype(jnp.bfloat16)
    in_dtype = jnp.bfloat16 if use_bf16 else jnp.float32

    # Block-major, channel-major input rows: row k*B + b of channel c holds
    # x[b, c, k*T:(k+1)*T]; each diagonal offset d then becomes a single matmul
    # with M = (nblk - d) * B.
    xp = jnp.pad(x, ((0, 0), (0, 0), (0, l_pad - L)))
    x_cbt = (xp.reshape(B, C, nblk, T).transpose(1, 2, 0, 3)
               .reshape(C, nblk * B, T).astype(in_dtype))

    # Zero-padded filter g[c, 0, t] = filt[c, t - T]; left pad is exactly T,
    # right pad only up to l_pad (total length l_pad + T, not l_pad + 2T).
    g = jnp.pad(filt, ((0, 0), (T, l_pad - L)))[:, None, :]     # (C, 1, l_pad+T)

    # Pack several channels per grid step when the per-channel slab is small
    # (amortizes the ~0.35us per-grid-step overhead, issues larger DMAs).
    per_chan_bytes = (nblk * B * T * (jnp.dtype(in_dtype).itemsize + 4)
                      + (l_pad + T) * 4)
    cblk = _largest_divisor_at_most(C, (512 * 1024) // max(per_chan_bytes, 1))
    grid = (C // cblk,)
    # TODO(synk): add a second "parallel" grid axis (e.g. over block-row groups)
    # so v7x's two TensorCores stay busy when C // cblk is 1 or odd.

    blk_bytes = cblk * per_chan_bytes
    vmem_limit = int(min(max(2 * blk_bytes + 8 * T * (2 * T) * 4 + (2 << 20),
                             32 << 20),
                         64 << 20))

    kernel = functools.partial(_fftconv_kernel, block_l=T, nblk=nblk, bsz=B,
                               cblk=cblk, use_bf16=use_bf16)

    flops = B * C * T * T * nblk * (nblk + 1) * (1 if use_bf16 else 3)
    bytes_accessed = (x_cbt.size * x_cbt.dtype.itemsize
                      + g.size * 4
                      + C * nblk * B * T * 4)

    y_cbt = pl.pallas_call(
        kernel,
        out_shape=jax.ShapeDtypeStruct((C, nblk * B, T), jnp.float32),
        grid_spec=pltpu.PrefetchScalarGridSpec(
            num_scalar_prefetch=0,
            grid=grid,
            in_specs=[
                pl.BlockSpec((cblk, nblk * B, T), lambda c: (c, 0, 0)),
                pl.BlockSpec((cblk, 1, l_pad + T), lambda c: (c, 0, 0)),
            ],
            out_specs=pl.BlockSpec((cblk, nblk * B, T), lambda c: (c, 0, 0)),
        ),
        compiler_params=pltpu.CompilerParams(
            dimension_semantics=("parallel",),
            vmem_limit_bytes=vmem_limit,
        ),
        cost_estimate=pl.CostEstimate(
            flops=int(flops), transcendentals=0,
            bytes_accessed=int(bytes_accessed)),
    )(x_cbt, g)

    y = (y_cbt.reshape(C, nblk, B, T).transpose(2, 0, 1, 3)
             .reshape(B, C, l_pad))[..., :L]
    return y


class FFTConvModule:
    """Mirror of the PyTorch module: forward(x, filter) -> fused_fftconv."""

    def __call__(self, x, filter):
        return fused_fftconv(x, filter)


def fused_fftconv_ref(x, filt):
    """Host-side (NumPy, float64) FFT reference: the literal fftconv semantics."""
    x = np.asarray(jax.device_get(x), dtype=np.float64)
    filt = np.asarray(jax.device_get(filt), dtype=np.float64)
    L = x.shape[-1]
    n = 2 * L
    xf = np.fft.rfft(x, n=n, axis=-1)
    kf = np.fft.rfft(filt, n=n, axis=-1)
    y = np.fft.irfft(xf * kf[None, :, :], n=n, axis=-1)
    return y[..., :L]


def _check(y, y_ref, rel):
    y = np.asarray(jax.device_get(y), dtype=np.float64)
    err = float(np.max(np.abs(y - y_ref)))
    scale = float(np.max(np.abs(y_ref)))
    assert err <= rel * (1.0 + scale), (err, scale, rel)


if __name__ == "__main__":
    key = jax.random.PRNGKey(0)
    k_x, k_f = jax.random.split(key)

    # Small shape consistent with the module: (batch, channels, seq).
    B, C, L = 2, 4, 16
    x = jax.random.normal(k_x, (B, C, L), dtype=jnp.float32)
    filt = jax.random.normal(k_f, (C, L), dtype=jnp.float32)
    y_ref = fused_fftconv_ref(x, filt)

    module = FFTConvModule()

    # Default fast path: bf16 MXU operands, f32 accumulation (bf16-level error).
    y = jax.block_until_ready(module(x, filt))
    assert y.shape == (B, C, L), y.shape
    _check(y, y_ref, rel=2e-2)

    # High-accuracy path: bf16x3 decomposition (~f32), tighter tolerance.
    y_hi = jax.block_until_ready(fused_fftconv(x, filt, compute_dtype=jnp.float32))
    _check(y_hi, y_ref, rel=1e-3)

    # A second shape exercising padding and the multi-diagonal causal path.
    B2, C2, L2 = 2, 3, 300                  # l_pad = 384 -> T = 128, nblk = 3
    x2 = jax.random.normal(k_x, (B2, C2, L2), dtype=jnp.float32)
    filt2 = jax.random.normal(k_f, (C2, L2), dtype=jnp.float32)
    y2 = jax.block_until_ready(fused_fftconv(x2, filt2))
    assert y2.shape == (B2, C2, L2), y2.shape
    _check(y2, fused_fftconv_ref(x2, filt2), rel=2e-2)

    print("KERNEL_OK")
</pallas_src>

<mosaic_0001>
module attributes {stable_mosaic.version = 11 : i64} {
  func.func @_fftconv_kernel(%arg0: i32, %arg1: memref<4x2x128xbf16, #tpu.memory_space<vmem>>, %arg2: memref<4x1x256xf32, #tpu.memory_space<vmem>>, %arg3: memref<4x2x128xf32, #tpu.memory_space<vmem>>) attributes {dimension_semantics = [#tpu.dimension_semantics<parallel>], iteration_bounds = array<i64: 1>, scalar_prefetch = 0 : i64, scratch_operands = 0 : i64, tpu.core_type = #tpu.core_type<tc>, window_params = [{transform_indices = @transform_0, window_bounds = array<i64: 4, 2, 128>}, {transform_indices = @transform_1, window_bounds = array<i64: 4, 1, 256>}, {transform_indices = @transform_2, window_bounds = array<i64: 4, 2, 128>}]} {
    %0 = tpu.iota {dimensions = array<i32: 0>} : vector<128x1xi32>
    %c1_i32 = arith.constant 1 : i32
    %1 = vector.broadcast %c1_i32 : i32 to vector<128x1xi32>
    %2 = arith.andi %0, %1 : vector<128x1xi32>
    %c0_i32 = arith.constant 0 : i32
    %3 = vector.broadcast %c0_i32 : i32 to vector<128x1xi32>
    %4 = arith.cmpi ne, %2, %3 : vector<128x1xi32>
    %c2_i32 = arith.constant 2 : i32
    %5 = vector.broadcast %c2_i32 : i32 to vector<128x1xi32>
    %6 = arith.andi %0, %5 : vector<128x1xi32>
    %c0_i32_0 = arith.constant 0 : i32
    %7 = vector.broadcast %c0_i32_0 : i32 to vector<128x1xi32>
    %8 = arith.cmpi ne, %6, %7 : vector<128x1xi32>
    %c4_i32 = arith.constant 4 : i32
    %9 = vector.broadcast %c4_i32 : i32 to vector<128x1xi32>
    %10 = arith.andi %0, %9 : vector<128x1xi32>
    %c0_i32_1 = arith.constant 0 : i32
    %11 = vector.broadcast %c0_i32_1 : i32 to vector<128x1xi32>
    %12 = arith.cmpi ne, %10, %11 : vector<128x1xi32>
    %c8_i32 = arith.constant 8 : i32
    %13 = vector.broadcast %c8_i32 : i32 to vector<128x1xi32>
    %14 = arith.andi %0, %13 : vector<128x1xi32>
    %c0_i32_2 = arith.constant 0 : i32
    %15 = vector.broadcast %c0_i32_2 : i32 to vector<128x1xi32>
    %16 = arith.cmpi ne, %14, %15 : vector<128x1xi32>
    %c16_i32 = arith.constant 16 : i32
    %17 = vector.broadcast %c16_i32 : i32 to vector<128x1xi32>
    %18 = arith.andi %0, %17 : vector<128x1xi32>
    %c0_i32_3 = arith.constant 0 : i32
    %19 = vector.broadcast %c0_i32_3 : i32 to vector<128x1xi32>
    %20 = arith.cmpi ne, %18, %19 : vector<128x1xi32>
    %c32_i32 = arith.constant 32 : i32
    %21 = vector.broadcast %c32_i32 : i32 to vector<128x1xi32>
    %22 = arith.andi %0, %21 : vector<128x1xi32>
    %c0_i32_4 = arith.constant 0 : i32
    %23 = vector.broadcast %c0_i32_4 : i32 to vector<128x1xi32>
    %24 = arith.cmpi ne, %22, %23 : vector<128x1xi32>
    %c64_i32 = arith.constant 64 : i32
    %25 = vector.broadcast %c64_i32 : i32 to vector<128x1xi32>
    %26 = arith.andi %0, %25 : vector<128x1xi32>
    %c0_i32_5 = arith.constant 0 : i32
    %27 = vector.broadcast %c0_i32_5 : i32 to vector<128x1xi32>
    %28 = arith.cmpi ne, %26, %27 : vector<128x1xi32>
    %c0 = arith.constant 0 : index
    %c0_6 = arith.constant 0 : index
    %c0_7 = arith.constant 0 : index
    %29 = vector.load %arg2[%c0, %c0_6, %c0_7] : memref<4x1x256xf32, #tpu.memory_space<vmem>>, vector<1x1x256xf32>
    %30 = vector.shape_cast %29 : vector<1x1x256xf32> to vector<1x256xf32>
    %31 = vector.shape_cast %30 : vector<1x256xf32> to vector<1x256xf32>
    %32 = vector.broadcast %31 : vector<1x256xf32> to vector<128x256xf32>
    %c1_i32_8 = arith.constant 1 : i32
    %33 = tpu.dynamic_rotate %32 by %c1_i32_8 dim 1 : vector<128x256xf32>, i32 -> vector<128x256xf32>
    %34 = vector.shape_cast %4 : vector<128x1xi1> to vector<128x1xi1>
    %35 = vector.broadcast %34 : vector<128x1xi1> to vector<128x256xi1>
    %36 = arith.select %35, %33, %32 : vector<128x256xi1>, vector<128x256xf32>
    %c2_i32_9 = arith.constant 2 : i32
    %37 = tpu.dynamic_rotate %36 by %c2_i32_9 dim 1 : vector<128x256xf32>, i32 -> vector<128x256xf32>
    %38 = vector.shape_cast %8 : vector<128x1xi1> to vector<128x1xi1>
    %39 = vector.broadcast %38 : vector<128x1xi1> to vector<128x256xi1>
    %40 = arith.select %39, %37, %36 : vector<128x256xi1>, vector<128x256xf32>
    %c4_i32_10 = arith.constant 4 : i32
    %41 = tpu.dynamic_rotate %40 by %c4_i32_10 dim 1 : vector<128x256xf32>, i32 -> vector<128x256xf32>
    %42 = vector.shape_cast %12 : vector<128x1xi1> to vector<128x1xi1>
    %43 = vector.broadcast %42 : vector<128x1xi1> to vector<128x256xi1>
    %44 = arith.select %43, %41, %40 : vector<128x256xi1>, vector<128x256xf32>
    %c8_i32_11 = arith.constant 8 : i32
    %45 = tpu.dynamic_rotate %44 by %c8_i32_11 dim 1 : vector<128x256xf32>, i32 -> vector<128x256xf32>
    %46 = vector.shape_cast %16 : vector<128x1xi1> to vector<128x1xi1>
    %47 = vector.broadcast %46 : vector<128x1xi1> to vector<128x256xi1>
    %48 = arith.select %47, %45, %44 : vector<128x256xi1>, vector<128x256xf32>
    %c16_i32_12 = arith.constant 16 : i32
    %49 = tpu.dynamic_rotate %48 by %c16_i32_12 dim 1 : vector<128x256xf32>, i32 -> vector<128x256xf32>
    %50 = vector.shape_cast %20 : vector<128x1xi1> to vector<128x1xi1>
    %51 = vector.broadcast %50 : vector<128x1xi1> to vector<128x256xi1>
    %52 = arith.select %51, %49, %48 : vector<128x256xi1>, vector<128x256xf32>
    %c32_i32_13 = arith.constant 32 : i32
    %53 = tpu.dynamic_rotate %52 by %c32_i32_13 dim 1 : vector<128x256xf32>, i32 -> vector<128x256xf32>
    %54 = vector.shape_cast %24 : vector<128x1xi1> to vector<128x1xi1>
    %55 = vector.broadcast %54 : vector<128x1xi1> to vector<128x256xi1>
    %56 = arith.select %55, %53, %52 : vector<128x256xi1>, vector<128x256xf32>
    %c64_i32_14 = arith.constant 64 : i32
    %57 = tpu.dynamic_rotate %56 by %c64_i32_14 dim 1 : vector<128x256xf32>, i32 -> vector<128x256xf32>
    %58 = vector.shape_cast %28 : vector<128x1xi1> to vector<128x1xi1>
    %59 = vector.broadcast %58 : vector<128x1xi1> to vector<128x256xi1>
    %60 = arith.select %59, %57, %56 : vector<128x256xi1>, vector<128x256xf32>
    %61 = vector.extract_strided_slice %60 {offsets = [0, 128], sizes = [128, 128], strides = [1, 1]} : vector<128x256xf32> to vector<128x128xf32>
    %c0_15 = arith.constant 0 : index
    %c0_16 = arith.constant 0 : index
    %c0_17 = arith.constant 0 : index
    %62 = vector.load %arg1[%c0_15, %c0_16, %c0_17] : memref<4x2x128xbf16, #tpu.memory_space<vmem>>, vector<1x2x128xbf16>
    %63 = vector.shape_cast %62 : vector<1x2x128xbf16> to vector<2x128xbf16>
    %64 = arith.truncf %61 : vector<128x128xf32> to vector<128x128xbf16>
    %cst = arith.constant dense<0.000000e+00> : vector<2x128xf32>
    %65 = tpu.matmul %63, %64, %cst {dimension_numbers = #tpu.dot_dimension_numbers<[1], [0], [0], [1], [0, 0, 1, 1], [], []>} : vector<2x128xbf16>, vector<128x128xbf16>, vector<2x128xf32> -> vector<2x128xf32>
    %c0_18 = arith.constant 0 : index
    %c0_19 = arith.constant 0 : index
    %c0_20 = arith.constant 0 : index
    %66 = vector.load %arg3[%c0_18, %c0_19, %c0_20] : memref<4x2x128xf32, #tpu.memory_space<vmem>>, vector<1x2x128xf32>
    %67 = vector.shape_cast %66 : vector<1x2x128xf32> to vector<2x128xf32>
    %68 = vector.shape_cast %65 : vector<2x128xf32> to vector<1x2x128xf32>
    tpu.vector_store %arg3[%c0_18, %c0_19, %c0_20], %68 {strides = array<i32>} : memref<4x2x128xf32, #tpu.memory_space<vmem>>, vector<1x2x128xf32>,
    %c1 = arith.constant 1 : index
    %c0_21 = arith.constant 0 : index
    %c0_22 = arith.constant 0 : index
    %69 = vector.load %arg2[%c1, %c0_21, %c0_22] : memref<4x1x256xf32, #tpu.memory_space<vmem>>, vector<1x1x256xf32>
    %70 = vector.shape_cast %69 : vector<1x1x256xf32> to vector<1x256xf32>
    %71 = vector.shape_cast %70 : vector<1x256xf32> to vector<1x256xf32>
    %72 = vector.broadcast %71 : vector<1x256xf32> to vector<128x256xf32>
    %c1_i32_23 = arith.constant 1 : i32
    %73 = tpu.dynamic_rotate %72 by %c1_i32_23 dim 1 : vector<128x256xf32>, i32 -> vector<128x256xf32>
    %74 = vector.shape_cast %4 : vector<128x1xi1> to vector<128x1xi1>
    %75 = vector.broadcast %74 : vector<128x1xi1> to vector<128x256xi1>
    %76 = arith.select %75, %73, %72 : vector<128x256xi1>, vector<128x256xf32>
    %c2_i32_24 = arith.constant 2 : i32
    %77 = tpu.dynamic_rotate %76 by %c2_i32_24 dim 1 : vector<128x256xf32>, i32 -> vector<128x256xf32>
    %78 = vector.shape_cast %8 : vector<128x1xi1> to vector<128x1xi1>
    %79 = vector.broadcast %78 : vector<128x1xi1> to vector<128x256xi1>
    %80 = arith.select %79, %77, %76 : vector<128x256xi1>, vector<128x256xf32>
    %c4_i32_25 = arith.constant 4 : i32
    %81 = tpu.dynamic_rotate %80 by %c4_i32_25 dim 1 : vector<128x256xf32>, i32 -> vector<128x256xf32>
    %82 = vector.shape_cast %12 : vector<128x1xi1> to vector<128x1xi1>
    %83 = vector.broadcast %82 : vector<128x1xi1> to vector<128x256xi1>
    %84 = arith.select %83, %81, %80 : vector<128x256xi1>, vector<128x256xf32>
    %c8_i32_26 = arith.constant 8 : i32
    %85 = tpu.dynamic_rotate %84 by %c8_i32_26 dim 1 : vector<128x256xf32>, i32 -> vector<128x256xf32>
    %86 = vector.shape_cast %16 : vector<128x1xi1> to vector<128x1xi1>
    %87 = vector.broadcast %86 : vector<128x1xi1> to vector<128x256xi1>
    %88 = arith.select %87, %85, %84 : vector<128x256xi1>, vector<128x256xf32>
    %c16_i32_27 = arith.constant 16 : i32
    %89 = tpu.dynamic_rotate %88 by %c16_i32_27 dim 1 : vector<128x256xf32>, i32 -> vector<128x256xf32>
    %90 = vector.shape_cast %20 : vector<128x1xi1> to vector<128x1xi1>
    %91 = vector.broadcast %90 : vector<128x1xi1> to vector<128x256xi1>
    %92 = arith.select %91, %89, %88 : vector<128x256xi1>, vector<128x256xf32>
    %c32_i32_28 = arith.constant 32 : i32
    %93 = tpu.dynamic_rotate %92 by %c32_i32_28 dim 1 : vector<128x256xf32>, i32 -> vector<128x256xf32>
    %94 = vector.shape_cast %24 : vector<128x1xi1> to vector<128x1xi1>
    %95 = vector.broadcast %94 : vector<128x1xi1> to vector<128x256xi1>
    %96 = arith.select %95, %93, %92 : vector<128x256xi1>, vector<128x256xf32>
    %c64_i32_29 = arith.constant 64 : i32
    %97 = tpu.dynamic_rotate %96 by %c64_i32_29 dim 1 : vector<128x256xf32>, i32 -> vector<128x256xf32>
    %98 = vector.shape_cast %28 : vector<128x1xi1> to vector<128x1xi1>
    %99 = vector.broadcast %98 : vector<128x1xi1> to vector<128x256xi1>
    %100 = arith.select %99, %97, %96 : vector<128x256xi1>, vector<128x256xf32>
    %101 = vector.extract_strided_slice %100 {offsets = [0, 128], sizes = [128, 128], strides = [1, 1]} : vector<128x256xf32> to vector<128x128xf32>
    %c1_30 = arith.constant 1 : index
    %c0_31 = arith.constant 0 : index
    %c0_32 = arith.constant 0 : index
    %102 = vector.load %arg1[%c1_30, %c0_31, %c0_32] : memref<4x2x128xbf16, #tpu.memory_space<vmem>>, vector<1x2x128xbf16>
    %103 = vector.shape_cast %102 : vector<1x2x128xbf16> to vector<2x128xbf16>
    %104 = arith.truncf %101 : vector<128x128xf32> to vector<128x128xbf16>
    %cst_33 = arith.constant dense<0.000000e+00> : vector<2x128xf32>
    %105 = tpu.matmul %103, %104, %cst_33 {dimension_numbers = #tpu.dot_dimension_numbers<[1], [0], [0], [1], [0, 0, 1, 1], [], []>} : vector<2x128xbf16>, vector<128x128xbf16>, vector<2x128xf32> -> vector<2x128xf32>
    %c1_34 = arith.constant 1 : index
    %c0_35 = arith.constant 0 : index
    %c0_36 = arith.constant 0 : index
    %106 = vector.load %arg3[%c1_34, %c0_35, %c0_36] : memref<4x2x128xf32, #tpu.memory_space<vmem>>, vector<1x2x128xf32>
    %107 = vector.shape_cast %106 : vector<1x2x128xf32> to vector<2x128xf32>
    %108 = vector.shape_cast %105 : vector<2x128xf32> to vector<1x2x128xf32>
    tpu.vector_store %arg3[%c1_34, %c0_35, %c0_36], %108 {strides = array<i32>} : memref<4x2x128xf32, #tpu.memory_space<vmem>>, vector<1x2x128xf32>,
    %c2 = arith.constant 2 : index
    %c0_37 = arith.constant 0 : index
    %c0_38 = arith.constant 0 : index
    %109 = vector.load %arg2[%c2, %c0_37, %c0_38] : memref<4x1x256xf32, #tpu.memory_space<vmem>>, vector<1x1x256xf32>
    %110 = vector.shape_cast %109 : vector<1x1x256xf32> to vector<1x256xf32>
    %111 = vector.shape_cast %110 : vector<1x256xf32> to vector<1x256xf32>
    %112 = vector.broadcast %111 : vector<1x256xf32> to vector<128x256xf32>
    %c1_i32_39 = arith.constant 1 : i32
    %113 = tpu.dynamic_rotate %112 by %c1_i32_39 dim 1 : vector<128x256xf32>, i32 -> vector<128x256xf32>
    %114 = vector.shape_cast %4 : vector<128x1xi1> to vector<128x1xi1>
    %115 = vector.broadcast %114 : vector<128x1xi1> to vector<128x256xi1>
    %116 = arith.select %115, %113, %112 : vector<128x256xi1>, vector<128x256xf32>
    %c2_i32_40 = arith.constant 2 : i32
    %117 = tpu.dynamic_rotate %116 by %c2_i32_40 dim 1 : vector<128x256xf32>, i32 -> vector<128x256xf32>
    %118 = vector.shape_cast %8 : vector<128x1xi1> to vector<128x1xi1>
    %119 = vector.broadcast %118 : vector<128x1xi1> to vector<128x256xi1>
    %120 = arith.select %119, %117, %116 : vector<128x256xi1>, vector<128x256xf32>
    %c4_i32_41 = arith.constant 4 : i32
    %121 = tpu.dynamic_rotate %120 by %c4_i32_41 dim 1 : vector<128x256xf32>, i32 -> vector<128x256xf32>
    %122 = vector.shape_cast %12 : vector<128x1xi1> to vector<128x1xi1>
    %123 = vector.broadcast %122 : vector<128x1xi1> to vector<128x256xi1>
    %124 = arith.select %123, %121, %120 : vector<128x256xi1>, vector<128x256xf32>
    %c8_i32_42 = arith.constant 8 : i32
    %125 = tpu.dynamic_rotate %124 by %c8_i32_42 dim 1 : vector<128x256xf32>, i32 -> vector<128x256xf32>
    %126 = vector.shape_cast %16 : vector<128x1xi1> to vector<128x1xi1>
    %127 = vector.broadcast %126 : vector<128x1xi1> to vector<128x256xi1>
    %128 = arith.select %127, %125, %124 : vector<128x256xi1>, vector<128x256xf32>
    %c16_i32_43 = arith.constant 16 : i32
    %129 = tpu.dynamic_rotate %128 by %c16_i32_43 dim 1 : vector<128x256xf32>, i32 -> vector<128x256xf32>
    %130 = vector.shape_cast %20 : vector<128x1xi1> to vector<128x1xi1>
    %131 = vector.broadcast %130 : vector<128x1xi1> to vector<128x256xi1>
    %132 = arith.select %131, %129, %128 : vector<128x256xi1>, vector<128x256xf32>
    %c32_i32_44 = arith.constant 32 : i32
    %133 = tpu.dynamic_rotate %132 by %c32_i32_44 dim 1 : vector<128x256xf32>, i32 -> vector<128x256xf32>
    %134 = vector.shape_cast %24 : vector<128x1xi1> to vector<128x1xi1>
    %135 = vector.broadcast %134 : vector<128x1xi1> to vector<128x256xi1>
    %136 = arith.select %135, %133, %132 : vector<128x256xi1>, vector<128x256xf32>
    %c64_i32_45 = arith.constant 64 : i32
    %137 = tpu.dynamic_rotate %136 by %c64_i32_45 dim 1 : vector<128x256xf32>, i32 -> vector<128x256xf32>
    %138 = vector.shape_cast %28 : vector<128x1xi1> to vector<128x1xi1>
    %139 = vector.broadcast %138 : vector<128x1xi1> to vector<128x256xi1>
    %140 = arith.select %139, %137, %136 : vector<128x256xi1>, vector<128x256xf32>
    %141 = vector.extract_strided_slice %140 {offsets = [0, 128], sizes = [128, 128], strides = [1, 1]} : vector<128x256xf32> to vector<128x128xf32>
    %c2_46 = arith.constant 2 : index
    %c0_47 = arith.constant 0 : index
    %c0_48 = arith.constant 0 : index
    %142 = vector.load %arg1[%c2_46, %c0_47, %c0_48] : memref<4x2x128xbf16, #tpu.memory_space<vmem>>, vector<1x2x128xbf16>
    %143 = vector.shape_cast %142 : vector<1x2x128xbf16> to vector<2x128xbf16>
    %144 = arith.truncf %141 : vector<128x128xf32> to vector<128x128xbf16>
    %cst_49 = arith.constant dense<0.000000e+00> : vector<2x128xf32>
    %145 = tpu.matmul %143, %144, %cst_49 {dimension_numbers = #tpu.dot_dimension_numbers<[1], [0], [0], [1], [0, 0, 1, 1], [], []>} : vector<2x128xbf16>, vector<128x128xbf16>, vector<2x128xf32> -> vector<2x128xf32>
    %c2_50 = arith.constant 2 : index
    %c0_51 = arith.constant 0 : index
    %c0_52 = arith.constant 0 : index
    %146 = vector.load %arg3[%c2_50, %c0_51, %c0_52] : memref<4x2x128xf32, #tpu.memory_space<vmem>>, vector<1x2x128xf32>
    %147 = vector.shape_cast %146 : vector<1x2x128xf32> to vector<2x128xf32>
    %148 = vector.shape_cast %145 : vector<2x128xf32> to vector<1x2x128xf32>
    tpu.vector_store %arg3[%c2_50, %c0_51, %c0_52], %148 {strides = array<i32>} : memref<4x2x128xf32, #tpu.memory_space<vmem>>, vector<1x2x128xf32>,
    %c3 = arith.constant 3 : index
    %c0_53 = arith.constant 0 : index
    %c0_54 = arith.constant 0 : index
    %149 = vector.load %arg2[%c3, %c0_53, %c0_54] : memref<4x1x256xf32, #tpu.memory_space<vmem>>, vector<1x1x256xf32>
    %150 = vector.shape_cast %149 : vector<1x1x256xf32> to vector<1x256xf32>
    %151 = vector.shape_cast %150 : vector<1x256xf32> to vector<1x256xf32>
    %152 = vector.broadcast %151 : vector<1x256xf32> to vector<128x256xf32>
    %c1_i32_55 = arith.constant 1 : i32
    %153 = tpu.dynamic_rotate %152 by %c1_i32_55 dim 1 : vector<128x256xf32>, i32 -> vector<128x256xf32>
    %154 = vector.shape_cast %4 : vector<128x1xi1> to vector<128x1xi1>
    %155 = vector.broadcast %154 : vector<128x1xi1> to vector<128x256xi1>
    %156 = arith.select %155, %153, %152 : vector<128x256xi1>, vector<128x256xf32>
    %c2_i32_56 = arith.constant 2 : i32
    %157 = tpu.dynamic_rotate %156 by %c2_i32_56 dim 1 : vector<128x256xf32>, i32 -> vector<128x256xf32>
    %158 = vector.shape_cast %8 : vector<128x1xi1> to vector<128x1xi1>
    %159 = vector.broadcast %158 : vector<128x1xi1> to vector<128x256xi1>
    %160 = arith.select %159, %157, %156 : vector<128x256xi1>, vector<128x256xf32>
    %c4_i32_57 = arith.constant 4 : i32
    %161 = tpu.dynamic_rotate %160 by %c4_i32_57 dim 1 : vector<128x256xf32>, i32 -> vector<128x256xf32>
    %162 = vector.shape_cast %12 : vector<128x1xi1> to vector<128x1xi1>
    %163 = vector.broadcast %162 : vector<128x1xi1> to vector<128x256xi1>
    %164 = arith.select %163, %161, %160 : vector<128x256xi1>, vector<128x256xf32>
    %c8_i32_58 = arith.constant 8 : i32
    %165 = tpu.dynamic_rotate %164 by %c8_i32_58 dim 1 : vector<128x256xf32>, i32 -> vector<128x256xf32>
    %166 = vector.shape_cast %16 : vector<128x1xi1> to vector<128x1xi1>
    %167 = vector.broadcast %166 : vector<128x1xi1> to vector<128x256xi1>
    %168 = arith.select %167, %165, %164 : vector<128x256xi1>, vector<128x256xf32>
    %c16_i32_59 = arith.constant 16 : i32
    %169 = tpu.dynamic_rotate %168 by %c16_i32_59 dim 1 : vector<128x256xf32>, i32 -> vector<128x256xf32>
    %170 = vector.shape_cast %20 : vector<128x1xi1> to vector<128x1xi1>
    %171 = vector.broadcast %170 : vector<128x1xi1> to vector<128x256xi1>
    %172 = arith.select %171, %169, %168 : vector<128x256xi1>, vector<128x256xf32>
    %c32_i32_60 = arith.constant 32 : i32
    %173 = tpu.dynamic_rotate %172 by %c32_i32_60 dim 1 : vector<128x256xf32>, i32 -> vector<128x256xf32>
    %174 = vector.shape_cast %24 : vector<128x1xi1> to vector<128x1xi1>
    %175 = vector.broadcast %174 : vector<128x1xi1> to vector<128x256xi1>
    %176 = arith.select %175, %173, %172 : vector<128x256xi1>, vector<128x256xf32>
    %c64_i32_61 = arith.constant 64 : i32
    %177 = tpu.dynamic_rotate %176 by %c64_i32_61 dim 1 : vector<128x256xf32>, i32 -> vector<128x256xf32>
    %178 = vector.shape_cast %28 : vector<128x1xi1> to vector<128x1xi1>
    %179 = vector.broadcast %178 : vector<128x1xi1> to vector<128x256xi1>
    %180 = arith.select %179, %177, %176 : vector<128x256xi1>, vector<128x256xf32>
    %181 = vector.extract_strided_slice %180 {offsets = [0, 128], sizes = [128, 128], strides = [1, 1]} : vector<128x256xf32> to vector<128x128xf32>
    %c3_62 = arith.constant 3 : index
    %c0_63 = arith.constant 0 : index
    %c0_64 = arith.constant 0 : index
    %182 = vector.load %arg1[%c3_62, %c0_63, %c0_64] : memref<4x2x128xbf16, #tpu.memory_space<vmem>>, vector<1x2x128xbf16>
    %183 = vector.shape_cast %182 : vector<1x2x128xbf16> to vector<2x128xbf16>
    %184 = arith.truncf %181 : vector<128x128xf32> to vector<128x128xbf16>
    %cst_65 = arith.constant dense<0.000000e+00> : vector<2x128xf32>
    %185 = tpu.matmul %183, %184, %cst_65 {dimension_numbers = #tpu.dot_dimension_numbers<[1], [0], [0], [1], [0, 0, 1, 1], [], []>} : vector<2x128xbf16>, vector<128x128xbf16>, vector<2x128xf32> -> vector<2x128xf32>
    %c3_66 = arith.constant 3 : index
    %c0_67 = arith.constant 0 : index
    %c0_68 = arith.constant 0 : index
    %186 = vector.load %arg3[%c3_66, %c0_67, %c0_68] : memref<4x2x128xf32, #tpu.memory_space<vmem>>, vector<1x2x128xf32>
    %187 = vector.shape_cast %186 : vector<1x2x128xf32> to vector<2x128xf32>
    %188 = vector.shape_cast %185 : vector<2x128xf32> to vector<1x2x128xf32>
    tpu.vector_store %arg3[%c3_66, %c0_67, %c0_68], %188 {strides = array<i32>} : memref<4x2x128xf32, #tpu.memory_space<vmem>>, vector<1x2x128xf32>,
    return
  }
  func.func @transform_0(%arg0: i32) -> (i32, i32, i32) {
    %c0_i32 = arith.constant 0 : i32
    %c0_i32_0 = arith.constant 0 : i32
    %c0_i32_1 = arith.constant 0 : i32
    return %arg0, %c0_i32, %c0_i32_0 : i32, i32, i32
  }
  func.func @transform_1(%arg0: i32) -> (i32, i32, i32) {
    %c0_i32 = arith.constant 0 : i32
    %c0_i32_0 = arith.constant 0 : i32
    %c0_i32_1 = arith.constant 0 : i32
    return %arg0, %c0_i32, %c0_i32_0 : i32, i32, i32
  }
  func.func @transform_2(%arg0: i32) -> (i32, i32, i32) {
    %c0_i32 = arith.constant 0 : i32
    %c0_i32_0 = arith.constant 0 : i32
    %c0_i32_1 = arith.constant 0 : i32
    return %arg0, %c0_i32, %c0_i32_0 : i32, i32, i32
  }
}

</mosaic_0001>

<llo_original>
// kernel: tpu_custom_call.1
$region0: #{tpu_custom_call.1}
  #allocation0 [shape = 'u32[]', space=smem, size = 0x4, offset = 0x4, fixed_abs, tag = 'smem constant byte address 0x4 - core index']
  #allocation1 [shape = 'u32[144,128]{1,0:T(1,128)}', space=vmem, size = 0x12000, scoped, tag = 'internal scratch']
  %s0 = inlined_call_operand.hbm [shape: bf16[4,2,128], index: 0, kind: input, shape index: {}]
  %s1 = inlined_call_operand.hbm [shape: f32[4,1,256], index: 1, kind: input, shape index: {}]
  %s2 = inlined_call_operand.hbm [shape: f32[4,2,128], index: 2, kind: output, shape index: {}]
  %s3 = sld [smem:[#allocation0]]
  $region26: #{tpu_custom_call.1} parent=0
    _
  %s5 = ssub.s32 1, %s3
  %s6 = scalar_select 0, %s5, %s3
  $region1: #{tpu_custom_call.1} parent=0
    #allocation2 [shape = 'u8[2048]{0}', space=vmem, size = 0x800, scoped, tag = 'input window, operand 0, single buffered']
    #allocation3 [shape = 's32[1]{0}', space=sflag, size = 0x4, scoped, tag = 'scoped memory for tpu_custom_call.1']
    #allocation4 [shape = 's32[1]{0}', space=sflag, size = 0x4, scoped, tag = 'scoped memory for tpu_custom_call.1']
    #allocation5 [shape = 'u8[4096]{0}', space=vmem, size = 0x1000, scoped, tag = 'input window, operand 1, single buffered']
    #allocation6 [shape = 's32[1]{0}', space=sflag, size = 0x4, scoped, tag = 'scoped memory for tpu_custom_call.1']
    #allocation7 [shape = 'u8[4096]{0}', space=vmem, size = 0x1000, scoped, tag = 'output window, operand 0, single buffered']
    %7 = vsyncpa [#allocation3], 0
    %8 = vsyncpa [#allocation6], 0
    %9 = vsyncpa [#allocation4], 0
    // Predicated region
    $region2: #{tpu_custom_call.1} parent=1 // pred_check
      _
    $region3: #{tpu_custom_call.1} parent=1 // pred_check_branch
      %11 = sbr.rel (0) target = $region5
    $region4: #{tpu_custom_call.1} parent=1 // pred_region
      %s13 = ssub.s32 64, 64
      %14 = vsyncadd [#allocation3], %s13
      %s15 = sshll.u32 [#allocation2], 4
      %s16 = int_to_ptr.vmem [resolvable:$true] %s15
      %21 = dma.hbm_to_vmem [thread:$0]  %s0, 64, %s16, [#allocation3], 16, 16, 1
    $region5: #{tpu_custom_call.1} parent=1 // pred_fallthru
      _
    // Predicated region
    $region6: #{tpu_custom_call.1} parent=1 // pred_check
      _
    $region7: #{tpu_custom_call.1} parent=1 // pred_check_branch
      %23 = sbr.rel (0) target = $region9
    $region8: #{tpu_custom_call.1} parent=1 // pred_region
      %s25 = ssub.s32 128, 128
      %26 = vsyncadd [#allocation6], %s25
      %s27 = sshll.u32 [#allocation5], 4
      %s28 = int_to_ptr.vmem [resolvable:$true] %s27
      %33 = dma.hbm_to_vmem [thread:$0]  %s1, 128, %s28, [#allocation6], 32, 32, 2
    $region9: #{tpu_custom_call.1} parent=1 // pred_fallthru
      _
    // Predicated region
    $region10: #{tpu_custom_call.1} parent=1 // pred_check
      _
    $region11: #{tpu_custom_call.1} parent=1 // pred_check_branch
      %35 = sbr.rel (0) target = $region13
    $region12: #{tpu_custom_call.1} parent=1 // pred_region
      %36 = dma.done [#allocation3], 64
    $region13: #{tpu_custom_call.1} parent=1 // pred_fallthru
      _
    // Predicated region
    $region14: #{tpu_custom_call.1} parent=1 // pred_check
      _
    $region15: #{tpu_custom_call.1} parent=1 // pred_check_branch
      %38 = sbr.rel (0) target = $region17
    $region16: #{tpu_custom_call.1} parent=1 // pred_region
      %39 = dma.done [#allocation6], 128
    $region17: #{tpu_custom_call.1} parent=1 // pred_fallthru
      _
    %v41 = vlaneseq
    %v42 = vshrl.u32 %v41, 7
    %v43 = vadd.s32 %v42, 8
    %v44 = vadd.s32 %v42, 16
    %v45 = vadd.s32 %v42, 24
    %v46 = vadd.s32 %v42, 32
    %v47 = vadd.s32 %v42, 40
    %v48 = vadd.s32 %v42, 48
    %v49 = vadd.s32 %v42, 56
    %v50 = vadd.s32 %v42, 64
    %v51 = vadd.s32 %v42, 72
    %v52 = vadd.s32 %v42, 80
    %v53 = vadd.s32 %v42, 88
    %v54 = vadd.s32 %v42, 96
    %v55 = vadd.s32 %v42, 104
    %v56 = vadd.s32 %v42, 112
    %v57 = vadd.s32 %v42, 120
    %v58 = vand.u32 %v42, 1
    %v59 = vand.u32 %v43, 1
    %v60 = vand.u32 %v44, 1
    %v61 = vand.u32 %v45, 1
    %v62 = vand.u32 %v46, 1
    %v63 = vand.u32 %v47, 1
    %v64 = vand.u32 %v48, 1
    %v65 = vand.u32 %v49, 1
    %v66 = vand.u32 %v50, 1
    %v67 = vand.u32 %v51, 1
    %v68 = vand.u32 %v52, 1
    %v69 = vand.u32 %v53, 1
    %v70 = vand.u32 %v54, 1
    %v71 = vand.u32 %v55, 1
    %v72 = vand.u32 %v56, 1
    %v73 = vand.u32 %v57, 1
    %vm74 = vcmp.ne.s32.totalorder %v58, 0
    %vm75 = vcmp.ne.s32.totalorder %v59, 0
    %vm76 = vcmp.ne.s32.totalorder %v60, 0
    %vm77 = vcmp.ne.s32.totalorder %v61, 0
    %vm78 = vcmp.ne.s32.totalorder %v62, 0
    %vm79 = vcmp.ne.s32.totalorder %v63, 0
    %vm80 = vcmp.ne.s32.totalorder %v64, 0
    %vm81 = vcmp.ne.s32.totalorder %v65, 0
    %vm82 = vcmp.ne.s32.totalorder %v66, 0
    %vm83 = vcmp.ne.s32.totalorder %v67, 0
    %vm84 = vcmp.ne.s32.totalorder %v68, 0
    %vm85 = vcmp.ne.s32.totalorder %v69, 0
    %vm86 = vcmp.ne.s32.totalorder %v70, 0
    %vm87 = vcmp.ne.s32.totalorder %v71, 0
    %vm88 = vcmp.ne.s32.totalorder %v72, 0
    %vm89 = vcmp.ne.s32.totalorder %v73, 0
    %v90 = vand.u32 %v42, 2
    %v91 = vand.u32 %v43, 2
    %v92 = vand.u32 %v44, 2
    %v93 = vand.u32 %v45, 2
    %v94 = vand.u32 %v46, 2
    %v95 = vand.u32 %v47, 2
    %v96 = vand.u32 %v48, 2
    %v97 = vand.u32 %v49, 2
    %v98 = vand.u32 %v50, 2
    %v99 = vand.u32 %v51, 2
    %v100 = vand.u32 %v52, 2
    %v101 = vand.u32 %v53, 2
    %v102 = vand.u32 %v54, 2
    %v103 = vand.u32 %v55, 2
    %v104 = vand.u32 %v56, 2
    %v105 = vand.u32 %v57, 2
    %vm106 = vcmp.ne.s32.totalorder %v90, 0
    %vm107 = vcmp.ne.s32.totalorder %v91, 0
    %vm108 = vcmp.ne.s32.totalorder %v92, 0
    %vm109 = vcmp.ne.s32.totalorder %v93, 0
    %vm110 = vcmp.ne.s32.totalorder %v94, 0
    %vm111 = vcmp.ne.s32.totalorder %v95, 0
    %vm112 = vcmp.ne.s32.totalorder %v96, 0
    %vm113 = vcmp.ne.s32.totalorder %v97, 0
    %vm114 = vcmp.ne.s32.totalorder %v98, 0
    %vm115 = vcmp.ne.s32.totalorder %v99, 0
    %vm116 = vcmp.ne.s32.totalorder %v100, 0
    %vm117 = vcmp.ne.s32.totalorder %v101, 0
    %vm118 = vcmp.ne.s32.totalorder %v102, 0
    %vm119 = vcmp.ne.s32.totalorder %v103, 0
    %vm120 = vcmp.ne.s32.totalorder %v104, 0
    %vm121 = vcmp.ne.s32.totalorder %v105, 0
    %v122 = vand.u32 %v42, 4
    %v123 = vand.u32 %v43, 4
    %v124 = vand.u32 %v44, 4
    %v125 = vand.u32 %v45, 4
    %v126 = vand.u32 %v46, 4
    %v127 = vand.u32 %v47, 4
    %v128 = vand.u32 %v48, 4
    %v129 = vand.u32 %v49, 4
    %v130 = vand.u32 %v50, 4
    %v131 = vand.u32 %v51, 4
    %v132 = vand.u32 %v52, 4
    %v133 = vand.u32 %v53, 4
    %v134 = vand.u32 %v54, 4
    %v135 = vand.u32 %v55, 4
    %v136 = vand.u32 %v56, 4
    %v137 = vand.u32 %v57, 4
    %vm138 = vcmp.ne.s32.totalorder %v122, 0
    %vm139 = vcmp.ne.s32.totalorder %v123, 0
    %vm140 = vcmp.ne.s32.totalorder %v124, 0
    %vm141 = vcmp.ne.s32.totalorder %v125, 0
    %vm142 = vcmp.ne.s32.totalorder %v126, 0
    %vm143 = vcmp.ne.s32.totalorder %v127, 0
    %vm144 = vcmp.ne.s32.totalorder %v128, 0
    %vm145 = vcmp.ne.s32.totalorder %v129, 0
    %vm146 = vcmp.ne.s32.totalorder %v130, 0
    %vm147 = vcmp.ne.s32.totalorder %v131, 0
    %vm148 = vcmp.ne.s32.totalorder %v132, 0
    %vm149 = vcmp.ne.s32.totalorder %v133, 0
    %vm150 = vcmp.ne.s32.totalorder %v134, 0
    %vm151 = vcmp.ne.s32.totalorder %v135, 0
    %vm152 = vcmp.ne.s32.totalorder %v136, 0
    %vm153 = vcmp.ne.s32.totalorder %v137, 0
    %v154 = vand.u32 %v42, 8
    %v155 = vand.u32 %v43, 8
    %v156 = vand.u32 %v44, 8
    %v157 = vand.u32 %v45, 8
    %v158 = vand.u32 %v46, 8
    %v159 = vand.u32 %v47, 8
    %v160 = vand.u32 %v48, 8
    %v161 = vand.u32 %v49, 8
    %v162 = vand.u32 %v50, 8
    %v163 = vand.u32 %v51, 8
    %v164 = vand.u32 %v52, 8
    %v165 = vand.u32 %v53, 8
    %v166 = vand.u32 %v54, 8
    %v167 = vand.u32 %v55, 8
    %v168 = vand.u32 %v56, 8
    %v169 = vand.u32 %v57, 8
    %vm170 = vcmp.ne.s32.totalorder %v154, 0
    %vm171 = vcmp.ne.s32.totalorder %v155, 0
    %vm172 = vcmp.ne.s32.totalorder %v156, 0
    %vm173 = vcmp.ne.s32.totalorder %v157, 0
    %vm174 = vcmp.ne.s32.totalorder %v158, 0
    %vm175 = vcmp.ne.s32.totalorder %v159, 0
    %vm176 = vcmp.ne.s32.totalorder %v160, 0
    %vm177 = vcmp.ne.s32.totalorder %v161, 0
    %vm178 = vcmp.ne.s32.totalorder %v162, 0
    %vm179 = vcmp.ne.s32.totalorder %v163, 0
    %vm180 = vcmp.ne.s32.totalorder %v164, 0
    %vm181 = vcmp.ne.s32.totalorder %v165, 0
    %vm182 = vcmp.ne.s32.totalorder %v166, 0
    %vm183 = vcmp.ne.s32.totalorder %v167, 0
    %vm184 = vcmp.ne.s32.totalorder %v168, 0
    %vm185 = vcmp.ne.s32.totalorder %v169, 0
    %v186 = vand.u32 %v42, 16
    %v187 = vand.u32 %v43, 16
    %v188 = vand.u32 %v44, 16
    %v189 = vand.u32 %v45, 16
    %v190 = vand.u32 %v46, 16
    %v191 = vand.u32 %v47, 16
    %v192 = vand.u32 %v48, 16
    %v193 = vand.u32 %v49, 16
    %v194 = vand.u32 %v50, 16
    %v195 = vand.u32 %v51, 16
    %v196 = vand.u32 %v52, 16
    %v197 = vand.u32 %v53, 16
    %v198 = vand.u32 %v54, 16
    %v199 = vand.u32 %v55, 16
    %v200 = vand.u32 %v56, 16
    %v201 = vand.u32 %v57, 16
    %vm202 = vcmp.ne.s32.totalorder %v186, 0
    %vm203 = vcmp.ne.s32.totalorder %v187, 0
    %vm204 = vcmp.ne.s32.totalorder %v188, 0
    %vm205 = vcmp.ne.s32.totalorder %v189, 0
    %vm206 = vcmp.ne.s32.totalorder %v190, 0
    %vm207 = vcmp.ne.s32.totalorder %v191, 0
    %vm208 = vcmp.ne.s32.totalorder %v192, 0
    %vm209 = vcmp.ne.s32.totalorder %v193, 0
    %vm210 = vcmp.ne.s32.totalorder %v194, 0
    %vm211 = vcmp.ne.s32.totalorder %v195, 0
    %vm212 = vcmp.ne.s32.totalorder %v196, 0
    %vm213 = vcmp.ne.s32.totalorder %v197, 0
    %vm214 = vcmp.ne.s32.totalorder %v198, 0
    %vm215 = vcmp.ne.s32.totalorder %v199, 0
    %vm216 = vcmp.ne.s32.totalorder %v200, 0
    %vm217 = vcmp.ne.s32.totalorder %v201, 0
    %v218 = vand.u32 %v42, 32
    %v219 = vand.u32 %v43, 32
    %v220 = vand.u32 %v44, 32
    %v221 = vand.u32 %v45, 32
    %v222 = vand.u32 %v46, 32
    %v223 = vand.u32 %v47, 32
    %v224 = vand.u32 %v48, 32
    %v225 = vand.u32 %v49, 32
    %v226 = vand.u32 %v50, 32
    %v227 = vand.u32 %v51, 32
    %v228 = vand.u32 %v52, 32
    %v229 = vand.u32 %v53, 32
    %v230 = vand.u32 %v54, 32
    %v231 = vand.u32 %v55, 32
    %v232 = vand.u32 %v56, 32
    %v233 = vand.u32 %v57, 32
    %vm234 = vcmp.ne.s32.totalorder %v218, 0
    %vm235 = vcmp.ne.s32.totalorder %v219, 0
    %vm236 = vcmp.ne.s32.totalorder %v220, 0
    %vm237 = vcmp.ne.s32.totalorder %v221, 0
    %vm238 = vcmp.ne.s32.totalorder %v222, 0
    %vm239 = vcmp.ne.s32.totalorder %v223, 0
    %vm240 = vcmp.ne.s32.totalorder %v224, 0
    %vm241 = vcmp.ne.s32.totalorder %v225, 0
    %vm242 = vcmp.ne.s32.totalorder %v226, 0
    %vm243 = vcmp.ne.s32.totalorder %v227, 0
    %vm244 = vcmp.ne.s32.totalorder %v228, 0
    %vm245 = vcmp.ne.s32.totalorder %v229, 0
    %vm246 = vcmp.ne.s32.totalorder %v230, 0
    %vm247 = vcmp.ne.s32.totalorder %v231, 0
    %vm248 = vcmp.ne.s32.totalorder %v232, 0
    %vm249 = vcmp.ne.s32.totalorder %v233, 0
    %v250 = vand.u32 %v42, 64
    %v251 = vand.u32 %v43, 64
    %v252 = vand.u32 %v44, 64
    %v253 = vand.u32 %v45, 64
    %v254 = vand.u32 %v46, 64
    %v255 = vand.u32 %v47, 64
    %v256 = vand.u32 %v48, 64
    %v257 = vand.u32 %v49, 64
    %v258 = vand.u32 %v50, 64
    %v259 = vand.u32 %v51, 64
    %v260 = vand.u32 %v52, 64
    %v261 = vand.u32 %v53, 64
    %v262 = vand.u32 %v54, 64
    %v263 = vand.u32 %v55, 64
    %v264 = vand.u32 %v56, 64
    %v265 = vand.u32 %v57, 64
    %vm266 = vcmp.ne.s32.totalorder %v250, 0
    %vm267 = vcmp.ne.s32.totalorder %v251, 0
    %vm268 = vcmp.ne.s32.totalorder %v252, 0
    %vm269 = vcmp.ne.s32.totalorder %v253, 0
    %vm270 = vcmp.ne.s32.totalorder %v254, 0
    %vm271 = vcmp.ne.s32.totalorder %v255, 0
    %vm272 = vcmp.ne.s32.totalorder %v256, 0
    %vm273 = vcmp.ne.s32.totalorder %v257, 0
    %vm274 = vcmp.ne.s32.totalorder %v258, 0
    %vm275 = vcmp.ne.s32.totalorder %v259, 0
    %vm276 = vcmp.ne.s32.totalorder %v260, 0
    %vm277 = vcmp.ne.s32.totalorder %v261, 0
    %vm278 = vcmp.ne.s32.totalorder %v262, 0
    %vm279 = vcmp.ne.s32.totalorder %v263, 0
    %vm280 = vcmp.ne.s32.totalorder %v264, 0
    %vm281 = vcmp.ne.s32.totalorder %v265, 0
    %v282 = vld [vmem:[#allocation5] sm:$0x3]
    %v284 = vlaneseq
    %v285 = vshrl.u32 %v284, 7
    %v286 = vsub.s32 0, %v285
    %v287 = vrot.slane %v282, %v286
    %v288 = vlaneseq
    %v289 = vshrl.u32 %v288, 7
    %v290 = vsub.s32 1, %v289
    %v291 = vrot.slane %v282, %v290
    %294 = vrot.lane.b32.xlu0 %v287, 1
    %v295 = vpop.permute.xlu0 %294
    %296 = vrot.lane.b32.xlu0 %v291, 1
    %v297 = vpop.permute.xlu0 %296
    %v298 = vlaneseq
    %v299 = vand.u32 %v298, 127
    %vm300 = vcmp.lt.s32.totalorder %v299, 1
    %v301 = vsel %vm300, %v295, %v297
    %v302 = vsel %vm300, %v297, %v295
    %v303 = vsel %vm74, 1, 0
    %v304 = vsel %vm75, 1, 0
    %v305 = vsel %vm76, 1, 0
    %v306 = vsel %vm77, 1, 0
    %v307 = vsel %vm78, 1, 0
    %v308 = vsel %vm79, 1, 0
    %v309 = vsel %vm80, 1, 0
    %v310 = vsel %vm81, 1, 0
    %v311 = vsel %vm82, 1, 0
    %v312 = vsel %vm83, 1, 0
    %v313 = vsel %vm84, 1, 0
    %v314 = vsel %vm85, 1, 0
    %v315 = vsel %vm86, 1, 0
    %v316 = vsel %vm87, 1, 0
    %v317 = vsel %vm88, 1, 0
    %v318 = vsel %vm89, 1, 0
    %vm319 = vcmp.eq.s32.totalorder %v303, 1
    %vm320 = vcmp.eq.s32.totalorder %v304, 1
    %vm321 = vcmp.eq.s32.totalorder %v305, 1
    %vm322 = vcmp.eq.s32.totalorder %v306, 1
    %vm323 = vcmp.eq.s32.totalorder %v307, 1
    %vm324 = vcmp.eq.s32.totalorder %v308, 1
    %vm325 = vcmp.eq.s32.totalorder %v309, 1
    %vm326 = vcmp.eq.s32.totalorder %v310, 1
    %vm327 = vcmp.eq.s32.totalorder %v311, 1
    %vm328 = vcmp.eq.s32.totalorder %v312, 1
    %vm329 = vcmp.eq.s32.totalorder %v313, 1
    %vm330 = vcmp.eq.s32.totalorder %v314, 1
    %vm331 = vcmp.eq.s32.totalorder %v315, 1
    %vm332 = vcmp.eq.s32.totalorder %v316, 1
    %vm333 = vcmp.eq.s32.totalorder %v317, 1
    %vm334 = vcmp.eq.s32.totalorder %v318, 1
    %v335 = vsel %vm319, %v302, %v287
    %v336 = vsel %vm319, %v301, %v291
    %v337 = vsel %vm320, %v302, %v287
    %v338 = vsel %vm320, %v301, %v291
    %v339 = vsel %vm321, %v302, %v287
    %v340 = vsel %vm321, %v301, %v291
    %v341 = vsel %vm322, %v302, %v287
    %v342 = vsel %vm322, %v301, %v291
    %v343 = vsel %vm323, %v302, %v287
    %v344 = vsel %vm323, %v301, %v291
    %v345 = vsel %vm324, %v302, %v287
    %v346 = vsel %vm324, %v301, %v291
    %v347 = vsel %vm325, %v302, %v287
    %v348 = vsel %vm325, %v301, %v291
    %v349 = vsel %vm326, %v302, %v287
    %v350 = vsel %vm326, %v301, %v291
    %v351 = vsel %vm327, %v302, %v287
    %v352 = vsel %vm327, %v301, %v291
    %v353 = vsel %vm328, %v302, %v287
    %v354 = vsel %vm328, %v301, %v291
    %v355 = vsel %vm329, %v302, %v287
    %v356 = vsel %vm329, %v301, %v291
    %v357 = vsel %vm330, %v302, %v287
    %v358 = vsel %vm330, %v301, %v291
    %v359 = vsel %vm331, %v302, %v287
    %v360 = vsel %vm331, %v301, %v291
    %v361 = vsel %vm332, %v302, %v287
    %v362 = vsel %vm332, %v301, %v291
    %v363 = vsel %vm333, %v302, %v287
    %v364 = vsel %vm333, %v301, %v291
    %v365 = vsel %vm334, %v302, %v287
    %v366 = vsel %vm334, %v301, %v291
    %367 = vrot.lane.b32.xlu0 %v335, 2
    %v368 = vpop.permute.xlu0 %367
    %369 = vrot.lane.b32.xlu0 %v337, 2
    %v370 = vpop.permute.xlu0 %369
    %371 = vrot.lane.b32.xlu0 %v339, 2
    %v372 = vpop.permute.xlu0 %371
    %373 = vrot.lane.b32.xlu0 %v341, 2
    %v374 = vpop.permute.xlu0 %373
    %375 = vrot.lane.b32.xlu0 %v343, 2
    %v376 = vpop.permute.xlu0 %375
    %377 = vrot.lane.b32.xlu0 %v345, 2
    %v378 = vpop.permute.xlu0 %377
    %379 = vrot.lane.b32.xlu0 %v347, 2
    %v380 = vpop.permute.xlu0 %379
    %381 = vrot.lane.b32.xlu0 %v349, 2
    %v382 = vpop.permute.xlu0 %381
    %383 = vrot.lane.b32.xlu0 %v351, 2
    %v384 = vpop.permute.xlu0 %383
    %385 = vrot.lane.b32.xlu0 %v353, 2
    %v386 = vpop.permute.xlu0 %385
    %387 = vrot.lane.b32.xlu0 %v355, 2
    %v388 = vpop.permute.xlu0 %387
    %389 = vrot.lane.b32.xlu0 %v357, 2
    %v390 = vpop.permute.xlu0 %389
    %391 = vrot.lane.b32.xlu0 %v359, 2
    %v392 = vpop.permute.xlu0 %391
    %393 = vrot.lane.b32.xlu0 %v361, 2
    %v394 = vpop.permute.xlu0 %393
    %395 = vrot.lane.b32.xlu0 %v363, 2
    %v396 = vpop.permute.xlu0 %395
    %397 = vrot.lane.b32.xlu0 %v365, 2
    %v398 = vpop.permute.xlu0 %397
    %399 = vrot.lane.b32.xlu0 %v336, 2
    %v400 = vpop.permute.xlu0 %399
    %401 = vrot.lane.b32.xlu0 %v338, 2
    %v402 = vpop.permute.xlu0 %401
    %403 = vrot.lane.b32.xlu0 %v340, 2
    %v404 = vpop.permute.xlu0 %403
    %405 = vrot.lane.b32.xlu0 %v342, 2
    %v406 = vpop.permute.xlu0 %405
    %407 = vrot.lane.b32.xlu0 %v344, 2
    %v408 = vpop.permute.xlu0 %407
    %409 = vrot.lane.b32.xlu0 %v346, 2
    %v410 = vpop.permute.xlu0 %409
    %411 = vrot.lane.b32.xlu0 %v348, 2
    %v412 = vpop.permute.xlu0 %411
    %413 = vrot.lane.b32.xlu0 %v350, 2
    %v414 = vpop.permute.xlu0 %413
    %415 = vrot.lane.b32.xlu0 %v352, 2
    %v416 = vpop.permute.xlu0 %415
    %417 = vrot.lane.b32.xlu0 %v354, 2
    %v418 = vpop.permute.xlu0 %417
    %419 = vrot.lane.b32.xlu0 %v356, 2
    %v420 = vpop.permute.xlu0 %419
    %421 = vrot.lane.b32.xlu0 %v358, 2
    %v422 = vpop.permute.xlu0 %421
    %423 = vrot.lane.b32.xlu0 %v360, 2
    %v424 = vpop.permute.xlu0 %423
    %425 = vrot.lane.b32.xlu0 %v362, 2
    %v426 = vpop.permute.xlu0 %425
    %427 = vrot.lane.b32.xlu0 %v364, 2
    %v428 = vpop.permute.xlu0 %427
    %429 = vrot.lane.b32.xlu0 %v366, 2
    %v430 = vpop.permute.xlu0 %429
    %vm431 = vcmp.lt.s32.totalorder %v299, 2
    %v432 = vsel %vm431, %v368, %v400
    %v433 = vsel %vm431, %v370, %v402
    %v434 = vsel %vm431, %v372, %v404
    %v435 = vsel %vm431, %v374, %v406
    %v436 = vsel %vm431, %v376, %v408
    %v437 = vsel %vm431, %v378, %v410
    %v438 = vsel %vm431, %v380, %v412
    %v439 = vsel %vm431, %v382, %v414
    %v440 = vsel %vm431, %v384, %v416
    %v441 = vsel %vm431, %v386, %v418
    %v442 = vsel %vm431, %v388, %v420
    %v443 = vsel %vm431, %v390, %v422
    %v444 = vsel %vm431, %v392, %v424
    %v445 = vsel %vm431, %v394, %v426
    %v446 = vsel %vm431, %v396, %v428
    %v447 = vsel %vm431, %v398, %v430
    %v448 = vsel %vm431, %v400, %v368
    %v449 = vsel %vm431, %v402, %v370
    %v450 = vsel %vm431, %v404, %v372
    %v451 = vsel %vm431, %v406, %v374
    %v452 = vsel %vm431, %v408, %v376
    %v453 = vsel %vm431, %v410, %v378
    %v454 = vsel %vm431, %v412, %v380
    %v455 = vsel %vm431, %v414, %v382
    %v456 = vsel %vm431, %v416, %v384
    %v457 = vsel %vm431, %v418, %v386
    %v458 = vsel %vm431, %v420, %v388
    %v459 = vsel %vm431, %v422, %v390
    %v460 = vsel %vm431, %v424, %v392
    %v461 = vsel %vm431, %v426, %v394
    %v462 = vsel %vm431, %v428, %v396
    %v463 = vsel %vm431, %v430, %v398
    %v464 = vsel %vm106, 1, 0
    %v465 = vsel %vm107, 1, 0
    %v466 = vsel %vm108, 1, 0
    %v467 = vsel %vm109, 1, 0
    %v468 = vsel %vm110, 1, 0
    %v469 = vsel %vm111, 1, 0
    %v470 = vsel %vm112, 1, 0
    %v471 = vsel %vm113, 1, 0
    %v472 = vsel %vm114, 1, 0
    %v473 = vsel %vm115, 1, 0
    %v474 = vsel %vm116, 1, 0
    %v475 = vsel %vm117, 1, 0
    %v476 = vsel %vm118, 1, 0
    %v477 = vsel %vm119, 1, 0
    %v478 = vsel %vm120, 1, 0
    %v479 = vsel %vm121, 1, 0
    %vm480 = vcmp.eq.s32.totalorder %v464, 1
    %vm481 = vcmp.eq.s32.totalorder %v465, 1
    %vm482 = vcmp.eq.s32.totalorder %v466, 1
    %vm483 = vcmp.eq.s32.totalorder %v467, 1
    %vm484 = vcmp.eq.s32.totalorder %v468, 1
    %vm485 = vcmp.eq.s32.totalorder %v469, 1
    %vm486 = vcmp.eq.s32.totalorder %v470, 1
    %vm487 = vcmp.eq.s32.totalorder %v471, 1
    %vm488 = vcmp.eq.s32.totalorder %v472, 1
    %vm489 = vcmp.eq.s32.totalorder %v473, 1
    %vm490 = vcmp.eq.s32.totalorder %v474, 1
    %vm491 = vcmp.eq.s32.totalorder %v475, 1
    %vm492 = vcmp.eq.s32.totalorder %v476, 1
    %vm493 = vcmp.eq.s32.totalorder %v477, 1
    %vm494 = vcmp.eq.s32.totalorder %v478, 1
    %vm495 = vcmp.eq.s32.totalorder %v479, 1
    %v496 = vsel %vm480, %v448, %v335
    %v497 = vsel %vm480, %v432, %v336
    %v498 = vsel %vm481, %v449, %v337
    %v499 = vsel %vm481, %v433, %v338
    %v500 = vsel %vm482, %v450, %v339
    %v501 = vsel %vm482, %v434, %v340
    %v502 = vsel %vm483, %v451, %v341
    %v503 = vsel %vm483, %v435, %v342
    %v504 = vsel %vm484, %v452, %v343
    %v505 = vsel %vm484, %v436, %v344
    %v506 = vsel %vm485, %v453, %v345
    %v507 = vsel %vm485, %v437, %v346
    %v508 = vsel %vm486, %v454, %v347
    %v509 = vsel %vm486, %v438, %v348
    %v510 = vsel %vm487, %v455, %v349
    %v511 = vsel %vm487, %v439, %v350
    %v512 = vsel %vm488, %v456, %v351
    %v513 = vsel %vm488, %v440, %v352
    %v514 = vsel %vm489, %v457, %v353
    %v515 = vsel %vm489, %v441, %v354
    %v516 = vsel %vm490, %v458, %v355
    %v517 = vsel %vm490, %v442, %v356
    %v518 = vsel %vm491, %v459, %v357
    %v519 = vsel %vm491, %v443, %v358
    %v520 = vsel %vm492, %v460, %v359
    %v521 = vsel %vm492, %v444, %v360
    %v522 = vsel %vm493, %v461, %v361
    %v523 = vsel %vm493, %v445, %v362
    %v524 = vsel %vm494, %v462, %v363
    %v525 = vsel %vm494, %v446, %v364
    %v526 = vsel %vm495, %v463, %v365
    %v527 = vsel %vm495, %v447, %v366
    %528 = vrot.lane.b32.xlu0 %v496, 4
    %v529 = vpop.permute.xlu0 %528
    %530 = vrot.lane.b32.xlu0 %v498, 4
    %v531 = vpop.permute.xlu0 %530
    %532 = vrot.lane.b32.xlu0 %v500, 4
    %v533 = vpop.permute.xlu0 %532
    %534 = vrot.lane.b32.xlu0 %v502, 4
    %v535 = vpop.permute.xlu0 %534
    %536 = vrot.lane.b32.xlu0 %v504, 4
    %v537 = vpop.permute.xlu0 %536
    %538 = vrot.lane.b32.xlu0 %v506, 4
    %v539 = vpop.permute.xlu0 %538
    %540 = vrot.lane.b32.xlu0 %v508, 4
    %v541 = vpop.permute.xlu0 %540
    %542 = vrot.lane.b32.xlu0 %v510, 4
    %v543 = vpop.permute.xlu0 %542
    %544 = vrot.lane.b32.xlu0 %v512, 4
    %v545 = vpop.permute.xlu0 %544
    %546 = vrot.lane.b32.xlu0 %v514, 4
    %v547 = vpop.permute.xlu0 %546
    %548 = vrot.lane.b32.xlu0 %v516, 4
    %v549 = vpop.permute.xlu0 %548
    %550 = vrot.lane.b32.xlu0 %v518, 4
    %v551 = vpop.permute.xlu0 %550
    %552 = vrot.lane.b32.xlu0 %v520, 4
    %v553 = vpop.permute.xlu0 %552
    %554 = vrot.lane.b32.xlu0 %v522, 4
    %v555 = vpop.permute.xlu0 %554
    %556 = vrot.lane.b32.xlu0 %v524, 4
    %v557 = vpop.permute.xlu0 %556
    %558 = vrot.lane.b32.xlu0 %v526, 4
    %v559 = vpop.permute.xlu0 %558
    %560 = vrot.lane.b32.xlu0 %v497, 4
    %v561 = vpop.permute.xlu0 %560
    %562 = vrot.lane.b32.xlu0 %v499, 4
    %v563 = vpop.permute.xlu0 %562
    %564 = vrot.lane.b32.xlu0 %v501, 4
    %v565 = vpop.permute.xlu0 %564
    %566 = vrot.lane.b32.xlu0 %v503, 4
    %v567 = vpop.permute.xlu0 %566
    %568 = vrot.lane.b32.xlu0 %v505, 4
    %v569 = vpop.permute.xlu0 %568
    %570 = vrot.lane.b32.xlu0 %v507, 4
    %v571 = vpop.permute.xlu0 %570
    %572 = vrot.lane.b32.xlu0 %v509, 4
    %v573 = vpop.permute.xlu0 %572
    %574 = vrot.lane.b32.xlu0 %v511, 4
    %v575 = vpop.permute.xlu0 %574
    %576 = vrot.lane.b32.xlu0 %v513, 4
    %v577 = vpop.permute.xlu0 %576
    %578 = vrot.lane.b32.xlu0 %v515, 4
    %v579 = vpop.permute.xlu0 %578
    %580 = vrot.lane.b32.xlu0 %v517, 4
    %v581 = vpop.permute.xlu0 %580
    %582 = vrot.lane.b32.xlu0 %v519, 4
    %v583 = vpop.permute.xlu0 %582
    %584 = vrot.lane.b32.xlu0 %v521, 4
    %v585 = vpop.permute.xlu0 %584
    %586 = vrot.lane.b32.xlu0 %v523, 4
    %v587 = vpop.permute.xlu0 %586
    %588 = vrot.lane.b32.xlu0 %v525, 4
    %v589 = vpop.permute.xlu0 %588
    %590 = vrot.lane.b32.xlu0 %v527, 4
    %v591 = vpop.permute.xlu0 %590
    %vm592 = vcmp.lt.s32.totalorder %v299, 4
    %v593 = vsel %vm592, %v529, %v561
    %v594 = vsel %vm592, %v531, %v563
    %v595 = vsel %vm592, %v533, %v565
    %v596 = vsel %vm592, %v535, %v567
    %v597 = vsel %vm592, %v537, %v569
    %v598 = vsel %vm592, %v539, %v571
    %v599 = vsel %vm592, %v541, %v573
    %v600 = vsel %vm592, %v543, %v575
    %v601 = vsel %vm592, %v545, %v577
    %v602 = vsel %vm592, %v547, %v579
    %v603 = vsel %vm592, %v549, %v581
    %v604 = vsel %vm592, %v551, %v583
    %v605 = vsel %vm592, %v553, %v585
    %v606 = vsel %vm592, %v555, %v587
    %v607 = vsel %vm592, %v557, %v589
    %v608 = vsel %vm592, %v559, %v591
    %v609 = vsel %vm592, %v561, %v529
    %v610 = vsel %vm592, %v563, %v531
    %v611 = vsel %vm592, %v565, %v533
    %v612 = vsel %vm592, %v567, %v535
    %v613 = vsel %vm592, %v569, %v537
    %v614 = vsel %vm592, %v571, %v539
    %v615 = vsel %vm592, %v573, %v541
    %v616 = vsel %vm592, %v575, %v543
    %v617 = vsel %vm592, %v577, %v545
    %v618 = vsel %vm592, %v579, %v547
    %v619 = vsel %vm592, %v581, %v549
    %v620 = vsel %vm592, %v583, %v551
    %v621 = vsel %vm592, %v585, %v553
    %v622 = vsel %vm592, %v587, %v555
    %v623 = vsel %vm592, %v589, %v557
    %v624 = vsel %vm592, %v591, %v559
    %v625 = vsel %vm138, 1, 0
    %v626 = vsel %vm139, 1, 0
    %v627 = vsel %vm140, 1, 0
    %v628 = vsel %vm141, 1, 0
    %v629 = vsel %vm142, 1, 0
    %v630 = vsel %vm143, 1, 0
    %v631 = vsel %vm144, 1, 0
    %v632 = vsel %vm145, 1, 0
    %v633 = vsel %vm146, 1, 0
    %v634 = vsel %vm147, 1, 0
    %v635 = vsel %vm148, 1, 0
    %v636 = vsel %vm149, 1, 0
    %v637 = vsel %vm150, 1, 0
    %v638 = vsel %vm151, 1, 0
    %v639 = vsel %vm152, 1, 0
    %v640 = vsel %vm153, 1, 0
    %vm641 = vcmp.eq.s32.totalorder %v625, 1
    %vm642 = vcmp.eq.s32.totalorder %v626, 1
    %vm643 = vcmp.eq.s32.totalorder %v627, 1
    %vm644 = vcmp.eq.s32.totalorder %v628, 1
    %vm645 = vcmp.eq.s32.totalorder %v629, 1
    %vm646 = vcmp.eq.s32.totalorder %v630, 1
    %vm647 = vcmp.eq.s32.totalorder %v631, 1
    %vm648 = vcmp.eq.s32.totalorder %v632, 1
    %vm649 = vcmp.eq.s32.totalorder %v633, 1
    %vm650 = vcmp.eq.s32.totalorder %v634, 1
    %vm651 = vcmp.eq.s32.totalorder %v635, 1
    %vm652 = vcmp.eq.s32.totalorder %v636, 1
    %vm653 = vcmp.eq.s32.totalorder %v637, 1
    %vm654 = vcmp.eq.s32.totalorder %v638, 1
    %vm655 = vcmp.eq.s32.totalorder %v639, 1
    %vm656 = vcmp.eq.s32.totalorder %v640, 1
    %v657 = vsel %vm641, %v609, %v496
    %v658 = vsel %vm641, %v593, %v497
    %v659 = vsel %vm642, %v610, %v498
    %v660 = vsel %vm642, %v594, %v499
    %v661 = vsel %vm643, %v611, %v500
    %v662 = vsel %vm643, %v595, %v501
    %v663 = vsel %vm644, %v612, %v502
    %v664 = vsel %vm644, %v596, %v503
    %v665 = vsel %vm645, %v613, %v504
    %v666 = vsel %vm645, %v597, %v505
    %v667 = vsel %vm646, %v614, %v506
    %v668 = vsel %vm646, %v598, %v507
    %v669 = vsel %vm647, %v615, %v508
    %v670 = vsel %vm647, %v599, %v509
    %v671 = vsel %vm648, %v616, %v510
    %v672 = vsel %vm648, %v600, %v511
    %v673 = vsel %vm649, %v617, %v512
    %v674 = vsel %vm649, %v601, %v513
    %v675 = vsel %vm650, %v618, %v514
    %v676 = vsel %vm650, %v602, %v515
    %v677 = vsel %vm651, %v619, %v516
    %v678 = vsel %vm651, %v603, %v517
    %v679 = vsel %vm652, %v620, %v518
    %v680 = vsel %vm652, %v604, %v519
    %v681 = vsel %vm653, %v621, %v520
    %v682 = vsel %vm653, %v605, %v521
    %v683 = vsel %vm654, %v622, %v522
    %v684 = vsel %vm654, %v606, %v523
    %v685 = vsel %vm655, %v623, %v524
    %v686 = vsel %vm655, %v607, %v525
    %v687 = vsel %vm656, %v624, %v526
    %v688 = vsel %vm656, %v608, %v527
    %689 = vrot.lane.b32.xlu0 %v657, 8
    %v690 = vpop.permute.xlu0 %689
    %691 = vrot.lane.b32.xlu0 %v659, 8
    %v692 = vpop.permute.xlu0 %691
    %693 = vrot.lane.b32.xlu0 %v661, 8
    %v694 = vpop.permute.xlu0 %693
    %695 = vrot.lane.b32.xlu0 %v663, 8
    %v696 = vpop.permute.xlu0 %695
    %697 = vrot.lane.b32.xlu0 %v665, 8
    %v698 = vpop.permute.xlu0 %697
    %699 = vrot.lane.b32.xlu0 %v667, 8
    %v700 = vpop.permute.xlu0 %699
    %701 = vrot.lane.b32.xlu0 %v669, 8
    %v702 = vpop.permute.xlu0 %701
    %703 = vrot.lane.b32.xlu0 %v671, 8
    %v704 = vpop.permute.xlu0 %703
    %705 = vrot.lane.b32.xlu0 %v673, 8
    %v706 = vpop.permute.xlu0 %705
    %707 = vrot.lane.b32.xlu0 %v675, 8
    %v708 = vpop.permute.xlu0 %707
    %709 = vrot.lane.b32.xlu0 %v677, 8
    %v710 = vpop.permute.xlu0 %709
    %711 = vrot.lane.b32.xlu0 %v679, 8
    %v712 = vpop.permute.xlu0 %711
    %713 = vrot.lane.b32.xlu0 %v681, 8
    %v714 = vpop.permute.xlu0 %713
    %715 = vrot.lane.b32.xlu0 %v683, 8
    %v716 = vpop.permute.xlu0 %715
    %717 = vrot.lane.b32.xlu0 %v685, 8
    %v718 = vpop.permute.xlu0 %717
    %719 = vrot.lane.b32.xlu0 %v687, 8
    %v720 = vpop.permute.xlu0 %719
    %721 = vrot.lane.b32.xlu0 %v658, 8
    %v722 = vpop.permute.xlu0 %721
    %723 = vrot.lane.b32.xlu0 %v660, 8
    %v724 = vpop.permute.xlu0 %723
    %725 = vrot.lane.b32.xlu0 %v662, 8
    %v726 = vpop.permute.xlu0 %725
    %727 = vrot.lane.b32.xlu0 %v664, 8
    %v728 = vpop.permute.xlu0 %727
    %729 = vrot.lane.b32.xlu0 %v666, 8
    %v730 = vpop.permute.xlu0 %729
    %731 = vrot.lane.b32.xlu0 %v668, 8
    %v732 = vpop.permute.xlu0 %731
    %733 = vrot.lane.b32.xlu0 %v670, 8
    %v734 = vpop.permute.xlu0 %733
    %735 = vrot.lane.b32.xlu0 %v672, 8
    %v736 = vpop.permute.xlu0 %735
    %737 = vrot.lane.b32.xlu0 %v674, 8
    %v738 = vpop.permute.xlu0 %737
    %739 = vrot.lane.b32.xlu0 %v676, 8
    %v740 = vpop.permute.xlu0 %739
    %741 = vrot.lane.b32.xlu0 %v678, 8
    %v742 = vpop.permute.xlu0 %741
    %743 = vrot.lane.b32.xlu0 %v680, 8
    %v744 = vpop.permute.xlu0 %743
    %745 = vrot.lane.b32.xlu0 %v682, 8
    %v746 = vpop.permute.xlu0 %745
    %747 = vrot.lane.b32.xlu0 %v684, 8
    %v748 = vpop.permute.xlu0 %747
    %749 = vrot.lane.b32.xlu0 %v686, 8
    %v750 = vpop.permute.xlu0 %749
    %751 = vrot.lane.b32.xlu0 %v688, 8
    %v752 = vpop.permute.xlu0 %751
    %vm753 = vcmp.lt.s32.totalorder %v299, 8
    %v754 = vsel %vm753, %v690, %v722
    %v755 = vsel %vm753, %v692, %v724
    %v756 = vsel %vm753, %v694, %v726
    %v757 = vsel %vm753, %v696, %v728
    %v758 = vsel %vm753, %v698, %v730
    %v759 = vsel %vm753, %v700, %v732
    %v760 = vsel %vm753, %v702, %v734
    %v761 = vsel %vm753, %v704, %v736
    %v762 = vsel %vm753, %v706, %v738
    %v763 = vsel %vm753, %v708, %v740
    %v764 = vsel %vm753, %v710, %v742
    %v765 = vsel %vm753, %v712, %v744
    %v766 = vsel %vm753, %v714, %v746
    %v767 = vsel %vm753, %v716, %v748
    %v768 = vsel %vm753, %v718, %v750
    %v769 = vsel %vm753, %v720, %v752
    %v770 = vsel %vm753, %v722, %v690
    %v771 = vsel %vm753, %v724, %v692
    %v772 = vsel %vm753, %v726, %v694
    %v773 = vsel %vm753, %v728, %v696
    %v774 = vsel %vm753, %v730, %v698
    %v775 = vsel %vm753, %v732, %v700
    %v776 = vsel %vm753, %v734, %v702
    %v777 = vsel %vm753, %v736, %v704
    %v778 = vsel %vm753, %v738, %v706
    %v779 = vsel %vm753, %v740, %v708
    %v780 = vsel %vm753, %v742, %v710
    %v781 = vsel %vm753, %v744, %v712
    %v782 = vsel %vm753, %v746, %v714
    %v783 = vsel %vm753, %v748, %v716
    %v784 = vsel %vm753, %v750, %v718
    %v785 = vsel %vm753, %v752, %v720
    %v786 = vsel %vm170, 1, 0
    %v787 = vsel %vm171, 1, 0
    %v788 = vsel %vm172, 1, 0
    %v789 = vsel %vm173, 1, 0
    %v790 = vsel %vm174, 1, 0
    %v791 = vsel %vm175, 1, 0
    %v792 = vsel %vm176, 1, 0
    %v793 = vsel %vm177, 1, 0
    %v794 = vsel %vm178, 1, 0
    %v795 = vsel %vm179, 1, 0
    %v796 = vsel %vm180, 1, 0
    %v797 = vsel %vm181, 1, 0
    %v798 = vsel %vm182, 1, 0
    %v799 = vsel %vm183, 1, 0
    %v800 = vsel %vm184, 1, 0
    %v801 = vsel %vm185, 1, 0
    %vm802 = vcmp.eq.s32.totalorder %v786, 1
    %vm803 = vcmp.eq.s32.totalorder %v787, 1
    %vm804 = vcmp.eq.s32.totalorder %v788, 1
    %vm805 = vcmp.eq.s32.totalorder %v789, 1
    %vm806 = vcmp.eq.s32.totalorder %v790, 1
    %vm807 = vcmp.eq.s32.totalorder %v791, 1
    %vm808 = vcmp.eq.s32.totalorder %v792, 1
    %vm809 = vcmp.eq.s32.totalorder %v793, 1
    %vm810 = vcmp.eq.s32.totalorder %v794, 1
    %vm811 = vcmp.eq.s32.totalorder %v795, 1
    %vm812 = vcmp.eq.s32.totalorder %v796, 1
    %vm813 = vcmp.eq.s32.totalorder %v797, 1
    %vm814 = vcmp.eq.s32.totalorder %v798, 1
    %vm815 = vcmp.eq.s32.totalorder %v799, 1
    %vm816 = vcmp.eq.s32.totalorder %v800, 1
    %vm817 = vcmp.eq.s32.totalorder %v801, 1
    %v818 = vsel %vm802, %v770, %v657
    %v819 = vsel %vm802, %v754, %v658
    %v820 = vsel %vm803, %v771, %v659
    %v821 = vsel %vm803, %v755, %v660
    %v822 = vsel %vm804, %v772, %v661
    %v823 = vsel %vm804, %v756, %v662
    %v824 = vsel %vm805, %v773, %v663
    %v825 = vsel %vm805, %v757, %v664
    %v826 = vsel %vm806, %v774, %v665
    %v827 = vsel %vm806, %v758, %v666
    %v828 = vsel %vm807, %v775, %v667
    %v829 = vsel %vm807, %v759, %v668
    %v830 = vsel %vm808, %v776, %v669
    %v831 = vsel %vm808, %v760, %v670
    %v832 = vsel %vm809, %v777, %v671
    %v833 = vsel %vm809, %v761, %v672
    %v834 = vsel %vm810, %v778, %v673
    %v835 = vsel %vm810, %v762, %v674
    %v836 = vsel %vm811, %v779, %v675
    %v837 = vsel %vm811, %v763, %v676
    %v838 = vsel %vm812, %v780, %v677
    %v839 = vsel %vm812, %v764, %v678
    %v840 = vsel %vm813, %v781, %v679
    %v841 = vsel %vm813, %v765, %v680
    %v842 = vsel %vm814, %v782, %v681
    %v843 = vsel %vm814, %v766, %v682
    %v844 = vsel %vm815, %v783, %v683
    %v845 = vsel %vm815, %v767, %v684
    %v846 = vsel %vm816, %v784, %v685
    %v847 = vsel %vm816, %v768, %v686
    %v848 = vsel %vm817, %v785, %v687
    %v849 = vsel %vm817, %v769, %v688
    %850 = vrot.lane.b32.xlu0 %v818, 16
    %v851 = vpop.permute.xlu0 %850
    %852 = vrot.lane.b32.xlu0 %v820, 16
    %v853 = vpop.permute.xlu0 %852
    %854 = vrot.lane.b32.xlu0 %v822, 16
    %v855 = vpop.permute.xlu0 %854
    %856 = vrot.lane.b32.xlu0 %v824, 16
    %v857 = vpop.permute.xlu0 %856
    %858 = vrot.lane.b32.xlu0 %v826, 16
    %v859 = vpop.permute.xlu0 %858
    %860 = vrot.lane.b32.xlu0 %v828, 16
    %v861 = vpop.permute.xlu0 %860
    %862 = vrot.lane.b32.xlu0 %v830, 16
    %v863 = vpop.permute.xlu0 %862
    %864 = vrot.lane.b32.xlu0 %v832, 16
    %v865 = vpop.permute.xlu0 %864
    %866 = vrot.lane.b32.xlu0 %v834, 16
    %v867 = vpop.permute.xlu0 %866
    %868 = vrot.lane.b32.xlu0 %v836, 16
    %v869 = vpop.permute.xlu0 %868
    %870 = vrot.lane.b32.xlu0 %v838, 16
    %v871 = vpop.permute.xlu0 %870
    %872 = vrot.lane.b32.xlu0 %v840, 16
    %v873 = vpop.permute.xlu0 %872
    %874 = vrot.lane.b32.xlu0 %v842, 16
    %v875 = vpop.permute.xlu0 %874
    %876 = vrot.lane.b32.xlu0 %v844, 16
    %v877 = vpop.permute.xlu0 %876
    %878 = vrot.lane.b32.xlu0 %v846, 16
    %v879 = vpop.permute.xlu0 %878
    %880 = vrot.lane.b32.xlu0 %v848, 16
    %v881 = vpop.permute.xlu0 %880
    %882 = vrot.lane.b32.xlu0 %v819, 16
    %v883 = vpop.permute.xlu0 %882
    %884 = vrot.lane.b32.xlu0 %v821, 16
    %v885 = vpop.permute.xlu0 %884
    %886 = vrot.lane.b32.xlu0 %v823, 16
    %v887 = vpop.permute.xlu0 %886
    %888 = vrot.lane.b32.xlu0 %v825, 16
    %v889 = vpop.permute.xlu0 %888
    %890 = vrot.lane.b32.xlu0 %v827, 16
    %v891 = vpop.permute.xlu0 %890
    %892 = vrot.lane.b32.xlu0 %v829, 16
    %v893 = vpop.permute.xlu0 %892
    %894 = vrot.lane.b32.xlu0 %v831, 16
    %v895 = vpop.permute.xlu0 %894
    %896 = vrot.lane.b32.xlu0 %v833, 16
    %v897 = vpop.permute.xlu0 %896
    %898 = vrot.lane.b32.xlu0 %v835, 16
    %v899 = vpop.permute.xlu0 %898
    %900 = vrot.lane.b32.xlu0 %v837, 16
    %v901 = vpop.permute.xlu0 %900
    %902 = vrot.lane.b32.xlu0 %v839, 16
    %v903 = vpop.permute.xlu0 %902
    %904 = vrot.lane.b32.xlu0 %v841, 16
    %v905 = vpop.permute.xlu0 %904
    %906 = vrot.lane.b32.xlu0 %v843, 16
    %v907 = vpop.permute.xlu0 %906
    %908 = vrot.lane.b32.xlu0 %v845, 16
    %v909 = vpop.permute.xlu0 %908
    %910 = vrot.lane.b32.xlu0 %v847, 16
    %v911 = vpop.permute.xlu0 %910
    %912 = vrot.lane.b32.xlu0 %v849, 16
    %v913 = vpop.permute.xlu0 %912
    %vm914 = vcmp.lt.s32.totalorder %v299, 16
    %v915 = vsel %vm914, %v851, %v883
    %v916 = vsel %vm914, %v853, %v885
    %v917 = vsel %vm914, %v855, %v887
    %v918 = vsel %vm914, %v857, %v889
    %v919 = vsel %vm914, %v859, %v891
    %v920 = vsel %vm914, %v861, %v893
    %v921 = vsel %vm914, %v863, %v895
    %v922 = vsel %vm914, %v865, %v897
    %v923 = vsel %vm914, %v867, %v899
    %v924 = vsel %vm914, %v869, %v901
    %v925 = vsel %vm914, %v871, %v903
    %v926 = vsel %vm914, %v873, %v905
    %v927 = vsel %vm914, %v875, %v907
    %v928 = vsel %vm914, %v877, %v909
    %v929 = vsel %vm914, %v879, %v911
    %v930 = vsel %vm914, %v881, %v913
    %v931 = vsel %vm914, %v883, %v851
    %v932 = vsel %vm914, %v885, %v853
    %v933 = vsel %vm914, %v887, %v855
    %v934 = vsel %vm914, %v889, %v857
    %v935 = vsel %vm914, %v891, %v859
    %v936 = vsel %vm914, %v893, %v861
    %v937 = vsel %vm914, %v895, %v863
    %v938 = vsel %vm914, %v897, %v865
    %v939 = vsel %vm914, %v899, %v867
    %v940 = vsel %vm914, %v901, %v869
    %v941 = vsel %vm914, %v903, %v871
    %v942 = vsel %vm914, %v905, %v873
    %v943 = vsel %vm914, %v907, %v875
    %v944 = vsel %vm914, %v909, %v877
    %v945 = vsel %vm914, %v911, %v879
    %v946 = vsel %vm914, %v913, %v881
    %v947 = vsel %vm202, 1, 0
    %v948 = vsel %vm203, 1, 0
    %v949 = vsel %vm204, 1, 0
    %v950 = vsel %vm205, 1, 0
    %v951 = vsel %vm206, 1, 0
    %v952 = vsel %vm207, 1, 0
    %v953 = vsel %vm208, 1, 0
    %v954 = vsel %vm209, 1, 0
    %v955 = vsel %vm210, 1, 0
    %v956 = vsel %vm211, 1, 0
    %v957 = vsel %vm212, 1, 0
    %v958 = vsel %vm213, 1, 0
    %v959 = vsel %vm214, 1, 0
    %v960 = vsel %vm215, 1, 0
    %v961 = vsel %vm216, 1, 0
    %v962 = vsel %vm217, 1, 0
    %vm963 = vcmp.eq.s32.totalorder %v947, 1
    %vm964 = vcmp.eq.s32.totalorder %v948, 1
    %vm965 = vcmp.eq.s32.totalorder %v949, 1
    %vm966 = vcmp.eq.s32.totalorder %v950, 1
    %vm967 = vcmp.eq.s32.totalorder %v951, 1
    %vm968 = vcmp.eq.s32.totalorder %v952, 1
    %vm969 = vcmp.eq.s32.totalorder %v953, 1
    %vm970 = vcmp.eq.s32.totalorder %v954, 1
    %vm971 = vcmp.eq.s32.totalorder %v955, 1
    %vm972 = vcmp.eq.s32.totalorder %v956, 1
    %vm973 = vcmp.eq.s32.totalorder %v957, 1
    %vm974 = vcmp.eq.s32.totalorder %v958, 1
    %vm975 = vcmp.eq.s32.totalorder %v959, 1
    %vm976 = vcmp.eq.s32.totalorder %v960, 1
    %vm977 = vcmp.eq.s32.totalorder %v961, 1
    %vm978 = vcmp.eq.s32.totalorder %v962, 1
    %v979 = vsel %vm963, %v931, %v818
    %v980 = vsel %vm963, %v915, %v819
    %v981 = vsel %vm964, %v932, %v820
    %v982 = vsel %vm964, %v916, %v821
    %v983 = vsel %vm965, %v933, %v822
    %v984 = vsel %vm965, %v917, %v823
    %v985 = vsel %vm966, %v934, %v824
    %v986 = vsel %vm966, %v918, %v825
    %v987 = vsel %vm967, %v935, %v826
    %v988 = vsel %vm967, %v919, %v827
    %v989 = vsel %vm968, %v936, %v828
    %v990 = vsel %vm968, %v920, %v829
    %v991 = vsel %vm969, %v937, %v830
    %v992 = vsel %vm969, %v921, %v831
    %v993 = vsel %vm970, %v938, %v832
    %v994 = vsel %vm970, %v922, %v833
    %v995 = vsel %vm971, %v939, %v834
    %v996 = vsel %vm971, %v923, %v835
    %v997 = vsel %vm972, %v940, %v836
    %v998 = vsel %vm972, %v924, %v837
    %v999 = vsel %vm973, %v941, %v838
    %v1000 = vsel %vm973, %v925, %v839
    %v1001 = vsel %vm974, %v942, %v840
    %v1002 = vsel %vm974, %v926, %v841
    %v1003 = vsel %vm975, %v943, %v842
    %v1004 = vsel %vm975, %v927, %v843
    %v1005 = vsel %vm976, %v944, %v844
    %v1006 = vsel %vm976, %v928, %v845
    %v1007 = vsel %vm977, %v945, %v846
    %v1008 = vsel %vm977, %v929, %v847
    %v1009 = vsel %vm978, %v946, %v848
    %v1010 = vsel %vm978, %v930, %v849
    %1011 = vrot.lane.b32.xlu0 %v979, 32
    %v1012 = vpop.permute.xlu0 %1011
    %1013 = vrot.lane.b32.xlu0 %v981, 32
    %v1014 = vpop.permute.xlu0 %1013
    %1015 = vrot.lane.b32.xlu0 %v983, 32
    %v1016 = vpop.permute.xlu0 %1015
    %1017 = vrot.lane.b32.xlu0 %v985, 32
    %v1018 = vpop.permute.xlu0 %1017
    %1019 = vrot.lane.b32.xlu0 %v987, 32
    %v1020 = vpop.permute.xlu0 %1019
    %1021 = vrot.lane.b32.xlu0 %v989, 32
    %v1022 = vpop.permute.xlu0 %1021
    %1023 = vrot.lane.b32.xlu0 %v991, 32
    %v1024 = vpop.permute.xlu0 %1023
    %1025 = vrot.lane.b32.xlu0 %v993, 32
    %v1026 = vpop.permute.xlu0 %1025
    %1027 = vrot.lane.b32.xlu0 %v995, 32
    %v1028 = vpop.permute.xlu0 %1027
    %1029 = vrot.lane.b32.xlu0 %v997, 32
    %v1030 = vpop.permute.xlu0 %1029
    %1031 = vrot.lane.b32.xlu0 %v999, 32
    %v1032 = vpop.permute.xlu0 %1031
    %1033 = vrot.lane.b32.xlu0 %v1001, 32
    %v1034 = vpop.permute.xlu0 %1033
    %1035 = vrot.lane.b32.xlu0 %v1003, 32
    %v1036 = vpop.permute.xlu0 %1035
    %1037 = vrot.lane.b32.xlu0 %v1005, 32
    %v1038 = vpop.permute.xlu0 %1037
    %1039 = vrot.lane.b32.xlu0 %v1007, 32
    %v1040 = vpop.permute.xlu0 %1039
    %1041 = vrot.lane.b32.xlu0 %v1009, 32
    %v1042 = vpop.permute.xlu0 %1041
    %1043 = vrot.lane.b32.xlu0 %v980, 32
    %v1044 = vpop.permute.xlu0 %1043
    %1045 = vrot.lane.b32.xlu0 %v982, 32
    %v1046 = vpop.permute.xlu0 %1045
    %1047 = vrot.lane.b32.xlu0 %v984, 32
    %v1048 = vpop.permute.xlu0 %1047
    %1049 = vrot.lane.b32.xlu0 %v986, 32
    %v1050 = vpop.permute.xlu0 %1049
    %1051 = vrot.lane.b32.xlu0 %v988, 32
    %v1052 = vpop.permute.xlu0 %1051
    %1053 = vrot.lane.b32.xlu0 %v990, 32
    %v1054 = vpop.permute.xlu0 %1053
    %1055 = vrot.lane.b32.xlu0 %v992, 32
    %v1056 = vpop.permute.xlu0 %1055
    %1057 = vrot.lane.b32.xlu0 %v994, 32
    %v1058 = vpop.permute.xlu0 %1057
    %1059 = vrot.lane.b32.xlu0 %v996, 32
    %v1060 = vpop.permute.xlu0 %1059
    %1061 = vrot.lane.b32.xlu0 %v998, 32
    %v1062 = vpop.permute.xlu0 %1061
    %1063 = vrot.lane.b32.xlu0 %v1000, 32
    %v1064 = vpop.permute.xlu0 %1063
    %1065 = vrot.lane.b32.xlu0 %v1002, 32
    %v1066 = vpop.permute.xlu0 %1065
    %1067 = vrot.lane.b32.xlu0 %v1004, 32
    %v1068 = vpop.permute.xlu0 %1067
    %1069 = vrot.lane.b32.xlu0 %v1006, 32
    %v1070 = vpop.permute.xlu0 %1069
    %1071 = vrot.lane.b32.xlu0 %v1008, 32
    %v1072 = vpop.permute.xlu0 %1071
    %1073 = vrot.lane.b32.xlu0 %v1010, 32
    %v1074 = vpop.permute.xlu0 %1073
    %vm1075 = vcmp.lt.s32.totalorder %v299, 32
    %v1076 = vsel %vm1075, %v1012, %v1044
    %v1077 = vsel %vm1075, %v1014, %v1046
    %v1078 = vsel %vm1075, %v1016, %v1048
    %v1079 = vsel %vm1075, %v1018, %v1050
    %v1080 = vsel %vm1075, %v1020, %v1052
    %v1081 = vsel %vm1075, %v1022, %v1054
    %v1082 = vsel %vm1075, %v1024, %v1056
    %v1083 = vsel %vm1075, %v1026, %v1058
    %v1084 = vsel %vm1075, %v1028, %v1060
    %v1085 = vsel %vm1075, %v1030, %v1062
    %v1086 = vsel %vm1075, %v1032, %v1064
    %v1087 = vsel %vm1075, %v1034, %v1066
    %v1088 = vsel %vm1075, %v1036, %v1068
    %v1089 = vsel %vm1075, %v1038, %v1070
    %v1090 = vsel %vm1075, %v1040, %v1072
    %v1091 = vsel %vm1075, %v1042, %v1074
    %v1092 = vsel %vm1075, %v1044, %v1012
    %v1093 = vsel %vm1075, %v1046, %v1014
    %v1094 = vsel %vm1075, %v1048, %v1016
    %v1095 = vsel %vm1075, %v1050, %v1018
    %v1096 = vsel %vm1075, %v1052, %v1020
    %v1097 = vsel %vm1075, %v1054, %v1022
    %v1098 = vsel %vm1075, %v1056, %v1024
    %v1099 = vsel %vm1075, %v1058, %v1026
    %v1100 = vsel %vm1075, %v1060, %v1028
    %v1101 = vsel %vm1075, %v1062, %v1030
    %v1102 = vsel %vm1075, %v1064, %v1032
    %v1103 = vsel %vm1075, %v1066, %v1034
    %v1104 = vsel %vm1075, %v1068, %v1036
    %v1105 = vsel %vm1075, %v1070, %v1038
    %v1106 = vsel %vm1075, %v1072, %v1040
    %v1107 = vsel %vm1075, %v1074, %v1042
    %v1108 = vsel %vm234, 1, 0
    %v1109 = vsel %vm235, 1, 0
    %v1110 = vsel %vm236, 1, 0
    %v1111 = vsel %vm237, 1, 0
    %v1112 = vsel %vm238, 1, 0
    %v1113 = vsel %vm239, 1, 0
    %v1114 = vsel %vm240, 1, 0
    %v1115 = vsel %vm241, 1, 0
    %v1116 = vsel %vm242, 1, 0
    %v1117 = vsel %vm243, 1, 0
    %v1118 = vsel %vm244, 1, 0
    %v1119 = vsel %vm245, 1, 0
    %v1120 = vsel %vm246, 1, 0
    %v1121 = vsel %vm247, 1, 0
    %v1122 = vsel %vm248, 1, 0
    %v1123 = vsel %vm249, 1, 0
    %vm1124 = vcmp.eq.s32.totalorder %v1108, 1
    %vm1125 = vcmp.eq.s32.totalorder %v1109, 1
    %vm1126 = vcmp.eq.s32.totalorder %v1110, 1
    %vm1127 = vcmp.eq.s32.totalorder %v1111, 1
    %vm1128 = vcmp.eq.s32.totalorder %v1112, 1
    %vm1129 = vcmp.eq.s32.totalorder %v1113, 1
    %vm1130 = vcmp.eq.s32.totalorder %v1114, 1
    %vm1131 = vcmp.eq.s32.totalorder %v1115, 1
    %vm1132 = vcmp.eq.s32.totalorder %v1116, 1
    %vm1133 = vcmp.eq.s32.totalorder %v1117, 1
    %vm1134 = vcmp.eq.s32.totalorder %v1118, 1
    %vm1135 = vcmp.eq.s32.totalorder %v1119, 1
    %vm1136 = vcmp.eq.s32.totalorder %v1120, 1
    %vm1137 = vcmp.eq.s32.totalorder %v1121, 1
    %vm1138 = vcmp.eq.s32.totalorder %v1122, 1
    %vm1139 = vcmp.eq.s32.totalorder %v1123, 1
    %v1140 = vsel %vm1124, %v1092, %v979
    %v1141 = vsel %vm1124, %v1076, %v980
    %v1142 = vsel %vm1125, %v1093, %v981
    %v1143 = vsel %vm1125, %v1077, %v982
    %v1144 = vsel %vm1126, %v1094, %v983
    %v1145 = vsel %vm1126, %v1078, %v984
    %v1146 = vsel %vm1127, %v1095, %v985
    %v1147 = vsel %vm1127, %v1079, %v986
    %v1148 = vsel %vm1128, %v1096, %v987
    %v1149 = vsel %vm1128, %v1080, %v988
    %v1150 = vsel %vm1129, %v1097, %v989
    %v1151 = vsel %vm1129, %v1081, %v990
    %v1152 = vsel %vm1130, %v1098, %v991
    %v1153 = vsel %vm1130, %v1082, %v992
    %v1154 = vsel %vm1131, %v1099, %v993
    %v1155 = vsel %vm1131, %v1083, %v994
    %v1156 = vsel %vm1132, %v1100, %v995
    %v1157 = vsel %vm1132, %v1084, %v996
    %v1158 = vsel %vm1133, %v1101, %v997
    %v1159 = vsel %vm1133, %v1085, %v998
    %v1160 = vsel %vm1134, %v1102, %v999
    %v1161 = vsel %vm1134, %v1086, %v1000
    %v1162 = vsel %vm1135, %v1103, %v1001
    %v1163 = vsel %vm1135, %v1087, %v1002
    %v1164 = vsel %vm1136, %v1104, %v1003
    %v1165 = vsel %vm1136, %v1088, %v1004
    %v1166 = vsel %vm1137, %v1105, %v1005
    %v1167 = vsel %vm1137, %v1089, %v1006
    %v1168 = vsel %vm1138, %v1106, %v1007
    %v1169 = vsel %vm1138, %v1090, %v1008
    %v1170 = vsel %vm1139, %v1107, %v1009
    %v1171 = vsel %vm1139, %v1091, %v1010
    %1172 = vrot.lane.b32.xlu0 %v1140, 64
    %v1173 = vpop.permute.xlu0 %1172
    %1174 = vrot.lane.b32.xlu0 %v1142, 64
    %v1175 = vpop.permute.xlu0 %1174
    %1176 = vrot.lane.b32.xlu0 %v1144, 64
    %v1177 = vpop.permute.xlu0 %1176
    %1178 = vrot.lane.b32.xlu0 %v1146, 64
    %v1179 = vpop.permute.xlu0 %1178
    %1180 = vrot.lane.b32.xlu0 %v1148, 64
    %v1181 = vpop.permute.xlu0 %1180
    %1182 = vrot.lane.b32.xlu0 %v1150, 64
    %v1183 = vpop.permute.xlu0 %1182
    %1184 = vrot.lane.b32.xlu0 %v1152, 64
    %v1185 = vpop.permute.xlu0 %1184
    %1186 = vrot.lane.b32.xlu0 %v1154, 64
    %v1187 = vpop.permute.xlu0 %1186
    %1188 = vrot.lane.b32.xlu0 %v1156, 64
    %v1189 = vpop.permute.xlu0 %1188
    %1190 = vrot.lane.b32.xlu0 %v1158, 64
    %v1191 = vpop.permute.xlu0 %1190
    %1192 = vrot.lane.b32.xlu0 %v1160, 64
    %v1193 = vpop.permute.xlu0 %1192
    %1194 = vrot.lane.b32.xlu0 %v1162, 64
    %v1195 = vpop.permute.xlu0 %1194
    %1196 = vrot.lane.b32.xlu0 %v1164, 64
    %v1197 = vpop.permute.xlu0 %1196
    %1198 = vrot.lane.b32.xlu0 %v1166, 64
    %v1199 = vpop.permute.xlu0 %1198
    %1200 = vrot.lane.b32.xlu0 %v1168, 64
    %v1201 = vpop.permute.xlu0 %1200
    %1202 = vrot.lane.b32.xlu0 %v1170, 64
    %v1203 = vpop.permute.xlu0 %1202
    %1204 = vrot.lane.b32.xlu0 %v1141, 64
    %v1205 = vpop.permute.xlu0 %1204
    %1206 = vrot.lane.b32.xlu0 %v1143, 64
    %v1207 = vpop.permute.xlu0 %1206
    %1208 = vrot.lane.b32.xlu0 %v1145, 64
    %v1209 = vpop.permute.xlu0 %1208
    %1210 = vrot.lane.b32.xlu0 %v1147, 64
    %v1211 = vpop.permute.xlu0 %1210
    %1212 = vrot.lane.b32.xlu0 %v1149, 64
    %v1213 = vpop.permute.xlu0 %1212
    %1214 = vrot.lane.b32.xlu0 %v1151, 64
    %v1215 = vpop.permute.xlu0 %1214
    %1216 = vrot.lane.b32.xlu0 %v1153, 64
    %v1217 = vpop.permute.xlu0 %1216
    %1218 = vrot.lane.b32.xlu0 %v1155, 64
    %v1219 = vpop.permute.xlu0 %1218
    %1220 = vrot.lane.b32.xlu0 %v1157, 64
    %v1221 = vpop.permute.xlu0 %1220
    %1222 = vrot.lane.b32.xlu0 %v1159, 64
    %v1223 = vpop.permute.xlu0 %1222
    %1224 = vrot.lane.b32.xlu0 %v1161, 64
    %v1225 = vpop.permute.xlu0 %1224
    %1226 = vrot.lane.b32.xlu0 %v1163, 64
    %v1227 = vpop.permute.xlu0 %1226
    %1228 = vrot.lane.b32.xlu0 %v1165, 64
    %v1229 = vpop.permute.xlu0 %1228
    %1230 = vrot.lane.b32.xlu0 %v1167, 64
    %v1231 = vpop.permute.xlu0 %1230
    %1232 = vrot.lane.b32.xlu0 %v1169, 64
    %v1233 = vpop.permute.xlu0 %1232
    %1234 = vrot.lane.b32.xlu0 %v1171, 64
    %v1235 = vpop.permute.xlu0 %1234
    %vm1236 = vcmp.lt.s32.totalorder %v299, 64
    %v1237 = vsel %vm1236, %v1173, %v1205
    %v1238 = vsel %vm1236, %v1175, %v1207
    %v1239 = vsel %vm1236, %v1177, %v1209
    %v1240 = vsel %vm1236, %v1179, %v1211
    %v1241 = vsel %vm1236, %v1181, %v1213
    %v1242 = vsel %vm1236, %v1183, %v1215
    %v1243 = vsel %vm1236, %v1185, %v1217
    %v1244 = vsel %vm1236, %v1187, %v1219
    %v1245 = vsel %vm1236, %v1189, %v1221
    %v1246 = vsel %vm1236, %v1191, %v1223
    %v1247 = vsel %vm1236, %v1193, %v1225
    %v1248 = vsel %vm1236, %v1195, %v1227
    %v1249 = vsel %vm1236, %v1197, %v1229
    %v1250 = vsel %vm1236, %v1199, %v1231
    %v1251 = vsel %vm1236, %v1201, %v1233
    %v1252 = vsel %vm1236, %v1203, %v1235
    %v1253 = vsel %vm266, 1, 0
    %v1254 = vsel %vm267, 1, 0
    %v1255 = vsel %vm268, 1, 0
    %v1256 = vsel %vm269, 1, 0
    %v1257 = vsel %vm270, 1, 0
    %v1258 = vsel %vm271, 1, 0
    %v1259 = vsel %vm272, 1, 0
    %v1260 = vsel %vm273, 1, 0
    %v1261 = vsel %vm274, 1, 0
    %v1262 = vsel %vm275, 1, 0
    %v1263 = vsel %vm276, 1, 0
    %v1264 = vsel %vm277, 1, 0
    %v1265 = vsel %vm278, 1, 0
    %v1266 = vsel %vm279, 1, 0
    %v1267 = vsel %vm280, 1, 0
    %v1268 = vsel %vm281, 1, 0
    %vm1269 = vcmp.eq.s32.totalorder %v1253, 1
    %vm1270 = vcmp.eq.s32.totalorder %v1254, 1
    %vm1271 = vcmp.eq.s32.totalorder %v1255, 1
    %vm1272 = vcmp.eq.s32.totalorder %v1256, 1
    %vm1273 = vcmp.eq.s32.totalorder %v1257, 1
    %vm1274 = vcmp.eq.s32.totalorder %v1258, 1
    %vm1275 = vcmp.eq.s32.totalorder %v1259, 1
    %vm1276 = vcmp.eq.s32.totalorder %v1260, 1
    %vm1277 = vcmp.eq.s32.totalorder %v1261, 1
    %vm1278 = vcmp.eq.s32.totalorder %v1262, 1
    %vm1279 = vcmp.eq.s32.totalorder %v1263, 1
    %vm1280 = vcmp.eq.s32.totalorder %v1264, 1
    %vm1281 = vcmp.eq.s32.totalorder %v1265, 1
    %vm1282 = vcmp.eq.s32.totalorder %v1266, 1
    %vm1283 = vcmp.eq.s32.totalorder %v1267, 1
    %vm1284 = vcmp.eq.s32.totalorder %v1268, 1
    %v1285 = vsel %vm1269, %v1237, %v1141
    %v1286 = vsel %vm1270, %v1238, %v1143
    %v1287 = vsel %vm1271, %v1239, %v1145
    %v1288 = vsel %vm1272, %v1240, %v1147
    %v1289 = vsel %vm1273, %v1241, %v1149
    %v1290 = vsel %vm1274, %v1242, %v1151
    %v1291 = vsel %vm1275, %v1243, %v1153
    %v1292 = vsel %vm1276, %v1244, %v1155
    %v1293 = vsel %vm1277, %v1245, %v1157
    %v1294 = vsel %vm1278, %v1246, %v1159
    %v1295 = vsel %vm1279, %v1247, %v1161
    %v1296 = vsel %vm1280, %v1248, %v1163
    %v1297 = vsel %vm1281, %v1249, %v1165
    %v1298 = vsel %vm1282, %v1250, %v1167
    %v1299 = vsel %vm1283, %v1251, %v1169
    %v1300 = vsel %vm1284, %v1252, %v1171
    %v1301 = vld [vmem:[#allocation2] sm:$0x1]
    %v1302 = vpack.c.bf16 %v1286, %v1285
    %v1303 = vpack.c.bf16 %v1288, %v1287
    %v1304 = vpack.c.bf16 %v1290, %v1289
    %v1305 = vpack.c.bf16 %v1292, %v1291
    %v1306 = vpack.c.bf16 %v1294, %v1293
    %v1307 = vpack.c.bf16 %v1296, %v1295
    %v1308 = vpack.c.bf16 %v1298, %v1297
    %v1309 = vpack.c.bf16 %v1300, %v1299
    %1310 = vmatprep.subr.bf16.mxu0 0
    %1311 = vmatpush1.bf16.msra.mxu0 %v1302
    %1312 = vmatprep.subr.bf16.mxu0 0
    %1313 = vmatpush1.bf16.msra.mxu0 %v1303
    %1314 = vmatprep.subr.bf16.mxu0 0
    %1315 = vmatpush1.bf16.msra.mxu0 %v1304
    %1316 = vmatprep.subr.bf16.mxu0 0
    %1317 = vmatpush1.bf16.msra.mxu0 %v1305
    %1318 = vmatprep.subr.bf16.mxu0 0
    %1319 = vmatpush1.bf16.msra.mxu0 %v1306
    %1320 = vmatprep.subr.bf16.mxu0 0
    %1321 = vmatpush1.bf16.msra.mxu0 %v1307
    %1322 = vmatprep.subr.bf16.mxu0 0
    %1323 = vmatpush1.bf16.msra.mxu0 %v1308
    %1324 = vmatprep.subr.bf16.mxu0 0
    %1325 = vmatpush1.bf16.msra.mxu0 %v1309
    %1326 = vmatprep.subr.bf16.mxu0 0
    %1327 = vmatpush1.bf16.msra.mxu0 0
    %1328 = vmatprep.subr.bf16.mxu0 0
    %1329 = vmatpush1.bf16.msra.mxu0 0
    %1330 = vmatprep.subr.bf16.mxu0 0
    %1331 = vmatpush1.bf16.msra.mxu0 0
    %1332 = vmatprep.subr.bf16.mxu0 0
    %1333 = vmatpush1.bf16.msra.mxu0 0
    %1334 = vmatprep.subr.bf16.mxu0 0
    %1335 = vmatpush1.bf16.msra.mxu0 0
    %1336 = vmatprep.subr.bf16.mxu0 0
    %1337 = vmatpush1.bf16.msra.mxu0 0
    %1338 = vmatprep.subr.bf16.mxu0 0
    %1339 = vmatpush1.bf16.msra.mxu0 0
    %1340 = vmatprep.subr.bf16.mxu0 0
    %1341 = vmatpush1.bf16.msra.mxu0 0
    %1342 = vmatprep.mubr.bf16.mxu0 0
    %1343 = vmatmul.mubr.bf16.gmra.mrb[0].mxu0 %v1301
    %v1344 = vpop.f32.mrb[0].mxu0
    %v1345 = vadd.f32 0.0, %v1344
    %v1346 = vpop.f32.mrb[0].mxu0
    %v1347 = vpop.f32.mrb[0].mxu0
    %v1348 = vpop.f32.mrb[0].mxu0
    %1349 = vdwg.mxu0
    %1350 = vst [vmem:[#allocation7] sm:$0x3] %v1345
    %s1351 = scalar_lea.vmem [#allocation5], 2
    %v1352 = vld [vmem:[%s1351] sm:$0x3]
    %v1354 = vlaneseq
    %v1355 = vshrl.u32 %v1354, 7
    %v1356 = vsub.s32 0, %v1355
    %v1357 = vrot.slane %v1352, %v1356
    %v1358 = vlaneseq
    %v1359 = vshrl.u32 %v1358, 7
    %v1360 = vsub.s32 1, %v1359
    %v1361 = vrot.slane %v1352, %v1360
    %1364 = vrot.lane.b32.xlu0 %v1357, 1
    %v1365 = vpop.permute.xlu0 %1364
    %1366 = vrot.lane.b32.xlu0 %v1361, 1
    %v1367 = vpop.permute.xlu0 %1366
    %v1368 = vsel %vm300, %v1365, %v1367
    %v1369 = vsel %vm300, %v1367, %v1365
    %v1370 = vsel %vm319, %v1369, %v1357
    %v1371 = vsel %vm319, %v1368, %v1361
    %v1372 = vsel %vm320, %v1369, %v1357
    %v1373 = vsel %vm320, %v1368, %v1361
    %v1374 = vsel %vm321, %v1369, %v1357
    %v1375 = vsel %vm321, %v1368, %v1361
    %v1376 = vsel %vm322, %v1369, %v1357
    %v1377 = vsel %vm322, %v1368, %v1361
    %v1378 = vsel %vm323, %v1369, %v1357
    %v1379 = vsel %vm323, %v1368, %v1361
    %v1380 = vsel %vm324, %v1369, %v1357
    %v1381 = vsel %vm324, %v1368, %v1361
    %v1382 = vsel %vm325, %v1369, %v1357
    %v1383 = vsel %vm325, %v1368, %v1361
    %v1384 = vsel %vm326, %v1369, %v1357
    %v1385 = vsel %vm326, %v1368, %v1361
    %v1386 = vsel %vm327, %v1369, %v1357
    %v1387 = vsel %vm327, %v1368, %v1361
    %v1388 = vsel %vm328, %v1369, %v1357
    %v1389 = vsel %vm328, %v1368, %v1361
    %v1390 = vsel %vm329, %v1369, %v1357
    %v1391 = vsel %vm329, %v1368, %v1361
    %v1392 = vsel %vm330, %v1369, %v1357
    %v1393 = vsel %vm330, %v1368, %v1361
    %v1394 = vsel %vm331, %v1369, %v1357
    %v1395 = vsel %vm331, %v1368, %v1361
    %v1396 = vsel %vm332, %v1369, %v1357
    %v1397 = vsel %vm332, %v1368, %v1361
    %v1398 = vsel %vm333, %v1369, %v1357
    %v1399 = vsel %vm333, %v1368, %v1361
    %v1400 = vsel %vm334, %v1369, %v1357
    %v1401 = vsel %vm334, %v1368, %v1361
    %1402 = vrot.lane.b32.xlu0 %v1370, 2
    %v1403 = vpop.permute.xlu0 %1402
    %1404 = vrot.lane.b32.xlu0 %v1372, 2
    %v1405 = vpop.permute.xlu0 %1404
    %1406 = vrot.lane.b32.xlu0 %v1374, 2
    %v1407 = vpop.permute.xlu0 %1406
    %1408 = vrot.lane.b32.xlu0 %v1376, 2
    %v1409 = vpop.permute.xlu0 %1408
    %1410 = vrot.lane.b32.xlu0 %v1378, 2
    %v1411 = vpop.permute.xlu0 %1410
    %1412 = vrot.lane.b32.xlu0 %v1380, 2
    %v1413 = vpop.permute.xlu0 %1412
    %1414 = vrot.lane.b32.xlu0 %v1382, 2
    %v1415 = vpop.permute.xlu0 %1414
    %1416 = vrot.lane.b32.xlu0 %v1384, 2
    %v1417 = vpop.permute.xlu0 %1416
    %1418 = vrot.lane.b32.xlu0 %v1386, 2
    %v1419 = vpop.permute.xlu0 %1418
    %1420 = vrot.lane.b32.xlu0 %v1388, 2
    %v1421 = vpop.permute.xlu0 %1420
    %1422 = vrot.lane.b32.xlu0 %v1390, 2
    %v1423 = vpop.permute.xlu0 %1422
    %1424 = vrot.lane.b32.xlu0 %v1392, 2
    %v1425 = vpop.permute.xlu0 %1424
    %1426 = vrot.lane.b32.xlu0 %v1394, 2
    %v1427 = vpop.permute.xlu0 %1426
    %1428 = vrot.lane.b32.xlu0 %v1396, 2
    %v1429 = vpop.permute.xlu0 %1428
    %1430 = vrot.lane.b32.xlu0 %v1398, 2
    %v1431 = vpop.permute.xlu0 %1430
    %1432 = vrot.lane.b32.xlu0 %v1400, 2
    %v1433 = vpop.permute.xlu0 %1432
    %1434 = vrot.lane.b32.xlu0 %v1371, 2
    %v1435 = vpop.permute.xlu0 %1434
    %1436 = vrot.lane.b32.xlu0 %v1373, 2
    %v1437 = vpop.permute.xlu0 %1436
    %1438 = vrot.lane.b32.xlu0 %v1375, 2
    %v1439 = vpop.permute.xlu0 %1438
    %1440 = vrot.lane.b32.xlu0 %v1377, 2
    %v1441 = vpop.permute.xlu0 %1440
    %1442 = vrot.lane.b32.xlu0 %v1379, 2
    %v1443 = vpop.permute.xlu0 %1442
    %1444 = vrot.lane.b32.xlu0 %v1381, 2
    %v1445 = vpop.permute.xlu0 %1444
    %1446 = vrot.lane.b32.xlu0 %v1383, 2
    %v1447 = vpop.permute.xlu0 %1446
    %1448 = vrot.lane.b32.xlu0 %v1385, 2
    %v1449 = vpop.permute.xlu0 %1448
    %1450 = vrot.lane.b32.xlu0 %v1387, 2
    %v1451 = vpop.permute.xlu0 %1450
    %1452 = vrot.lane.b32.xlu0 %v1389, 2
    %v1453 = vpop.permute.xlu0 %1452
    %1454 = vrot.lane.b32.xlu0 %v1391, 2
    %v1455 = vpop.permute.xlu0 %1454
    %1456 = vrot.lane.b32.xlu0 %v1393, 2
    %v1457 = vpop.permute.xlu0 %1456
    %1458 = vrot.lane.b32.xlu0 %v1395, 2
    %v1459 = vpop.permute.xlu0 %1458
    %1460 = vrot.lane.b32.xlu0 %v1397, 2
    %v1461 = vpop.permute.xlu0 %1460
    %1462 = vrot.lane.b32.xlu0 %v1399, 2
    %v1463 = vpop.permute.xlu0 %1462
    %1464 = vrot.lane.b32.xlu0 %v1401, 2
    %v1465 = vpop.permute.xlu0 %1464
    %v1466 = vsel %vm431, %v1403, %v1435
    %v1467 = vsel %vm431, %v1405, %v1437
    %v1468 = vsel %vm431, %v1407, %v1439
    %v1469 = vsel %vm431, %v1409, %v1441
    %v1470 = vsel %vm431, %v1411, %v1443
    %v1471 = vsel %vm431, %v1413, %v1445
    %v1472 = vsel %vm431, %v1415, %v1447
    %v1473 = vsel %vm431, %v1417, %v1449
    %v1474 = vsel %vm431, %v1419, %v1451
    %v1475 = vsel %vm431, %v1421, %v1453
    %v1476 = vsel %vm431, %v1423, %v1455
    %v1477 = vsel %vm431, %v1425, %v1457
    %v1478 = vsel %vm431, %v1427, %v1459
    %v1479 = vsel %vm431, %v1429, %v1461
    %v1480 = vsel %vm431, %v1431, %v1463
    %v1481 = vsel %vm431, %v1433, %v1465
    %v1482 = vsel %vm431, %v1435, %v1403
    %v1483 = vsel %vm431, %v1437, %v1405
    %v1484 = vsel %vm431, %v1439, %v1407
    %v1485 = vsel %vm431, %v1441, %v1409
    %v1486 = vsel %vm431, %v1443, %v1411
    %v1487 = vsel %vm431, %v1445, %v1413
    %v1488 = vsel %vm431, %v1447, %v1415
    %v1489 = vsel %vm431, %v1449, %v1417
    %v1490 = vsel %vm431, %v1451, %v1419
    %v1491 = vsel %vm431, %v1453, %v1421
    %v1492 = vsel %vm431, %v1455, %v1423
    %v1493 = vsel %vm431, %v1457, %v1425
    %v1494 = vsel %vm431, %v1459, %v1427
    %v1495 = vsel %vm431, %v1461, %v1429
    %v1496 = vsel %vm431, %v1463, %v1431
    %v1497 = vsel %vm431, %v1465, %v1433
    %v1498 = vsel %vm480, %v1482, %v1370
    %v1499 = vsel %vm480, %v1466, %v1371
    %v1500 = vsel %vm481, %v1483, %v1372
    %v1501 = vsel %vm481, %v1467, %v1373
    %v1502 = vsel %vm482, %v1484, %v1374
    %v1503 = vsel %vm482, %v1468, %v1375
    %v1504 = vsel %vm483, %v1485, %v1376
    %v1505 = vsel %vm483, %v1469, %v1377
    %v1506 = vsel %vm484, %v1486, %v1378
    %v1507 = vsel %vm484, %v1470, %v1379
    %v1508 = vsel %vm485, %v1487, %v1380
    %v1509 = vsel %vm485, %v1471, %v1381
    %v1510 = vsel %vm486, %v1488, %v1382
    %v1511 = vsel %vm486, %v1472, %v1383
    %v1512 = vsel %vm487, %v1489, %v1384
    %v1513 = vsel %vm487, %v1473, %v1385
    %v1514 = vsel %vm488, %v1490, %v1386
    %v1515 = vsel %vm488, %v1474, %v1387
    %v1516 = vsel %vm489, %v1491, %v1388
    %v1517 = vsel %vm489, %v1475, %v1389
    %v1518 = vsel %vm490, %v1492, %v1390
    %v1519 = vsel %vm490, %v1476, %v1391
    %v1520 = vsel %vm491, %v1493, %v1392
    %v1521 = vsel %vm491, %v1477, %v1393
    %v1522 = vsel %vm492, %v1494, %v1394
    %v1523 = vsel %vm492, %v1478, %v1395
    %v1524 = vsel %vm493, %v1495, %v1396
    %v1525 = vsel %vm493, %v1479, %v1397
    %v1526 = vsel %vm494, %v1496, %v1398
    %v1527 = vsel %vm494, %v1480, %v1399
    %v1528 = vsel %vm495, %v1497, %v1400
    %v1529 = vsel %vm495, %v1481, %v1401
    %1530 = vrot.lane.b32.xlu0 %v1498, 4
    %v1531 = vpop.permute.xlu0 %1530
    %1532 = vrot.lane.b32.xlu0 %v1500, 4
    %v1533 = vpop.permute.xlu0 %1532
    %1534 = vrot.lane.b32.xlu0 %v1502, 4
    %v1535 = vpop.permute.xlu0 %1534
    %1536 = vrot.lane.b32.xlu0 %v1504, 4
    %v1537 = vpop.permute.xlu0 %1536
    %1538 = vrot.lane.b32.xlu0 %v1506, 4
    %v1539 = vpop.permute.xlu0 %1538
    %1540 = vrot.lane.b32.xlu0 %v1508, 4
    %v1541 = vpop.permute.xlu0 %1540
    %1542 = vrot.lane.b32.xlu0 %v1510, 4
    %v1543 = vpop.permute.xlu0 %1542
    %1544 = vrot.lane.b32.xlu0 %v1512, 4
    %v1545 = vpop.permute.xlu0 %1544
    %1546 = vrot.lane.b32.xlu0 %v1514, 4
    %v1547 = vpop.permute.xlu0 %1546
    %1548 = vrot.lane.b32.xlu0 %v1516, 4
    %v1549 = vpop.permute.xlu0 %1548
    %1550 = vrot.lane.b32.xlu0 %v1518, 4
    %v1551 = vpop.permute.xlu0 %1550
    %1552 = vrot.lane.b32.xlu0 %v1520, 4
    %v1553 = vpop.permute.xlu0 %1552
    %1554 = vrot.lane.b32.xlu0 %v1522, 4
    %v1555 = vpop.permute.xlu0 %1554
    %1556 = vrot.lane.b32.xlu0 %v1524, 4
    %v1557 = vpop.permute.xlu0 %1556
    %1558 = vrot.lane.b32.xlu0 %v1526, 4
    %v1559 = vpop.permute.xlu0 %1558
    %1560 = vrot.lane.b32.xlu0 %v1528, 4
    %v1561 = vpop.permute.xlu0 %1560
    %1562 = vrot.lane.b32.xlu0 %v1499, 4
    %v1563 = vpop.permute.xlu0 %1562
    %1564 = vrot.lane.b32.xlu0 %v1501, 4
    %v1565 = vpop.permute.xlu0 %1564
    %1566 = vrot.lane.b32.xlu0 %v1503, 4
    %v1567 = vpop.permute.xlu0 %1566
    %1568 = vrot.lane.b32.xlu0 %v1505, 4
    %v1569 = vpop.permute.xlu0 %1568
    %1570 = vrot.lane.b32.xlu0 %v1507, 4
    %v1571 = vpop.permute.xlu0 %1570
    %1572 = vrot.lane.b32.xlu0 %v1509, 4
    %v1573 = vpop.permute.xlu0 %1572
    %1574 = vrot.lane.b32.xlu0 %v1511, 4
    %v1575 = vpop.permute.xlu0 %1574
    %1576 = vrot.lane.b32.xlu0 %v1513, 4
    %v1577 = vpop.permute.xlu0 %1576
    %1578 = vrot.lane.b32.xlu0 %v1515, 4
    %v1579 = vpop.permute.xlu0 %1578
    %1580 = vrot.lane.b32.xlu0 %v1517, 4
    %v1581 = vpop.permute.xlu0 %1580
    %1582 = vrot.lane.b32.xlu0 %v1519, 4
    %v1583 = vpop.permute.xlu0 %1582
    %1584 = vrot.lane.b32.xlu0 %v1521, 4
    %v1585 = vpop.permute.xlu0 %1584
    %1586 = vrot.lane.b32.xlu0 %v1523, 4
    %v1587 = vpop.permute.xlu0 %1586
    %1588 = vrot.lane.b32.xlu0 %v1525, 4
    %v1589 = vpop.permute.xlu0 %1588
    %1590 = vrot.lane.b32.xlu0 %v1527, 4
    %v1591 = vpop.permute.xlu0 %1590
    %1592 = vrot.lane.b32.xlu0 %v1529, 4
    %v1593 = vpop.permute.xlu0 %1592
    %v1594 = vsel %vm592, %v1531, %v1563
    %v1595 = vsel %vm592, %v1533, %v1565
    %v1596 = vsel %vm592, %v1535, %v1567
    %v1597 = vsel %vm592, %v1537, %v1569
    %v1598 = vsel %vm592, %v1539, %v1571
    %v1599 = vsel %vm592, %v1541, %v1573
    %v1600 = vsel %vm592, %v1543, %v1575
    %v1601 = vsel %vm592, %v1545, %v1577
    %v1602 = vsel %vm592, %v1547, %v1579
    %v1603 = vsel %vm592, %v1549, %v1581
    %v1604 = vsel %vm592, %v1551, %v1583
    %v1605 = vsel %vm592, %v1553, %v1585
    %v1606 = vsel %vm592, %v1555, %v1587
    %v1607 = vsel %vm592, %v1557, %v1589
    %v1608 = vsel %vm592, %v1559, %v1591
    %v1609 = vsel %vm592, %v1561, %v1593
    %v1610 = vsel %vm592, %v1563, %v1531
    %v1611 = vsel %vm592, %v1565, %v1533
    %v1612 = vsel %vm592, %v1567, %v1535
    %v1613 = vsel %vm592, %v1569, %v1537
    %v1614 = vsel %vm592, %v1571, %v1539
    %v1615 = vsel %vm592, %v1573, %v1541
    %v1616 = vsel %vm592, %v1575, %v1543
    %v1617 = vsel %vm592, %v1577, %v1545
    %v1618 = vsel %vm592, %v1579, %v1547
    %v1619 = vsel %vm592, %v1581, %v1549
    %v1620 = vsel %vm592, %v1583, %v1551
    %v1621 = vsel %vm592, %v1585, %v1553
    %v1622 = vsel %vm592, %v1587, %v1555
    %v1623 = vsel %vm592, %v1589, %v1557
    %v1624 = vsel %vm592, %v1591, %v1559
    %v1625 = vsel %vm592, %v1593, %v1561
    %v1626 = vsel %vm641, %v1610, %v1498
    %v1627 = vsel %vm641, %v1594, %v1499
    %v1628 = vsel %vm642, %v1611, %v1500
    %v1629 = vsel %vm642, %v1595, %v1501
    %v1630 = vsel %vm643, %v1612, %v1502
    %v1631 = vsel %vm643, %v1596, %v1503
    %v1632 = vsel %vm644, %v1613, %v1504
    %v1633 = vsel %vm644, %v1597, %v1505
    %v1634 = vsel %vm645, %v1614, %v1506
    %v1635 = vsel %vm645, %v1598, %v1507
    %v1636 = vsel %vm646, %v1615, %v1508
    %v1637 = vsel %vm646, %v1599, %v1509
    %v1638 = vsel %vm647, %v1616, %v1510
    %v1639 = vsel %vm647, %v1600, %v1511
    %v1640 = vsel %vm648, %v1617, %v1512
    %v1641 = vsel %vm648, %v1601, %v1513
    %v1642 = vsel %vm649, %v1618, %v1514
    %v1643 = vsel %vm649, %v1602, %v1515
    %v1644 = vsel %vm650, %v1619, %v1516
    %v1645 = vsel %vm650, %v1603, %v1517
    %v1646 = vsel %vm651, %v1620, %v1518
    %v1647 = vsel %vm651, %v1604, %v1519
    %v1648 = vsel %vm652, %v1621, %v1520
    %v1649 = vsel %vm652, %v1605, %v1521
    %v1650 = vsel %vm653, %v1622, %v1522
    %v1651 = vsel %vm653, %v1606, %v1523
    %v1652 = vsel %vm654, %v1623, %v1524
    %v1653 = vsel %vm654, %v1607, %v1525
    %v1654 = vsel %vm655, %v1624, %v1526
    %v1655 = vsel %vm655, %v1608, %v1527
    %v1656 = vsel %vm656, %v1625, %v1528
    %v1657 = vsel %vm656, %v1609, %v1529
    %1658 = vrot.lane.b32.xlu0 %v1626, 8
    %v1659 = vpop.permute.xlu0 %1658
    %1660 = vrot.lane.b32.xlu0 %v1628, 8
    %v1661 = vpop.permute.xlu0 %1660
    %1662 = vrot.lane.b32.xlu0 %v1630, 8
    %v1663 = vpop.permute.xlu0 %1662
    %1664 = vrot.lane.b32.xlu0 %v1632, 8
    %v1665 = vpop.permute.xlu0 %1664
    %1666 = vrot.lane.b32.xlu0 %v1634, 8
    %v1667 = vpop.permute.xlu0 %1666
    %1668 = vrot.lane.b32.xlu0 %v1636, 8
    %v1669 = vpop.permute.xlu0 %1668
    %1670 = vrot.lane.b32.xlu0 %v1638, 8
    %v1671 = vpop.permute.xlu0 %1670
    %1672 = vrot.lane.b32.xlu0 %v1640, 8
    %v1673 = vpop.permute.xlu0 %1672
    %1674 = vrot.lane.b32.xlu0 %v1642, 8
    %v1675 = vpop.permute.xlu0 %1674
    %1676 = vrot.lane.b32.xlu0 %v1644, 8
    %v1677 = vpop.permute.xlu0 %1676
    %1678 = vrot.lane.b32.xlu0 %v1646, 8
    %v1679 = vpop.permute.xlu0 %1678
    %1680 = vrot.lane.b32.xlu0 %v1648, 8
    %v1681 = vpop.permute.xlu0 %1680
    %1682 = vrot.lane.b32.xlu0 %v1650, 8
    %v1683 = vpop.permute.xlu0 %1682
    %1684 = vrot.lane.b32.xlu0 %v1652, 8
    %v1685 = vpop.permute.xlu0 %1684
    %1686 = vrot.lane.b32.xlu0 %v1654, 8
    %v1687 = vpop.permute.xlu0 %1686
    %1688 = vrot.lane.b32.xlu0 %v1656, 8
    %v1689 = vpop.permute.xlu0 %1688
    %1690 = vrot.lane.b32.xlu0 %v1627, 8
    %v1691 = vpop.permute.xlu0 %1690
    %1692 = vrot.lane.b32.xlu0 %v1629, 8
    %v1693 = vpop.permute.xlu0 %1692
    %1694 = vrot.lane.b32.xlu0 %v1631, 8
    %v1695 = vpop.permute.xlu0 %1694
    %1696 = vrot.lane.b32.xlu0 %v1633, 8
    %v1697 = vpop.permute.xlu0 %1696
    %1698 = vrot.lane.b32.xlu0 %v1635, 8
    %v1699 = vpop.permute.xlu0 %1698
    %1700 = vrot.lane.b32.xlu0 %v1637, 8
    %v1701 = vpop.permute.xlu0 %1700
    %1702 = vrot.lane.b32.xlu0 %v1639, 8
    %v1703 = vpop.permute.xlu0 %1702
    %1704 = vrot.lane.b32.xlu0 %v1641, 8
    %v1705 = vpop.permute.xlu0 %1704
    %1706 = vrot.lane.b32.xlu0 %v1643, 8
    %v1707 = vpop.permute.xlu0 %1706
    %1708 = vrot.lane.b32.xlu0 %v1645, 8
    %v1709 = vpop.permute.xlu0 %1708
    %1710 = vrot.lane.b32.xlu0 %v1647, 8
    %v1711 = vpop.permute.xlu0 %1710
    %1712 = vrot.lane.b32.xlu0 %v1649, 8
    %v1713 = vpop.permute.xlu0 %1712
    %1714 = vrot.lane.b32.xlu0 %v1651, 8
    %v1715 = vpop.permute.xlu0 %1714
    %1716 = vrot.lane.b32.xlu0 %v1653, 8
    %v1717 = vpop.permute.xlu0 %1716
    %1718 = vrot.lane.b32.xlu0 %v1655, 8
    %v1719 = vpop.permute.xlu0 %1718
    %1720 = vrot.lane.b32.xlu0 %v1657, 8
    %v1721 = vpop.permute.xlu0 %1720
    %v1722 = vsel %vm753, %v1659, %v1691
    %v1723 = vsel %vm753, %v1661, %v1693
    %v1724 = vsel %vm753, %v1663, %v1695
    %v1725 = vsel %vm753, %v1665, %v1697
    %v1726 = vsel %vm753, %v1667, %v1699
    %v1727 = vsel %vm753, %v1669, %v1701
    %v1728 = vsel %vm753, %v1671, %v1703
    %v1729 = vsel %vm753, %v1673, %v1705
    %v1730 = vsel %vm753, %v1675, %v1707
    %v1731 = vsel %vm753, %v1677, %v1709
    %v1732 = vsel %vm753, %v1679, %v1711
    %v1733 = vsel %vm753, %v1681, %v1713
    %v1734 = vsel %vm753, %v1683, %v1715
    %v1735 = vsel %vm753, %v1685, %v1717
    %v1736 = vsel %vm753, %v1687, %v1719
    %v1737 = vsel %vm753, %v1689, %v1721
    %v1738 = vsel %vm753, %v1691, %v1659
    %v1739 = vsel %vm753, %v1693, %v1661
    %v1740 = vsel %vm753, %v1695, %v1663
    %v1741 = vsel %vm753, %v1697, %v1665
    %v1742 = vsel %vm753, %v1699, %v1667
    %v1743 = vsel %vm753, %v1701, %v1669
    %v1744 = vsel %vm753, %v1703, %v1671
    %v1745 = vsel %vm753, %v1705, %v1673
    %v1746 = vsel %vm753, %v1707, %v1675
    %v1747 = vsel %vm753, %v1709, %v1677
    %v1748 = vsel %vm753, %v1711, %v1679
    %v1749 = vsel %vm753, %v1713, %v1681
    %v1750 = vsel %vm753, %v1715, %v1683
    %v1751 = vsel %vm753, %v1717, %v1685
    %v1752 = vsel %vm753, %v1719, %v1687
    %v1753 = vsel %vm753, %v1721, %v1689
    %v1754 = vsel %vm802, %v1738, %v1626
    %v1755 = vsel %vm802, %v1722, %v1627
    %v1756 = vsel %vm803, %v1739, %v1628
    %v1757 = vsel %vm803, %v1723, %v1629
    %v1758 = vsel %vm804, %v1740, %v1630
    %v1759 = vsel %vm804, %v1724, %v1631
    %v1760 = vsel %vm805, %v1741, %v1632
    %v1761 = vsel %vm805, %v1725, %v1633
    %v1762 = vsel %vm806, %v1742, %v1634
    %v1763 = vsel %vm806, %v1726, %v1635
    %v1764 = vsel %vm807, %v1743, %v1636
    %v1765 = vsel %vm807, %v1727, %v1637
    %v1766 = vsel %vm808, %v1744, %v1638
    %v1767 = vsel %vm808, %v1728, %v1639
    %v1768 = vsel %vm809, %v1745, %v1640
    %v1769 = vsel %vm809, %v1729, %v1641
    %v1770 = vsel %vm810, %v1746, %v1642
    %v1771 = vsel %vm810, %v1730, %v1643
    %v1772 = vsel %vm811, %v1747, %v1644
    %v1773 = vsel %vm811, %v1731, %v1645
    %v1774 = vsel %vm812, %v1748, %v1646
    %v1775 = vsel %vm812, %v1732, %v1647
    %v1776 = vsel %vm813, %v1749, %v1648
    %v1777 = vsel %vm813, %v1733, %v1649
    %v1778 = vsel %vm814, %v1750, %v1650
    %v1779 = vsel %vm814, %v1734, %v1651
    %v1780 = vsel %vm815, %v1751, %v1652
    %v1781 = vsel %vm815, %v1735, %v1653
    %v1782 = vsel %vm816, %v1752, %v1654
    %v1783 = vsel %vm816, %v1736, %v1655
    %v1784 = vsel %vm817, %v1753, %v1656
    %v1785 = vsel %vm817, %v1737, %v1657
    %1786 = vrot.lane.b32.xlu0 %v1754, 16
    %v1787 = vpop.permute.xlu0 %1786
    %1788 = vrot.lane.b32.xlu0 %v1756, 16
    %v1789 = vpop.permute.xlu0 %1788
    %1790 = vrot.lane.b32.xlu0 %v1758, 16
    %v1791 = vpop.permute.xlu0 %1790
    %1792 = vrot.lane.b32.xlu0 %v1760, 16
    %v1793 = vpop.permute.xlu0 %1792
    %1794 = vrot.lane.b32.xlu0 %v1762, 16
    %v1795 = vpop.permute.xlu0 %1794
    %1796 = vrot.lane.b32.xlu0 %v1764, 16
    %v1797 = vpop.permute.xlu0 %1796
    %1798 = vrot.lane.b32.xlu0 %v1766, 16
    %v1799 = vpop.permute.xlu0 %1798
    %1800 = vrot.lane.b32.xlu0 %v1768, 16
    %v1801 = vpop.permute.xlu0 %1800
    %1802 = vrot.lane.b32.xlu0 %v1770, 16
    %v1803 = vpop.permute.xlu0 %1802
    %1804 = vrot.lane.b32.xlu0 %v1772, 16
    %v1805 = vpop.permute.xlu0 %1804
    %1806 = vrot.lane.b32.xlu0 %v1774, 16
    %v1807 = vpop.permute.xlu0 %1806
    %1808 = vrot.lane.b32.xlu0 %v1776, 16
    %v1809 = vpop.permute.xlu0 %1808
    %1810 = vrot.lane.b32.xlu0 %v1778, 16
    %v1811 = vpop.permute.xlu0 %1810
    %1812 = vrot.lane.b32.xlu0 %v1780, 16
    %v1813 = vpop.permute.xlu0 %1812
    %1814 = vrot.lane.b32.xlu0 %v1782, 16
    %v1815 = vpop.permute.xlu0 %1814
    %1816 = vrot.lane.b32.xlu0 %v1784, 16
    %v1817 = vpop.permute.xlu0 %1816
    %1818 = vrot.lane.b32.xlu0 %v1755, 16
    %v1819 = vpop.permute.xlu0 %1818
    %1820 = vrot.lane.b32.xlu0 %v1757, 16
    %v1821 = vpop.permute.xlu0 %1820
    %1822 = vrot.lane.b32.xlu0 %v1759, 16
    %v1823 = vpop.permute.xlu0 %1822
    %1824 = vrot.lane.b32.xlu0 %v1761, 16
    %v1825 = vpop.permute.xlu0 %1824
    %1826 = vrot.lane.b32.xlu0 %v1763, 16
    %v1827 = vpop.permute.xlu0 %1826
    %1828 = vrot.lane.b32.xlu0 %v1765, 16
    %v1829 = vpop.permute.xlu0 %1828
    %1830 = vrot.lane.b32.xlu0 %v1767, 16
    %v1831 = vpop.permute.xlu0 %1830
    %1832 = vrot.lane.b32.xlu0 %v1769, 16
    %v1833 = vpop.permute.xlu0 %1832
    %1834 = vrot.lane.b32.xlu0 %v1771, 16
    %v1835 = vpop.permute.xlu0 %1834
    %1836 = vrot.lane.b32.xlu0 %v1773, 16
    %v1837 = vpop.permute.xlu0 %1836
    %1838 = vrot.lane.b32.xlu0 %v1775, 16
    %v1839 = vpop.permute.xlu0 %1838
    %1840 = vrot.lane.b32.xlu0 %v1777, 16
    %v1841 = vpop.permute.xlu0 %1840
    %1842 = vrot.lane.b32.xlu0 %v1779, 16
    %v1843 = vpop.permute.xlu0 %1842
    %1844 = vrot.lane.b32.xlu0 %v1781, 16
    %v1845 = vpop.permute.xlu0 %1844
    %1846 = vrot.lane.b32.xlu0 %v1783, 16
    %v1847 = vpop.permute.xlu0 %1846
    %1848 = vrot.lane.b32.xlu0 %v1785, 16
    %v1849 = vpop.permute.xlu0 %1848
    %v1850 = vsel %vm914, %v1787, %v1819
    %v1851 = vsel %vm914, %v1789, %v1821
    %v1852 = vsel %vm914, %v1791, %v1823
    %v1853 = vsel %vm914, %v1793, %v1825
    %v1854 = vsel %vm914, %v1795, %v1827
    %v1855 = vsel %vm914, %v1797, %v1829
    %v1856 = vsel %vm914, %v1799, %v1831
    %v1857 = vsel %vm914, %v1801, %v1833
    %v1858 = vsel %vm914, %v1803, %v1835
    %v1859 = vsel %vm914, %v1805, %v1837
    %v1860 = vsel %vm914, %v1807, %v1839
    %v1861 = vsel %vm914, %v1809, %v1841
    %v1862 = vsel %vm914, %v1811, %v1843
    %v1863 = vsel %vm914, %v1813, %v1845
    %v1864 = vsel %vm914, %v1815, %v1847
    %v1865 = vsel %vm914, %v1817, %v1849
    %v1866 = vsel %vm914, %v1819, %v1787
    %v1867 = vsel %vm914, %v1821, %v1789
    %v1868 = vsel %vm914, %v1823, %v1791
    %v1869 = vsel %vm914, %v1825, %v1793
    %v1870 = vsel %vm914, %v1827, %v1795
    %v1871 = vsel %vm914, %v1829, %v1797
    %v1872 = vsel %vm914, %v1831, %v1799
    %v1873 = vsel %vm914, %v1833, %v1801
    %v1874 = vsel %vm914, %v1835, %v1803
    %v1875 = vsel %vm914, %v1837, %v1805
    %v1876 = vsel %vm914, %v1839, %v1807
    %v1877 = vsel %vm914, %v1841, %v1809
    %v1878 = vsel %vm914, %v1843, %v1811
    %v1879 = vsel %vm914, %v1845, %v1813
    %v1880 = vsel %vm914, %v1847, %v1815
    %v1881 = vsel %vm914, %v1849, %v1817
    %v1882 = vsel %vm963, %v1866, %v1754
    %v1883 = vsel %vm963, %v1850, %v1755
    %v1884 = vsel %vm964, %v1867, %v1756
    %v1885 = vsel %vm964, %v1851, %v1757
    %v1886 = vsel %vm965, %v1868, %v1758
    %v1887 = vsel %vm965, %v1852, %v1759
    %v1888 = vsel %vm966, %v1869, %v1760
    %v1889 = vsel %vm966, %v1853, %v1761
    %v1890 = vsel %vm967, %v1870, %v1762
    %v1891 = vsel %vm967, %v1854, %v1763
    %v1892 = vsel %vm968, %v1871, %v1764
    %v1893 = vsel %vm968, %v1855, %v1765
    %v1894 = vsel %vm969, %v1872, %v1766
    %v1895 = vsel %vm969, %v1856, %v1767
    %v1896 = vsel %vm970, %v1873, %v1768
    %v1897 = vsel %vm970, %v1857, %v1769
    %v1898 = vsel %vm971, %v1874, %v1770
    %v1899 = vsel %vm971, %v1858, %v1771
    %v1900 = vsel %vm972, %v1875, %v1772
    %v1901 = vsel %vm972, %v1859, %v1773
    %v1902 = vsel %vm973, %v1876, %v1774
    %v1903 = vsel %vm973, %v1860, %v1775
    %v1904 = vsel %vm974, %v1877, %v1776
    %v1905 = vsel %vm974, %v1861, %v1777
    %v1906 = vsel %vm975, %v1878, %v1778
    %v1907 = vsel %vm975, %v1862, %v1779
    %v1908 = vsel %vm976, %v1879, %v1780
    %v1909 = vsel %vm976, %v1863, %v1781
    %v1910 = vsel %vm977, %v1880, %v1782
    %v1911 = vsel %vm977, %v1864, %v1783
    %v1912 = vsel %vm978, %v1881, %v1784
    %v1913 = vsel %vm978, %v1865, %v1785
    %1914 = vrot.lane.b32.xlu0 %v1882, 32
    %v1915 = vpop.permute.xlu0 %1914
    %1916 = vrot.lane.b32.xlu0 %v1884, 32
    %v1917 = vpop.permute.xlu0 %1916
    %1918 = vrot.lane.b32.xlu0 %v1886, 32
    %v1919 = vpop.permute.xlu0 %1918
    %1920 = vrot.lane.b32.xlu0 %v1888, 32
    %v1921 = vpop.permute.xlu0 %1920
    %1922 = vrot.lane.b32.xlu0 %v1890, 32
    %v1923 = vpop.permute.xlu0 %1922
    %1924 = vrot.lane.b32.xlu0 %v1892, 32
    %v1925 = vpop.permute.xlu0 %1924
    %1926 = vrot.lane.b32.xlu0 %v1894, 32
    %v1927 = vpop.permute.xlu0 %1926
    %1928 = vrot.lane.b32.xlu0 %v1896, 32
    %v1929 = vpop.permute.xlu0 %1928
    %1930 = vrot.lane.b32.xlu0 %v1898, 32
    %v1931 = vpop.permute.xlu0 %1930
    %1932 = vrot.lane.b32.xlu0 %v1900, 32
    %v1933 = vpop.permute.xlu0 %1932
    %1934 = vrot.lane.b32.xlu0 %v1902, 32
    %v1935 = vpop.permute.xlu0 %1934
    %1936 = vrot.lane.b32.xlu0 %v1904, 32
    %v1937 = vpop.permute.xlu0 %1936
    %1938 = vrot.lane.b32.xlu0 %v1906, 32
    %v1939 = vpop.permute.xlu0 %1938
    %1940 = vrot.lane.b32.xlu0 %v1908, 32
    %v1941 = vpop.permute.xlu0 %1940
    %1942 = vrot.lane.b32.xlu0 %v1910, 32
    %v1943 = vpop.permute.xlu0 %1942
    %1944 = vrot.lane.b32.xlu0 %v1912, 32
    %v1945 = vpop.permute.xlu0 %1944
    %1946 = vrot.lane.b32.xlu0 %v1883, 32
    %v1947 = vpop.permute.xlu0 %1946
    %1948 = vrot.lane.b32.xlu0 %v1885, 32
    %v1949 = vpop.permute.xlu0 %1948
    %1950 = vrot.lane.b32.xlu0 %v1887, 32
    %v1951 = vpop.permute.xlu0 %1950
    %1952 = vrot.lane.b32.xlu0 %v1889, 32
    %v1953 = vpop.permute.xlu0 %1952
    %1954 = vrot.lane.b32.xlu0 %v1891, 32
    %v1955 = vpop.permute.xlu0 %1954
    %1956 = vrot.lane.b32.xlu0 %v1893, 32
    %v1957 = vpop.permute.xlu0 %1956
    %1958 = vrot.lane.b32.xlu0 %v1895, 32
    %v1959 = vpop.permute.xlu0 %1958
    %1960 = vrot.lane.b32.xlu0 %v1897, 32
    %v1961 = vpop.permute.xlu0 %1960
    %1962 = vrot.lane.b32.xlu0 %v1899, 32
    %v1963 = vpop.permute.xlu0 %1962
    %1964 = vrot.lane.b32.xlu0 %v1901, 32
    %v1965 = vpop.permute.xlu0 %1964
    %1966 = vrot.lane.b32.xlu0 %v1903, 32
    %v1967 = vpop.permute.xlu0 %1966
    %1968 = vrot.lane.b32.xlu0 %v1905, 32
    %v1969 = vpop.permute.xlu0 %1968
    %1970 = vrot.lane.b32.xlu0 %v1907, 32
    %v1971 = vpop.permute.xlu0 %1970
    %1972 = vrot.lane.b32.xlu0 %v1909, 32
    %v1973 = vpop.permute.xlu0 %1972
    %1974 = vrot.lane.b32.xlu0 %v1911, 32
    %v1975 = vpop.permute.xlu0 %1974
    %1976 = vrot.lane.b32.xlu0 %v1913, 32
    %v1977 = vpop.permute.xlu0 %1976
    %v1978 = vsel %vm1075, %v1915, %v1947
    %v1979 = vsel %vm1075, %v1917, %v1949
    %v1980 = vsel %vm1075, %v1919, %v1951
    %v1981 = vsel %vm1075, %v1921, %v1953
    %v1982 = vsel %vm1075, %v1923, %v1955
    %v1983 = vsel %vm1075, %v1925, %v1957
    %v1984 = vsel %vm1075, %v1927, %v1959
    %v1985 = vsel %vm1075, %v1929, %v1961
    %v1986 = vsel %vm1075, %v1931, %v1963
    %v1987 = vsel %vm1075, %v1933, %v1965
    %v1988 = vsel %vm1075, %v1935, %v1967
    %v1989 = vsel %vm1075, %v1937, %v1969
    %v1990 = vsel %vm1075, %v1939, %v1971
    %v1991 = vsel %vm1075, %v1941, %v1973
    %v1992 = vsel %vm1075, %v1943, %v1975
    %v1993 = vsel %vm1075, %v1945, %v1977
    %v1994 = vsel %vm1075, %v1947, %v1915
    %v1995 = vsel %vm1075, %v1949, %v1917
    %v1996 = vsel %vm1075, %v1951, %v1919
    %v1997 = vsel %vm1075, %v1953, %v1921
    %v1998 = vsel %vm1075, %v1955, %v1923
    %v1999 = vsel %vm1075, %v1957, %v1925
    %v2000 = vsel %vm1075, %v1959, %v1927
    %v2001 = vsel %vm1075, %v1961, %v1929
    %v2002 = vsel %vm1075, %v1963, %v1931
    %v2003 = vsel %vm1075, %v1965, %v1933
    %v2004 = vsel %vm1075, %v1967, %v1935
    %v2005 = vsel %vm1075, %v1969, %v1937
    %v2006 = vsel %vm1075, %v1971, %v1939
    %v2007 = vsel %vm1075, %v1973, %v1941
    %v2008 = vsel %vm1075, %v1975, %v1943
    %v2009 = vsel %vm1075, %v1977, %v1945
    %v2010 = vsel %vm1124, %v1994, %v1882
    %v2011 = vsel %vm1124, %v1978, %v1883
    %v2012 = vsel %vm1125, %v1995, %v1884
    %v2013 = vsel %vm1125, %v1979, %v1885
    %v2014 = vsel %vm1126, %v1996, %v1886
    %v2015 = vsel %vm1126, %v1980, %v1887
    %v2016 = vsel %vm1127, %v1997, %v1888
    %v2017 = vsel %vm1127, %v1981, %v1889
    %v2018 = vsel %vm1128, %v1998, %v1890
    %v2019 = vsel %vm1128, %v1982, %v1891
    %v2020 = vsel %vm1129, %v1999, %v1892
    %v2021 = vsel %vm1129, %v1983, %v1893
    %v2022 = vsel %vm1130, %v2000, %v1894
    %v2023 = vsel %vm1130, %v1984, %v1895
    %v2024 = vsel %vm1131, %v2001, %v1896
    %v2025 = vsel %vm1131, %v1985, %v1897
    %v2026 = vsel %vm1132, %v2002, %v1898
    %v2027 = vsel %vm1132, %v1986, %v1899
    %v2028 = vsel %vm1133, %v2003, %v1900
    %v2029 = vsel %vm1133, %v1987, %v1901
    %v2030 = vsel %vm1134, %v2004, %v1902
    %v2031 = vsel %vm1134, %v1988, %v1903
    %v2032 = vsel %vm1135, %v2005, %v1904
    %v2033 = vsel %vm1135, %v1989, %v1905
    %v2034 = vsel %vm1136, %v2006, %v1906
    %v2035 = vsel %vm1136, %v1990, %v1907
    %v2036 = vsel %vm1137, %v2007, %v1908
    %v2037 = vsel %vm1137, %v1991, %v1909
    %v2038 = vsel %vm1138, %v2008, %v1910
    %v2039 = vsel %vm1138, %v1992, %v1911
    %v2040 = vsel %vm1139, %v2009, %v1912
    %v2041 = vsel %vm1139, %v1993, %v1913
    %2042 = vrot.lane.b32.xlu0 %v2010, 64
    %v2043 = vpop.permute.xlu0 %2042
    %2044 = vrot.lane.b32.xlu0 %v2012, 64
    %v2045 = vpop.permute.xlu0 %2044
    %2046 = vrot.lane.b32.xlu0 %v2014, 64
    %v2047 = vpop.permute.xlu0 %2046
    %2048 = vrot.lane.b32.xlu0 %v2016, 64
    %v2049 = vpop.permute.xlu0 %2048
    %2050 = vrot.lane.b32.xlu0 %v2018, 64
    %v2051 = vpop.permute.xlu0 %2050
    %2052 = vrot.lane.b32.xlu0 %v2020, 64
    %v2053 = vpop.permute.xlu0 %2052
    %2054 = vrot.lane.b32.xlu0 %v2022, 64
    %v2055 = vpop.permute.xlu0 %2054
    %2056 = vrot.lane.b32.xlu0 %v2024, 64
    %v2057 = vpop.permute.xlu0 %2056
    %2058 = vrot.lane.b32.xlu0 %v2026, 64
    %v2059 = vpop.permute.xlu0 %2058
    %2060 = vrot.lane.b32.xlu0 %v2028, 64
    %v2061 = vpop.permute.xlu0 %2060
    %2062 = vrot.lane.b32.xlu0 %v2030, 64
    %v2063 = vpop.permute.xlu0 %2062
    %2064 = vrot.lane.b32.xlu0 %v2032, 64
    %v2065 = vpop.permute.xlu0 %2064
    %2066 = vrot.lane.b32.xlu0 %v2034, 64
    %v2067 = vpop.permute.xlu0 %2066
    %2068 = vrot.lane.b32.xlu0 %v2036, 64
    %v2069 = vpop.permute.xlu0 %2068
    %2070 = vrot.lane.b32.xlu0 %v2038, 64
    %v2071 = vpop.permute.xlu0 %2070
    %2072 = vrot.lane.b32.xlu0 %v2040, 64
    %v2073 = vpop.permute.xlu0 %2072
    %2074 = vrot.lane.b32.xlu0 %v2011, 64
    %v2075 = vpop.permute.xlu0 %2074
    %2076 = vrot.lane.b32.xlu0 %v2013, 64
    %v2077 = vpop.permute.xlu0 %2076
    %2078 = vrot.lane.b32.xlu0 %v2015, 64
    %v2079 = vpop.permute.xlu0 %2078
    %2080 = vrot.lane.b32.xlu0 %v2017, 64
    %v2081 = vpop.permute.xlu0 %2080
    %2082 = vrot.lane.b32.xlu0 %v2019, 64
    %v2083 = vpop.permute.xlu0 %2082
    %2084 = vrot.lane.b32.xlu0 %v2021, 64
    %v2085 = vpop.permute.xlu0 %2084
    %2086 = vrot.lane.b32.xlu0 %v2023, 64
    %v2087 = vpop.permute.xlu0 %2086
    %2088 = vrot.lane.b32.xlu0 %v2025, 64
    %v2089 = vpop.permute.xlu0 %2088
    %2090 = vrot.lane.b32.xlu0 %v2027, 64
    %v2091 = vpop.permute.xlu0 %2090
    %2092 = vrot.lane.b32.xlu0 %v2029, 64
    %v2093 = vpop.permute.xlu0 %2092
    %2094 = vrot.lane.b32.xlu0 %v2031, 64
    %v2095 = vpop.permute.xlu0 %2094
    %2096 = vrot.lane.b32.xlu0 %v2033, 64
    %v2097 = vpop.permute.xlu0 %2096
    %2098 = vrot.lane.b32.xlu0 %v2035, 64
    %v2099 = vpop.permute.xlu0 %2098
    %2100 = vrot.lane.b32.xlu0 %v2037, 64
    %v2101 = vpop.permute.xlu0 %2100
    %2102 = vrot.lane.b32.xlu0 %v2039, 64
    %v2103 = vpop.permute.xlu0 %2102
    %2104 = vrot.lane.b32.xlu0 %v2041, 64
    %v2105 = vpop.permute.xlu0 %2104
    %v2106 = vsel %vm1236, %v2043, %v2075
    %v2107 = vsel %vm1236, %v2045, %v2077
    %v2108 = vsel %vm1236, %v2047, %v2079
    %v2109 = vsel %vm1236, %v2049, %v2081
    %v2110 = vsel %vm1236, %v2051, %v2083
    %v2111 = vsel %vm1236, %v2053, %v2085
    %v2112 = vsel %vm1236, %v2055, %v2087
    %v2113 = vsel %vm1236, %v2057, %v2089
    %v2114 = vsel %vm1236, %v2059, %v2091
    %v2115 = vsel %vm1236, %v2061, %v2093
    %v2116 = vsel %vm1236, %v2063, %v2095
    %v2117 = vsel %vm1236, %v2065, %v2097
    %v2118 = vsel %vm1236, %v2067, %v2099
    %v2119 = vsel %vm1236, %v2069, %v2101
    %v2120 = vsel %vm1236, %v2071, %v2103
    %v2121 = vsel %vm1236, %v2073, %v2105
    %v2122 = vsel %vm1269, %v2106, %v2011
    %v2123 = vsel %vm1270, %v2107, %v2013
    %v2124 = vsel %vm1271, %v2108, %v2015
    %v2125 = vsel %vm1272, %v2109, %v2017
    %v2126 = vsel %vm1273, %v2110, %v2019
    %v2127 = vsel %vm1274, %v2111, %v2021
    %v2128 = vsel %vm1275, %v2112, %v2023
    %v2129 = vsel %vm1276, %v2113, %v2025
    %v2130 = vsel %vm1277, %v2114, %v2027
    %v2131 = vsel %vm1278, %v2115, %v2029
    %v2132 = vsel %vm1279, %v2116, %v2031
    %v2133 = vsel %vm1280, %v2117, %v2033
    %v2134 = vsel %vm1281, %v2118, %v2035
    %v2135 = vsel %vm1282, %v2119, %v2037
    %v2136 = vsel %vm1283, %v2120, %v2039
    %v2137 = vsel %vm1284, %v2121, %v2041
    %s2138 = scalar_lea.vmem [#allocation2], 1
    %v2139 = vld [vmem:[%s2138] sm:$0x1]
    %v2140 = vpack.c.bf16 %v2123, %v2122
    %v2141 = vpack.c.bf16 %v2125, %v2124
    %v2142 = vpack.c.bf16 %v2127, %v2126
    %v2143 = vpack.c.bf16 %v2129, %v2128
    %v2144 = vpack.c.bf16 %v2131, %v2130
    %v2145 = vpack.c.bf16 %v2133, %v2132
    %v2146 = vpack.c.bf16 %v2135, %v2134
    %v2147 = vpack.c.bf16 %v2137, %v2136
    %2148 = vmatprep.subr.bf16.mxu0 0
    %2149 = vmatpush1.bf16.msra.mxu0 %v2140
    %2150 = vmatprep.subr.bf16.mxu0 0
    %2151 = vmatpush1.bf16.msra.mxu0 %v2141
    %2152 = vmatprep.subr.bf16.mxu0 0
    %2153 = vmatpush1.bf16.msra.mxu0 %v2142
    %2154 = vmatprep.subr.bf16.mxu0 0
    %2155 = vmatpush1.bf16.msra.mxu0 %v2143
    %2156 = vmatprep.subr.bf16.mxu0 0
    %2157 = vmatpush1.bf16.msra.mxu0 %v2144
    %2158 = vmatprep.subr.bf16.mxu0 0
    %2159 = vmatpush1.bf16.msra.mxu0 %v2145
    %2160 = vmatprep.subr.bf16.mxu0 0
    %2161 = vmatpush1.bf16.msra.mxu0 %v2146
    %2162 = vmatprep.subr.bf16.mxu0 0
    %2163 = vmatpush1.bf16.msra.mxu0 %v2147
    %2164 = vmatprep.subr.bf16.mxu0 0
    %2165 = vmatpush1.bf16.msra.mxu0 0
    %2166 = vmatprep.subr.bf16.mxu0 0
    %2167 = vmatpush1.bf16.msra.mxu0 0
    %2168 = vmatprep.subr.bf16.mxu0 0
    %2169 = vmatpush1.bf16.msra.mxu0 0
    %2170 = vmatprep.subr.bf16.mxu0 0
    %2171 = vmatpush1.bf16.msra.mxu0 0
    %2172 = vmatprep.subr.bf16.mxu0 0
    %2173 = vmatpush1.bf16.msra.mxu0 0
    %2174 = vmatprep.subr.bf16.mxu0 0
    %2175 = vmatpush1.bf16.msra.mxu0 0
    %2176 = vmatprep.subr.bf16.mxu0 0
    %2177 = vmatpush1.bf16.msra.mxu0 0
    %2178 = vmatprep.subr.bf16.mxu0 0
    %2179 = vmatpush1.bf16.msra.mxu0 0
    %2180 = vmatprep.mubr.bf16.mxu0 0
    %2181 = vmatmul.mubr.bf16.gmra.mrb[0].mxu0 %v2139
    %v2182 = vpop.f32.mrb[0].mxu0
    %v2183 = vadd.f32 0.0, %v2182
    %v2184 = vpop.f32.mrb[0].mxu0
    %v2185 = vpop.f32.mrb[0].mxu0
    %v2186 = vpop.f32.mrb[0].mxu0
    %2187 = vdwg.mxu0
    %s2188 = scalar_lea.vmem [#allocation7], 2
    %2189 = vst [vmem:[%s2188] sm:$0x3] %v2183
    %s2190 = scalar_lea.vmem [#allocation5], 4
    %v2191 = vld [vmem:[%s2190] sm:$0x3]
    %v2193 = vlaneseq
    %v2194 = vshrl.u32 %v2193, 7
    %v2195 = vsub.s32 0, %v2194
    %v2196 = vrot.slane %v2191, %v2195
    %v2197 = vlaneseq
    %v2198 = vshrl.u32 %v2197, 7
    %v2199 = vsub.s32 1, %v2198
    %v2200 = vrot.slane %v2191, %v2199
    %2203 = vrot.lane.b32.xlu0 %v2196, 1
    %v2204 = vpop.permute.xlu0 %2203
    %2205 = vrot.lane.b32.xlu0 %v2200, 1
    %v2206 = vpop.permute.xlu0 %2205
    %v2207 = vsel %vm300, %v2204, %v2206
    %v2208 = vsel %vm300, %v2206, %v2204
    %v2209 = vsel %vm319, %v2208, %v2196
    %v2210 = vsel %vm319, %v2207, %v2200
    %v2211 = vsel %vm320, %v2208, %v2196
    %v2212 = vsel %vm320, %v2207, %v2200
    %v2213 = vsel %vm321, %v2208, %v2196
    %v2214 = vsel %vm321, %v2207, %v2200
    %v2215 = vsel %vm322, %v2208, %v2196
    %v2216 = vsel %vm322, %v2207, %v2200
    %v2217 = vsel %vm323, %v2208, %v2196
    %v2218 = vsel %vm323, %v2207, %v2200
    %v2219 = vsel %vm324, %v2208, %v2196
    %v2220 = vsel %vm324, %v2207, %v2200
    %v2221 = vsel %vm325, %v2208, %v2196
    %v2222 = vsel %vm325, %v2207, %v2200
    %v2223 = vsel %vm326, %v2208, %v2196
    %v2224 = vsel %vm326, %v2207, %v2200
    %v2225 = vsel %vm327, %v2208, %v2196
    %v2226 = vsel %vm327, %v2207, %v2200
    %v2227 = vsel %vm328, %v2208, %v2196
    %v2228 = vsel %vm328, %v2207, %v2200
    %v2229 = vsel %vm329, %v2208, %v2196
    %v2230 = vsel %vm329, %v2207, %v2200
    %v2231 = vsel %vm330, %v2208, %v2196
    %v2232 = vsel %vm330, %v2207, %v2200
    %v2233 = vsel %vm331, %v2208, %v2196
    %v2234 = vsel %vm331, %v2207, %v2200
    %v2235 = vsel %vm332, %v2208, %v2196
    %v2236 = vsel %vm332, %v2207, %v2200
    %v2237 = vsel %vm333, %v2208, %v2196
    %v2238 = vsel %vm333, %v2207, %v2200
    %v2239 = vsel %vm334, %v2208, %v2196
    %v2240 = vsel %vm334, %v2207, %v2200
    %2241 = vrot.lane.b32.xlu0 %v2209, 2
    %v2242 = vpop.permute.xlu0 %2241
    %2243 = vrot.lane.b32.xlu0 %v2211, 2
    %v2244 = vpop.permute.xlu0 %2243
    %2245 = vrot.lane.b32.xlu0 %v2213, 2
    %v2246 = vpop.permute.xlu0 %2245
    %2247 = vrot.lane.b32.xlu0 %v2215, 2
    %v2248 = vpop.permute.xlu0 %2247
    %2249 = vrot.lane.b32.xlu0 %v2217, 2
    %v2250 = vpop.permute.xlu0 %2249
    %2251 = vrot.lane.b32.xlu0 %v2219, 2
    %v2252 = vpop.permute.xlu0 %2251
    %2253 = vrot.lane.b32.xlu0 %v2221, 2
    %v2254 = vpop.permute.xlu0 %2253
    %2255 = vrot.lane.b32.xlu0 %v2223, 2
    %v2256 = vpop.permute.xlu0 %2255
    %2257 = vrot.lane.b32.xlu0 %v2225, 2
    %v2258 = vpop.permute.xlu0 %2257
    %2259 = vrot.lane.b32.xlu0 %v2227, 2
    %v2260 = vpop.permute.xlu0 %2259
    %2261 = vrot.lane.b32.xlu0 %v2229, 2
    %v2262 = vpop.permute.xlu0 %2261
    %2263 = vrot.lane.b32.xlu0 %v2231, 2
    %v2264 = vpop.permute.xlu0 %2263
    %2265 = vrot.lane.b32.xlu0 %v2233, 2
    %v2266 = vpop.permute.xlu0 %2265
    %2267 = vrot.lane.b32.xlu0 %v2235, 2
    %v2268 = vpop.permute.xlu0 %2267
    %2269 = vrot.lane.b32.xlu0 %v2237, 2
    %v2270 = vpop.permute.xlu0 %2269
    %2271 = vrot.lane.b32.xlu0 %v2239, 2
    %v2272 = vpop.permute.xlu0 %2271
    %2273 = vrot.lane.b32.xlu0 %v2210, 2
    %v2274 = vpop.permute.xlu0 %2273
    %2275 = vrot.lane.b32.xlu0 %v2212, 2
    %v2276 = vpop.permute.xlu0 %2275
    %2277 = vrot.lane.b32.xlu0 %v2214, 2
    %v2278 = vpop.permute.xlu0 %2277
    %2279 = vrot.lane.b32.xlu0 %v2216, 2
    %v2280 = vpop.permute.xlu0 %2279
    %2281 = vrot.lane.b32.xlu0 %v2218, 2
    %v2282 = vpop.permute.xlu0 %2281
    %2283 = vrot.lane.b32.xlu0 %v2220, 2
    %v2284 = vpop.permute.xlu0 %2283
    %2285 = vrot.lane.b32.xlu0 %v2222, 2
    %v2286 = vpop.permute.xlu0 %2285
    %2287 = vrot.lane.b32.xlu0 %v2224, 2
    %v2288 = vpop.permute.xlu0 %2287
    %2289 = vrot.lane.b32.xlu0 %v2226, 2
    %v2290 = vpop.permute.xlu0 %2289
    %2291 = vrot.lane.b32.xlu0 %v2228, 2
    %v2292 = vpop.permute.xlu0 %2291
    %2293 = vrot.lane.b32.xlu0 %v2230, 2
    %v2294 = vpop.permute.xlu0 %2293
    %2295 = vrot.lane.b32.xlu0 %v2232, 2
    %v2296 = vpop.permute.xlu0 %2295
    %2297 = vrot.lane.b32.xlu0 %v2234, 2
    %v2298 = vpop.permute.xlu0 %2297
    %2299 = vrot.lane.b32.xlu0 %v2236, 2
    %v2300 = vpop.permute.xlu0 %2299
    %2301 = vrot.lane.b32.xlu0 %v2238, 2
    %v2302 = vpop.permute.xlu0 %2301
    %2303 = vrot.lane.b32.xlu0 %v2240, 2
    %v2304 = vpop.permute.xlu0 %2303
    %v2305 = vsel %vm431, %v2242, %v2274
    %v2306 = vsel %vm431, %v2244, %v2276
    %v2307 = vsel %vm431, %v2246, %v2278
    %v2308 = vsel %vm431, %v2248, %v2280
    %v2309 = vsel %vm431, %v2250, %v2282
    %v2310 = vsel %vm431, %v2252, %v2284
    %v2311 = vsel %vm431, %v2254, %v2286
    %v2312 = vsel %vm431, %v2256, %v2288
    %v2313 = vsel %vm431, %v2258, %v2290
    %v2314 = vsel %vm431, %v2260, %v2292
    %v2315 = vsel %vm431, %v2262, %v2294
    %v2316 = vsel %vm431, %v2264, %v2296
    %v2317 = vsel %vm431, %v2266, %v2298
    %v2318 = vsel %vm431, %v2268, %v2300
    %v2319 = vsel %vm431, %v2270, %v2302
    %v2320 = vsel %vm431, %v2272, %v2304
    %v2321 = vsel %vm431, %v2274, %v2242
    %v2322 = vsel %vm431, %v2276, %v2244
    %v2323 = vsel %vm431, %v2278, %v2246
    %v2324 = vsel %vm431, %v2280, %v2248
    %v2325 = vsel %vm431, %v2282, %v2250
    %v2326 = vsel %vm431, %v2284, %v2252
    %v2327 = vsel %vm431, %v2286, %v2254
    %v2328 = vsel %vm431, %v2288, %v2256
    %v2329 = vsel %vm431, %v2290, %v2258
    %v2330 = vsel %vm431, %v2292, %v2260
    %v2331 = vsel %vm431, %v2294, %v2262
    %v2332 = vsel %vm431, %v2296, %v2264
    %v2333 = vsel %vm431, %v2298, %v2266
    %v2334 = vsel %vm431, %v2300, %v2268
    %v2335 = vsel %vm431, %v2302, %v2270
    %v2336 = vsel %vm431, %v2304, %v2272
    %v2337 = vsel %vm480, %v2321, %v2209
    %v2338 = vsel %vm480, %v2305, %v2210
    %v2339 = vsel %vm481, %v2322, %v2211
    %v2340 = vsel %vm481, %v2306, %v2212
    %v2341 = vsel %vm482, %v2323, %v2213
    %v2342 = vsel %vm482, %v2307, %v2214
    %v2343 = vsel %vm483, %v2324, %v2215
    %v2344 = vsel %vm483, %v2308, %v2216
    %v2345 = vsel %vm484, %v2325, %v2217
    %v2346 = vsel %vm484, %v2309, %v2218
    %v2347 = vsel %vm485, %v2326, %v2219
    %v2348 = vsel %vm485, %v2310, %v2220
    %v2349 = vsel %vm486, %v2327, %v2221
    %v2350 = vsel %vm486, %v2311, %v2222
    %v2351 = vsel %vm487, %v2328, %v2223
    %v2352 = vsel %vm487, %v2312, %v2224
    %v2353 = vsel %vm488, %v2329, %v2225
    %v2354 = vsel %vm488, %v2313, %v2226
    %v2355 = vsel %vm489, %v2330, %v2227
    %v2356 = vsel %vm489, %v2314, %v2228
    %v2357 = vsel %vm490, %v2331, %v2229
    %v2358 = vsel %vm490, %v2315, %v2230
    %v2359 = vsel %vm491, %v2332, %v2231
    %v2360 = vsel %vm491, %v2316, %v2232
    %v2361 = vsel %vm492, %v2333, %v2233
    %v2362 = vsel %vm492, %v2317, %v2234
    %v2363 = vsel %vm493, %v2334, %v2235
    %v2364 = vsel %vm493, %v2318, %v2236
    %v2365 = vsel %vm494, %v2335, %v2237
    %v2366 = vsel %vm494, %v2319, %v2238
    %v2367 = vsel %vm495, %v2336, %v2239
    %v2368 = vsel %vm495, %v2320, %v2240
    %2369 = vrot.lane.b32.xlu0 %v2337, 4
    %v2370 = vpop.permute.xlu0 %2369
    %2371 = vrot.lane.b32.xlu0 %v2339, 4
    %v2372 = vpop.permute.xlu0 %2371
    %2373 = vrot.lane.b32.xlu0 %v2341, 4
    %v2374 = vpop.permute.xlu0 %2373
    %2375 = vrot.lane.b32.xlu0 %v2343, 4
    %v2376 = vpop.permute.xlu0 %2375
    %2377 = vrot.lane.b32.xlu0 %v2345, 4
    %v2378 = vpop.permute.xlu0 %2377
    %2379 = vrot.lane.b32.xlu0 %v2347, 4
    %v2380 = vpop.permute.xlu0 %2379
    %2381 = vrot.lane.b32.xlu0 %v2349, 4
    %v2382 = vpop.permute.xlu0 %2381
    %2383 = vrot.lane.b32.xlu0 %v2351, 4
    %v2384 = vpop.permute.xlu0 %2383
    %2385 = vrot.lane.b32.xlu0 %v2353, 4
    %v2386 = vpop.permute.xlu0 %2385
    %2387 = vrot.lane.b32.xlu0 %v2355, 4
    %v2388 = vpop.permute.xlu0 %2387
    %2389 = vrot.lane.b32.xlu0 %v2357, 4
    %v2390 = vpop.permute.xlu0 %2389
    %2391 = vrot.lane.b32.xlu0 %v2359, 4
    %v2392 = vpop.permute.xlu0 %2391
    %2393 = vrot.lane.b32.xlu0 %v2361, 4
    %v2394 = vpop.permute.xlu0 %2393
    %2395 = vrot.lane.b32.xlu0 %v2363, 4
    %v2396 = vpop.permute.xlu0 %2395
    %2397 = vrot.lane.b32.xlu0 %v2365, 4
    %v2398 = vpop.permute.xlu0 %2397
    %2399 = vrot.lane.b32.xlu0 %v2367, 4
    %v2400 = vpop.permute.xlu0 %2399
    %2401 = vrot.lane.b32.xlu0 %v2338, 4
    %v2402 = vpop.permute.xlu0 %2401
    %2403 = vrot.lane.b32.xlu0 %v2340, 4
    %v2404 = vpop.permute.xlu0 %2403
    %2405 = vrot.lane.b32.xlu0 %v2342, 4
    %v2406 = vpop.permute.xlu0 %2405
    %2407 = vrot.lane.b32.xlu0 %v2344, 4
    %v2408 = vpop.permute.xlu0 %2407
    %2409 = vrot.lane.b32.xlu0 %v2346, 4
    %v2410 = vpop.permute.xlu0 %2409
    %2411 = vrot.lane.b32.xlu0 %v2348, 4
    %v2412 = vpop.permute.xlu0 %2411
    %2413 = vrot.lane.b32.xlu0 %v2350, 4
    %v2414 = vpop.permute.xlu0 %2413
    %2415 = vrot.lane.b32.xlu0 %v2352, 4
    %v2416 = vpop.permute.xlu0 %2415
    %2417 = vrot.lane.b32.xlu0 %v2354, 4
    %v2418 = vpop.permute.xlu0 %2417
    %2419 = vrot.lane.b32.xlu0 %v2356, 4
    %v2420 = vpop.permute.xlu0 %2419
    %2421 = vrot.lane.b32.xlu0 %v2358, 4
    %v2422 = vpop.permute.xlu0 %2421
    %2423 = vrot.lane.b32.xlu0 %v2360, 4
    %v2424 = vpop.permute.xlu0 %2423
    %2425 = vrot.lane.b32.xlu0 %v2362, 4
    %v2426 = vpop.permute.xlu0 %2425
    %2427 = vrot.lane.b32.xlu0 %v2364, 4
    %v2428 = vpop.permute.xlu0 %2427
    %2429 = vrot.lane.b32.xlu0 %v2366, 4
    %v2430 = vpop.permute.xlu0 %2429
    %2431 = vrot.lane.b32.xlu0 %v2368, 4
    %v2432 = vpop.permute.xlu0 %2431
    %v2433 = vsel %vm592, %v2370, %v2402
    %v2434 = vsel %vm592, %v2372, %v2404
    %v2435 = vsel %vm592, %v2374, %v2406
    %v2436 = vsel %vm592, %v2376, %v2408
    %v2437 = vsel %vm592, %v2378, %v2410
    %v2438 = vsel %vm592, %v2380, %v2412
    %v2439 = vsel %vm592, %v2382, %v2414
    %v2440 = vsel %vm592, %v2384, %v2416
    %v2441 = vsel %vm592, %v2386, %v2418
    %v2442 = vsel %vm592, %v2388, %v2420
    %v2443 = vsel %vm592, %v2390, %v2422
    %v2444 = vsel %vm592, %v2392, %v2424
    %v2445 = vsel %vm592, %v2394, %v2426
    %v2446 = vsel %vm592, %v2396, %v2428
    %v2447 = vsel %vm592, %v2398, %v2430
    %v2448 = vsel %vm592, %v2400, %v2432
    %v2449 = vsel %vm592, %v2402, %v2370
    %v2450 = vsel %vm592, %v2404, %v2372
    %v2451 = vsel %vm592, %v2406, %v2374
    %v2452 = vsel %vm592, %v2408, %v2376
    %v2453 = vsel %vm592, %v2410, %v2378
    %v2454 = vsel %vm592, %v2412, %v2380
    %v2455 = vsel %vm592, %v2414, %v2382
    %v2456 = vsel %vm592, %v2416, %v2384
    %v2457 = vsel %vm592, %v2418, %v2386
    %v2458 = vsel %vm592, %v2420, %v2388
    %v2459 = vsel %vm592, %v2422, %v2390
    %v2460 = vsel %vm592, %v2424, %v2392
    %v2461 = vsel %vm592, %v2426, %v2394
    %v2462 = vsel %vm592, %v2428, %v2396
    %v2463 = vsel %vm592, %v2430, %v2398
    %v2464 = vsel %vm592, %v2432, %v2400
    %v2465 = vsel %vm641, %v2449, %v2337
    %v2466 = vsel %vm641, %v2433, %v2338
    %v2467 = vsel %vm642, %v2450, %v2339
    %v2468 = vsel %vm642, %v2434, %v2340
    %v2469 = vsel %vm643, %v2451, %v2341
    %v2470 = vsel %vm643, %v2435, %v2342
    %v2471 = vsel %vm644, %v2452, %v2343
    %v2472 = vsel %vm644, %v2436, %v2344
    %v2473 = vsel %vm645, %v2453, %v2345
    %v2474 = vsel %vm645, %v2437, %v2346
    %v2475 = vsel %vm646, %v2454, %v2347
    %v2476 = vsel %vm646, %v2438, %v2348
    %v2477 = vsel %vm647, %v2455, %v2349
    %v2478 = vsel %vm647, %v2439, %v2350
    %v2479 = vsel %vm648, %v2456, %v2351
    %v2480 = vsel %vm648, %v2440, %v2352
    %v2481 = vsel %vm649, %v2457, %v2353
    %v2482 = vsel %vm649, %v2441, %v2354
    %v2483 = vsel %vm650, %v2458, %v2355
    %v2484 = vsel %vm650, %v2442, %v2356
    %v2485 = vsel %vm651, %v2459, %v2357
    %v2486 = vsel %vm651, %v2443, %v2358
    %v2487 = vsel %vm652, %v2460, %v2359
    %v2488 = vsel %vm652, %v2444, %v2360
    %v2489 = vsel %vm653, %v2461, %v2361
    %v2490 = vsel %vm653, %v2445, %v2362
    %v2491 = vsel %vm654, %v2462, %v2363
    %v2492 = vsel %vm654, %v2446, %v2364
    %v2493 = vsel %vm655, %v2463, %v2365
    %v2494 = vsel %vm655, %v2447, %v2366
    %v2495 = vsel %vm656, %v2464, %v2367
    %v2496 = vsel %vm656, %v2448, %v2368
    %2497 = vrot.lane.b32.xlu0 %v2465, 8
    %v2498 = vpop.permute.xlu0 %2497
    %2499 = vrot.lane.b32.xlu0 %v2467, 8
    %v2500 = vpop.permute.xlu0 %2499
    %2501 = vrot.lane.b32.xlu0 %v2469, 8
    %v2502 = vpop.permute.xlu0 %2501
    %2503 = vrot.lane.b32.xlu0 %v2471, 8
    %v2504 = vpop.permute.xlu0 %2503
    %2505 = vrot.lane.b32.xlu0 %v2473, 8
    %v2506 = vpop.permute.xlu0 %2505
    %2507 = vrot.lane.b32.xlu0 %v2475, 8
    %v2508 = vpop.permute.xlu0 %2507
    %2509 = vrot.lane.b32.xlu0 %v2477, 8
    %v2510 = vpop.permute.xlu0 %2509
    %2511 = vrot.lane.b32.xlu0 %v2479, 8
    %v2512 = vpop.permute.xlu0 %2511
    %2513 = vrot.lane.b32.xlu0 %v2481, 8
    %v2514 = vpop.permute.xlu0 %2513
    %2515 = vrot.lane.b32.xlu0 %v2483, 8
    %v2516 = vpop.permute.xlu0 %2515
    %2517 = vrot.lane.b32.xlu0 %v2485, 8
    %v2518 = vpop.permute.xlu0 %2517
    %2519 = vrot.lane.b32.xlu0 %v2487, 8
    %v2520 = vpop.permute.xlu0 %2519
    %2521 = vrot.lane.b32.xlu0 %v2489, 8
    %v2522 = vpop.permute.xlu0 %2521
    %2523 = vrot.lane.b32.xlu0 %v2491, 8
    %v2524 = vpop.permute.xlu0 %2523
    %2525 = vrot.lane.b32.xlu0 %v2493, 8
    %v2526 = vpop.permute.xlu0 %2525
    %2527 = vrot.lane.b32.xlu0 %v2495, 8
    %v2528 = vpop.permute.xlu0 %2527
    %2529 = vrot.lane.b32.xlu0 %v2466, 8
    %v2530 = vpop.permute.xlu0 %2529
    %2531 = vrot.lane.b32.xlu0 %v2468, 8
    %v2532 = vpop.permute.xlu0 %2531
    %2533 = vrot.lane.b32.xlu0 %v2470, 8
    %v2534 = vpop.permute.xlu0 %2533
    %2535 = vrot.lane.b32.xlu0 %v2472, 8
    %v2536 = vpop.permute.xlu0 %2535
    %2537 = vrot.lane.b32.xlu0 %v2474, 8
    %v2538 = vpop.permute.xlu0 %2537
    %2539 = vrot.lane.b32.xlu0 %v2476, 8
    %v2540 = vpop.permute.xlu0 %2539
    %2541 = vrot.lane.b32.xlu0 %v2478, 8
    %v2542 = vpop.permute.xlu0 %2541
    %2543 = vrot.lane.b32.xlu0 %v2480, 8
    %v2544 = vpop.permute.xlu0 %2543
    %2545 = vrot.lane.b32.xlu0 %v2482, 8
    %v2546 = vpop.permute.xlu0 %2545
    %2547 = vrot.lane.b32.xlu0 %v2484, 8
    %v2548 = vpop.permute.xlu0 %2547
    %2549 = vrot.lane.b32.xlu0 %v2486, 8
    %v2550 = vpop.permute.xlu0 %2549
    %2551 = vrot.lane.b32.xlu0 %v2488, 8
    %v2552 = vpop.permute.xlu0 %2551
    %2553 = vrot.lane.b32.xlu0 %v2490, 8
    %v2554 = vpop.permute.xlu0 %2553
    %2555 = vrot.lane.b32.xlu0 %v2492, 8
    %v2556 = vpop.permute.xlu0 %2555
    %2557 = vrot.lane.b32.xlu0 %v2494, 8
    %v2558 = vpop.permute.xlu0 %2557
    %2559 = vrot.lane.b32.xlu0 %v2496, 8
    %v2560 = vpop.permute.xlu0 %2559
    %v2561 = vsel %vm753, %v2498, %v2530
    %v2562 = vsel %vm753, %v2500, %v2532
    %v2563 = vsel %vm753, %v2502, %v2534
    %v2564 = vsel %vm753, %v2504, %v2536
    %v2565 = vsel %vm753, %v2506, %v2538
    %v2566 = vsel %vm753, %v2508, %v2540
    %v2567 = vsel %vm753, %v2510, %v2542
    %v2568 = vsel %vm753, %v2512, %v2544
    %v2569 = vsel %vm753, %v2514, %v2546
    %v2570 = vsel %vm753, %v2516, %v2548
    %v2571 = vsel %vm753, %v2518, %v2550
    %v2572 = vsel %vm753, %v2520, %v2552
    %v2573 = vsel %vm753, %v2522, %v2554
    %v2574 = vsel %vm753, %v2524, %v2556
    %v2575 = vsel %vm753, %v2526, %v2558
    %v2576 = vsel %vm753, %v2528, %v2560
    %v2577 = vsel %vm753, %v2530, %v2498
    %v2578 = vsel %vm753, %v2532, %v2500
    %v2579 = vsel %vm753, %v2534, %v2502
    %v2580 = vsel %vm753, %v2536, %v2504
    %v2581 = vsel %vm753, %v2538, %v2506
    %v2582 = vsel %vm753, %v2540, %v2508
    %v2583 = vsel %vm753, %v2542, %v2510
    %v2584 = vsel %vm753, %v2544, %v2512
    %v2585 = vsel %vm753, %v2546, %v2514
    %v2586 = vsel %vm753, %v2548, %v2516
    %v2587 = vsel %vm753, %v2550, %v2518
    %v2588 = vsel %vm753, %v2552, %v2520
    %v2589 = vsel %vm753, %v2554, %v2522
    %v2590 = vsel %vm753, %v2556, %v2524
    %v2591 = vsel %vm753, %v2558, %v2526
    %v2592 = vsel %vm753, %v2560, %v2528
    %v2593 = vsel %vm802, %v2577, %v2465
    %v2594 = vsel %vm802, %v2561, %v2466
    %v2595 = vsel %vm803, %v2578, %v2467
    %v2596 = vsel %vm803, %v2562, %v2468
    %v2597 = vsel %vm804, %v2579, %v2469
    %v2598 = vsel %vm804, %v2563, %v2470
    %v2599 = vsel %vm805, %v2580, %v2471
    %v2600 = vsel %vm805, %v2564, %v2472
    %v2601 = vsel %vm806, %v2581, %v2473
    %v2602 = vsel %vm806, %v2565, %v2474
    %v2603 = vsel %vm807, %v2582, %v2475
    %v2604 = vsel %vm807, %v2566, %v2476
    %v2605 = vsel %vm808, %v2583, %v2477
    %v2606 = vsel %vm808, %v2567, %v2478
    %v2607 = vsel %vm809, %v2584, %v2479
    %v2608 = vsel %vm809, %v2568, %v2480
    %v2609 = vsel %vm810, %v2585, %v2481
    %v2610 = vsel %vm810, %v2569, %v2482
    %v2611 = vsel %vm811, %v2586, %v2483
    %v2612 = vsel %vm811, %v2570, %v2484
    %v2613 = vsel %vm812, %v2587, %v2485
    %v2614 = vsel %vm812, %v2571, %v2486
    %v2615 = vsel %vm813, %v2588, %v2487
    %v2616 = vsel %vm813, %v2572, %v2488
    %v2617 = vsel %vm814, %v2589, %v2489
    %v2618 = vsel %vm814, %v2573, %v2490
    %v2619 = vsel %vm815, %v2590, %v2491
    %v2620 = vsel %vm815, %v2574, %v2492
    %v2621 = vsel %vm816, %v2591, %v2493
    %v2622 = vsel %vm816, %v2575, %v2494
    %v2623 = vsel %vm817, %v2592, %v2495
    %v2624 = vsel %vm817, %v2576, %v2496
    %2625 = vrot.lane.b32.xlu0 %v2593, 16
    %v2626 = vpop.permute.xlu0 %2625
    %2627 = vrot.lane.b32.xlu0 %v2595, 16
    %v2628 = vpop.permute.xlu0 %2627
    %2629 = vrot.lane.b32.xlu0 %v2597, 16
    %v2630 = vpop.permute.xlu0 %2629
    %2631 = vrot.lane.b32.xlu0 %v2599, 16
    %v2632 = vpop.permute.xlu0 %2631
    %2633 = vrot.lane.b32.xlu0 %v2601, 16
    %v2634 = vpop.permute.xlu0 %2633
    %2635 = vrot.lane.b32.xlu0 %v2603, 16
    %v2636 = vpop.permute.xlu0 %2635
    %2637 = vrot.lane.b32.xlu0 %v2605, 16
    %v2638 = vpop.permute.xlu0 %2637
    %2639 = vrot.lane.b32.xlu0 %v2607, 16
    %v2640 = vpop.permute.xlu0 %2639
    %2641 = vrot.lane.b32.xlu0 %v2609, 16
    %v2642 = vpop.permute.xlu0 %2641
    %2643 = vrot.lane.b32.xlu0 %v2611, 16
    %v2644 = vpop.permute.xlu0 %2643
    %2645 = vrot.lane.b32.xlu0 %v2613, 16
    %v2646 = vpop.permute.xlu0 %2645
    %2647 = vrot.lane.b32.xlu0 %v2615, 16
    %v2648 = vpop.permute.xlu0 %2647
    %2649 = vrot.lane.b32.xlu0 %v2617, 16
    %v2650 = vpop.permute.xlu0 %2649
    %2651 = vrot.lane.b32.xlu0 %v2619, 16
    %v2652 = vpop.permute.xlu0 %2651
    %2653 = vrot.lane.b32.xlu0 %v2621, 16
    %v2654 = vpop.permute.xlu0 %2653
    %2655 = vrot.lane.b32.xlu0 %v2623, 16
    %v2656 = vpop.permute.xlu0 %2655
    %2657 = vrot.lane.b32.xlu0 %v2594, 16
    %v2658 = vpop.permute.xlu0 %2657
    %2659 = vrot.lane.b32.xlu0 %v2596, 16
    %v2660 = vpop.permute.xlu0 %2659
    %2661 = vrot.lane.b32.xlu0 %v2598, 16
    %v2662 = vpop.permute.xlu0 %2661
    %2663 = vrot.lane.b32.xlu0 %v2600, 16
    %v2664 = vpop.permute.xlu0 %2663
    %2665 = vrot.lane.b32.xlu0 %v2602, 16
    %v2666 = vpop.permute.xlu0 %2665
    %2667 = vrot.lane.b32.xlu0 %v2604, 16
    %v2668 = vpop.permute.xlu0 %2667
    %2669 = vrot.lane.b32.xlu0 %v2606, 16
    %v2670 = vpop.permute.xlu0 %2669
    %2671 = vrot.lane.b32.xlu0 %v2608, 16
    %v2672 = vpop.permute.xlu0 %2671
    %2673 = vrot.lane.b32.xlu0 %v2610, 16
    %v2674 = vpop.permute.xlu0 %2673
    %2675 = vrot.lane.b32.xlu0 %v2612, 16
    %v2676 = vpop.permute.xlu0 %2675
    %2677 = vrot.lane.b32.xlu0 %v2614, 16
    %v2678 = vpop.permute.xlu0 %2677
    %2679 = vrot.lane.b32.xlu0 %v2616, 16
    %v2680 = vpop.permute.xlu0 %2679
    %2681 = vrot.lane.b32.xlu0 %v2618, 16
    %v2682 = vpop.permute.xlu0 %2681
    %2683 = vrot.lane.b32.xlu0 %v2620, 16
    %v2684 = vpop.permute.xlu0 %2683
    %2685 = vrot.lane.b32.xlu0 %v2622, 16
    %v2686 = vpop.permute.xlu0 %2685
    %2687 = vrot.lane.b32.xlu0 %v2624, 16
    %v2688 = vpop.permute.xlu0 %2687
    %v2689 = vsel %vm914, %v2626, %v2658
    %v2690 = vsel %vm914, %v2628, %v2660
    %v2691 = vsel %vm914, %v2630, %v2662
    %v2692 = vsel %vm914, %v2632, %v2664
    %v2693 = vsel %vm914, %v2634, %v2666
    %v2694 = vsel %vm914, %v2636, %v2668
    %v2695 = vsel %vm914, %v2638, %v2670
    %v2696 = vsel %vm914, %v2640, %v2672
    %v2697 = vsel %vm914, %v2642, %v2674
    %v2698 = vsel %vm914, %v2644, %v2676
    %v2699 = vsel %vm914, %v2646, %v2678
    %v2700 = vsel %vm914, %v2648, %v2680
    %v2701 = vsel %vm914, %v2650, %v2682
    %v2702 = vsel %vm914, %v2652, %v2684
    %v2703 = vsel %vm914, %v2654, %v2686
    %v2704 = vsel %vm914, %v2656, %v2688
    %v2705 = vsel %vm914, %v2658, %v2626
    %v2706 = vsel %vm914, %v2660, %v2628
    %v2707 = vsel %vm914, %v2662, %v2630
    %v2708 = vsel %vm914, %v2664, %v2632
    %v2709 = vsel %vm914, %v2666, %v2634
    %v2710 = vsel %vm914, %v2668, %v2636
    %v2711 = vsel %vm914, %v2670, %v2638
    %v2712 = vsel %vm914, %v2672, %v2640
    %v2713 = vsel %vm914, %v2674, %v2642
    %v2714 = vsel %vm914, %v2676, %v2644
    %v2715 = vsel %vm914, %v2678, %v2646
    %v2716 = vsel %vm914, %v2680, %v2648
    %v2717 = vsel %vm914, %v2682, %v2650
    %v2718 = vsel %vm914, %v2684, %v2652
    %v2719 = vsel %vm914, %v2686, %v2654
    %v2720 = vsel %vm914, %v2688, %v2656
    %v2721 = vsel %vm963, %v2705, %v2593
    %v2722 = vsel %vm963, %v2689, %v2594
    %v2723 = vsel %vm964, %v2706, %v2595
    %v2724 = vsel %vm964, %v2690, %v2596
    %v2725 = vsel %vm965, %v2707, %v2597
    %v2726 = vsel %vm965, %v2691, %v2598
    %v2727 = vsel %vm966, %v2708, %v2599
    %v2728 = vsel %vm966, %v2692, %v2600
    %v2729 = vsel %vm967, %v2709, %v2601
    %v2730 = vsel %vm967, %v2693, %v2602
    %v2731 = vsel %vm968, %v2710, %v2603
    %v2732 = vsel %vm968, %v2694, %v2604
    %v2733 = vsel %vm969, %v2711, %v2605
    %v2734 = vsel %vm969, %v2695, %v2606
    %v2735 = vsel %vm970, %v2712, %v2607
    %v2736 = vsel %vm970, %v2696, %v2608
    %v2737 = vsel %vm971, %v2713, %v2609
    %v2738 = vsel %vm971, %v2697, %v2610
    %v2739 = vsel %vm972, %v2714, %v2611
    %v2740 = vsel %vm972, %v2698, %v2612
    %v2741 = vsel %vm973, %v2715, %v2613
    %v2742 = vsel %vm973, %v2699, %v2614
    %v2743 = vsel %vm974, %v2716, %v2615
    %v2744 = vsel %vm974, %v2700, %v2616
    %v2745 = vsel %vm975, %v2717, %v2617
    %v2746 = vsel %vm975, %v2701, %v2618
    %v2747 = vsel %vm976, %v2718, %v2619
    %v2748 = vsel %vm976, %v2702, %v2620
    %v2749 = vsel %vm977, %v2719, %v2621
    %v2750 = vsel %vm977, %v2703, %v2622
    %v2751 = vsel %vm978, %v2720, %v2623
    %v2752 = vsel %vm978, %v2704, %v2624
    %2753 = vrot.lane.b32.xlu0 %v2721, 32
    %v2754 = vpop.permute.xlu0 %2753
    %2755 = vrot.lane.b32.xlu0 %v2723, 32
    %v2756 = vpop.permute.xlu0 %2755
    %2757 = vrot.lane.b32.xlu0 %v2725, 32
    %v2758 = vpop.permute.xlu0 %2757
    %2759 = vrot.lane.b32.xlu0 %v2727, 32
    %v2760 = vpop.permute.xlu0 %2759
    %2761 = vrot.lane.b32.xlu0 %v2729, 32
    %v2762 = vpop.permute.xlu0 %2761
    %2763 = vrot.lane.b32.xlu0 %v2731, 32
    %v2764 = vpop.permute.xlu0 %2763
    %2765 = vrot.lane.b32.xlu0 %v2733, 32
    %v2766 = vpop.permute.xlu0 %2765
    %2767 = vrot.lane.b32.xlu0 %v2735, 32
    %v2768 = vpop.permute.xlu0 %2767
    %2769 = vrot.lane.b32.xlu0 %v2737, 32
    %v2770 = vpop.permute.xlu0 %2769
    %2771 = vrot.lane.b32.xlu0 %v2739, 32
    %v2772 = vpop.permute.xlu0 %2771
    %2773 = vrot.lane.b32.xlu0 %v2741, 32
    %v2774 = vpop.permute.xlu0 %2773
    %2775 = vrot.lane.b32.xlu0 %v2743, 32
    %v2776 = vpop.permute.xlu0 %2775
    %2777 = vrot.lane.b32.xlu0 %v2745, 32
    %v2778 = vpop.permute.xlu0 %2777
    %2779 = vrot.lane.b32.xlu0 %v2747, 32
    %v2780 = vpop.permute.xlu0 %2779
    %2781 = vrot.lane.b32.xlu0 %v2749, 32
    %v2782 = vpop.permute.xlu0 %2781
    %2783 = vrot.lane.b32.xlu0 %v2751, 32
    %v2784 = vpop.permute.xlu0 %2783
    %2785 = vrot.lane.b32.xlu0 %v2722, 32
    %v2786 = vpop.permute.xlu0 %2785
    %2787 = vrot.lane.b32.xlu0 %v2724, 32
    %v2788 = vpop.permute.xlu0 %2787
    %2789 = vrot.lane.b32.xlu0 %v2726, 32
    %v2790 = vpop.permute.xlu0 %2789
    %2791 = vrot.lane.b32.xlu0 %v2728, 32
    %v2792 = vpop.permute.xlu0 %2791
    %2793 = vrot.lane.b32.xlu0 %v2730, 32
    %v2794 = vpop.permute.xlu0 %2793
    %2795 = vrot.lane.b32.xlu0 %v2732, 32
    %v2796 = vpop.permute.xlu0 %2795
    %2797 = vrot.lane.b32.xlu0 %v2734, 32
    %v2798 = vpop.permute.xlu0 %2797
    %2799 = vrot.lane.b32.xlu0 %v2736, 32
    %v2800 = vpop.permute.xlu0 %2799
    %2801 = vrot.lane.b32.xlu0 %v2738, 32
    %v2802 = vpop.permute.xlu0 %2801
    %2803 = vrot.lane.b32.xlu0 %v2740, 32
    %v2804 = vpop.permute.xlu0 %2803
    %2805 = vrot.lane.b32.xlu0 %v2742, 32
    %v2806 = vpop.permute.xlu0 %2805
    %2807 = vrot.lane.b32.xlu0 %v2744, 32
    %v2808 = vpop.permute.xlu0 %2807
    %2809 = vrot.lane.b32.xlu0 %v2746, 32
    %v2810 = vpop.permute.xlu0 %2809
    %2811 = vrot.lane.b32.xlu0 %v2748, 32
    %v2812 = vpop.permute.xlu0 %2811
    %2813 = vrot.lane.b32.xlu0 %v2750, 32
    %v2814 = vpop.permute.xlu0 %2813
    %2815 = vrot.lane.b32.xlu0 %v2752, 32
    %v2816 = vpop.permute.xlu0 %2815
    %v2817 = vsel %vm1075, %v2754, %v2786
    %v2818 = vsel %vm1075, %v2756, %v2788
    %v2819 = vsel %vm1075, %v2758, %v2790
    %v2820 = vsel %vm1075, %v2760, %v2792
    %v2821 = vsel %vm1075, %v2762, %v2794
    %v2822 = vsel %vm1075, %v2764, %v2796
    %v2823 = vsel %vm1075, %v2766, %v2798
    %v2824 = vsel %vm1075, %v2768, %v2800
    %v2825 = vsel %vm1075, %v2770, %v2802
    %v2826 = vsel %vm1075, %v2772, %v2804
    %v2827 = vsel %vm1075, %v2774, %v2806
    %v2828 = vsel %vm1075, %v2776, %v2808
    %v2829 = vsel %vm1075, %v2778, %v2810
    %v2830 = vsel %vm1075, %v2780, %v2812
    %v2831 = vsel %vm1075, %v2782, %v2814
    %v2832 = vsel %vm1075, %v2784, %v2816
    %v2833 = vsel %vm1075, %v2786, %v2754
    %v2834 = vsel %vm1075, %v2788, %v2756
    %v2835 = vsel %vm1075, %v2790, %v2758
    %v2836 = vsel %vm1075, %v2792, %v2760
    %v2837 = vsel %vm1075, %v2794, %v2762
    %v2838 = vsel %vm1075, %v2796, %v2764
    %v2839 = vsel %vm1075, %v2798, %v2766
    %v2840 = vsel %vm1075, %v2800, %v2768
    %v2841 = vsel %vm1075, %v2802, %v2770
    %v2842 = vsel %vm1075, %v2804, %v2772
    %v2843 = vsel %vm1075, %v2806, %v2774
    %v2844 = vsel %vm1075, %v2808, %v2776
    %v2845 = vsel %vm1075, %v2810, %v2778
    %v2846 = vsel %vm1075, %v2812, %v2780
    %v2847 = vsel %vm1075, %v2814, %v2782
    %v2848 = vsel %vm1075, %v2816, %v2784
    %v2849 = vsel %vm1124, %v2833, %v2721
    %v2850 = vsel %vm1124, %v2817, %v2722
    %v2851 = vsel %vm1125, %v2834, %v2723
    %v2852 = vsel %vm1125, %v2818, %v2724
    %v2853 = vsel %vm1126, %v2835, %v2725
    %v2854 = vsel %vm1126, %v2819, %v2726
    %v2855 = vsel %vm1127, %v2836, %v2727
    %v2856 = vsel %vm1127, %v2820, %v2728
    %v2857 = vsel %vm1128, %v2837, %v2729
    %v2858 = vsel %vm1128, %v2821, %v2730
    %v2859 = vsel %vm1129, %v2838, %v2731
    %v2860 = vsel %vm1129, %v2822, %v2732
    %v2861 = vsel %vm1130, %v2839, %v2733
    %v2862 = vsel %vm1130, %v2823, %v2734
    %v2863 = vsel %vm1131, %v2840, %v2735
    %v2864 = vsel %vm1131, %v2824, %v2736
    %v2865 = vsel %vm1132, %v2841, %v2737
    %v2866 = vsel %vm1132, %v2825, %v2738
    %v2867 = vsel %vm1133, %v2842, %v2739
    %v2868 = vsel %vm1133, %v2826, %v2740
    %v2869 = vsel %vm1134, %v2843, %v2741
    %v2870 = vsel %vm1134, %v2827, %v2742
    %v2871 = vsel %vm1135, %v2844, %v2743
    %v2872 = vsel %vm1135, %v2828, %v2744
    %v2873 = vsel %vm1136, %v2845, %v2745
    %v2874 = vsel %vm1136, %v2829, %v2746
    %v2875 = vsel %vm1137, %v2846, %v2747
    %v2876 = vsel %vm1137, %v2830, %v2748
    %v2877 = vsel %vm1138, %v2847, %v2749
    %v2878 = vsel %vm1138, %v2831, %v2750
    %v2879 = vsel %vm1139, %v2848, %v2751
    %v2880 = vsel %vm1139, %v2832, %v2752
    %2881 = vrot.lane.b32.xlu0 %v2849, 64
    %v2882 = vpop.permute.xlu0 %2881
    %2883 = vrot.lane.b32.xlu0 %v2851, 64
    %v2884 = vpop.permute.xlu0 %2883
    %2885 = vrot.lane.b32.xlu0 %v2853, 64
    %v2886 = vpop.permute.xlu0 %2885
    %2887 = vrot.lane.b32.xlu0 %v2855, 64
    %v2888 = vpop.permute.xlu0 %2887
    %2889 = vrot.lane.b32.xlu0 %v2857, 64
    %v2890 = vpop.permute.xlu0 %2889
    %2891 = vrot.lane.b32.xlu0 %v2859, 64
    %v2892 = vpop.permute.xlu0 %2891
    %2893 = vrot.lane.b32.xlu0 %v2861, 64
    %v2894 = vpop.permute.xlu0 %2893
    %2895 = vrot.lane.b32.xlu0 %v2863, 64
    %v2896 = vpop.permute.xlu0 %2895
    %2897 = vrot.lane.b32.xlu0 %v2865, 64
    %v2898 = vpop.permute.xlu0 %2897
    %2899 = vrot.lane.b32.xlu0 %v2867, 64
    %v2900 = vpop.permute.xlu0 %2899
    %2901 = vrot.lane.b32.xlu0 %v2869, 64
    %v2902 = vpop.permute.xlu0 %2901
    %2903 = vrot.lane.b32.xlu0 %v2871, 64
    %v2904 = vpop.permute.xlu0 %2903
    %2905 = vrot.lane.b32.xlu0 %v2873, 64
    %v2906 = vpop.permute.xlu0 %2905
    %2907 = vrot.lane.b32.xlu0 %v2875, 64
    %v2908 = vpop.permute.xlu0 %2907
    %2909 = vrot.lane.b32.xlu0 %v2877, 64
    %v2910 = vpop.permute.xlu0 %2909
    %2911 = vrot.lane.b32.xlu0 %v2879, 64
    %v2912 = vpop.permute.xlu0 %2911
    %2913 = vrot.lane.b32.xlu0 %v2850, 64
    %v2914 = vpop.permute.xlu0 %2913
    %2915 = vrot.lane.b32.xlu0 %v2852, 64
    %v2916 = vpop.permute.xlu0 %2915
    %2917 = vrot.lane.b32.xlu0 %v2854, 64
    %v2918 = vpop.permute.xlu0 %2917
    %2919 = vrot.lane.b32.xlu0 %v2856, 64
    %v2920 = vpop.permute.xlu0 %2919
    %2921 = vrot.lane.b32.xlu0 %v2858, 64
    %v2922 = vpop.permute.xlu0 %2921
    %2923 = vrot.lane.b32.xlu0 %v2860, 64
    %v2924 = vpop.permute.xlu0 %2923
    %2925 = vrot.lane.b32.xlu0 %v2862, 64
    %v2926 = vpop.permute.xlu0 %2925
    %2927 = vrot.lane.b32.xlu0 %v2864, 64
    %v2928 = vpop.permute.xlu0 %2927
    %2929 = vrot.lane.b32.xlu0 %v2866, 64
    %v2930 = vpop.permute.xlu0 %2929
    %2931 = vrot.lane.b32.xlu0 %v2868, 64
    %v2932 = vpop.permute.xlu0 %2931
    %2933 = vrot.lane.b32.xlu0 %v2870, 64
    %v2934 = vpop.permute.xlu0 %2933
    %2935 = vrot.lane.b32.xlu0 %v2872, 64
    %v2936 = vpop.permute.xlu0 %2935
    %2937 = vrot.lane.b32.xlu0 %v2874, 64
    %v2938 = vpop.permute.xlu0 %2937
    %2939 = vrot.lane.b32.xlu0 %v2876, 64
    %v2940 = vpop.permute.xlu0 %2939
    %2941 = vrot.lane.b32.xlu0 %v2878, 64
    %v2942 = vpop.permute.xlu0 %2941
    %2943 = vrot.lane.b32.xlu0 %v2880, 64
    %v2944 = vpop.permute.xlu0 %2943
    %v2945 = vsel %vm1236, %v2882, %v2914
    %v2946 = vsel %vm1236, %v2884, %v2916
    %v2947 = vsel %vm1236, %v2886, %v2918
    %v2948 = vsel %vm1236, %v2888, %v2920
    %v2949 = vsel %vm1236, %v2890, %v2922
    %v2950 = vsel %vm1236, %v2892, %v2924
    %v2951 = vsel %vm1236, %v2894, %v2926
    %v2952 = vsel %vm1236, %v2896, %v2928
    %v2953 = vsel %vm1236, %v2898, %v2930
    %v2954 = vsel %vm1236, %v2900, %v2932
    %v2955 = vsel %vm1236, %v2902, %v2934
    %v2956 = vsel %vm1236, %v2904, %v2936
    %v2957 = vsel %vm1236, %v2906, %v2938
    %v2958 = vsel %vm1236, %v2908, %v2940
    %v2959 = vsel %vm1236, %v2910, %v2942
    %v2960 = vsel %vm1236, %v2912, %v2944
    %v2961 = vsel %vm1269, %v2945, %v2850
    %v2962 = vsel %vm1270, %v2946, %v2852
    %v2963 = vsel %vm1271, %v2947, %v2854
    %v2964 = vsel %vm1272, %v2948, %v2856
    %v2965 = vsel %vm1273, %v2949, %v2858
    %v2966 = vsel %vm1274, %v2950, %v2860
    %v2967 = vsel %vm1275, %v2951, %v2862
    %v2968 = vsel %vm1276, %v2952, %v2864
    %v2969 = vsel %vm1277, %v2953, %v2866
    %v2970 = vsel %vm1278, %v2954, %v2868
    %v2971 = vsel %vm1279, %v2955, %v2870
    %v2972 = vsel %vm1280, %v2956, %v2872
    %v2973 = vsel %vm1281, %v2957, %v2874
    %v2974 = vsel %vm1282, %v2958, %v2876
    %v2975 = vsel %vm1283, %v2959, %v2878
    %v2976 = vsel %vm1284, %v2960, %v2880
    %s2977 = scalar_lea.vmem [#allocation2], 2
    %v2978 = vld [vmem:[%s2977] sm:$0x1]
    %v2979 = vpack.c.bf16 %v2962, %v2961
    %v2980 = vpack.c.bf16 %v2964, %v2963
    %v2981 = vpack.c.bf16 %v2966, %v2965
    %v2982 = vpack.c.bf16 %v2968, %v2967
    %v2983 = vpack.c.bf16 %v2970, %v2969
    %v2984 = vpack.c.bf16 %v2972, %v2971
    %v2985 = vpack.c.bf16 %v2974, %v2973
    %v2986 = vpack.c.bf16 %v2976, %v2975
    %2987 = vmatprep.subr.bf16.mxu0 0
    %2988 = vmatpush1.bf16.msra.mxu0 %v2979
    %2989 = vmatprep.subr.bf16.mxu0 0
    %2990 = vmatpush1.bf16.msra.mxu0 %v2980
    %2991 = vmatprep.subr.bf16.mxu0 0
    %2992 = vmatpush1.bf16.msra.mxu0 %v2981
    %2993 = vmatprep.subr.bf16.mxu0 0
    %2994 = vmatpush1.bf16.msra.mxu0 %v2982
    %2995 = vmatprep.subr.bf16.mxu0 0
    %2996 = vmatpush1.bf16.msra.mxu0 %v2983
    %2997 = vmatprep.subr.bf16.mxu0 0
    %2998 = vmatpush1.bf16.msra.mxu0 %v2984
    %2999 = vmatprep.subr.bf16.mxu0 0
    %3000 = vmatpush1.bf16.msra.mxu0 %v2985
    %3001 = vmatprep.subr.bf16.mxu0 0
    %3002 = vmatpush1.bf16.msra.mxu0 %v2986
    %3003 = vmatprep.subr.bf16.mxu0 0
    %3004 = vmatpush1.bf16.msra.mxu0 0
    %3005 = vmatprep.subr.bf16.mxu0 0
    %3006 = vmatpush1.bf16.msra.mxu0 0
    %3007 = vmatprep.subr.bf16.mxu0 0
    %3008 = vmatpush1.bf16.msra.mxu0 0
    %3009 = vmatprep.subr.bf16.mxu0 0
    %3010 = vmatpush1.bf16.msra.mxu0 0
    %3011 = vmatprep.subr.bf16.mxu0 0
    %3012 = vmatpush1.bf16.msra.mxu0 0
    %3013 = vmatprep.subr.bf16.mxu0 0
    %3014 = vmatpush1.bf16.msra.mxu0 0
    %3015 = vmatprep.subr.bf16.mxu0 0
    %3016 = vmatpush1.bf16.msra.mxu0 0
    %3017 = vmatprep.subr.bf16.mxu0 0
    %3018 = vmatpush1.bf16.msra.mxu0 0
    %3019 = vmatprep.mubr.bf16.mxu0 0
    %3020 = vmatmul.mubr.bf16.gmra.mrb[0].mxu0 %v2978
    %v3021 = vpop.f32.mrb[0].mxu0
    %v3022 = vadd.f32 0.0, %v3021
    %v3023 = vpop.f32.mrb[0].mxu0
    %v3024 = vpop.f32.mrb[0].mxu0
    %v3025 = vpop.f32.mrb[0].mxu0
    %3026 = vdwg.mxu0
    %s3027 = scalar_lea.vmem [#allocation7], 4
    %3028 = vst [vmem:[%s3027] sm:$0x3] %v3022
    %s3029 = scalar_lea.vmem [#allocation5], 6
    %v3030 = vld [vmem:[%s3029] sm:$0x3]
    %v3032 = vlaneseq
    %v3033 = vshrl.u32 %v3032, 7
    %v3034 = vsub.s32 0, %v3033
    %v3035 = vrot.slane %v3030, %v3034
    %v3036 = vlaneseq
    %v3037 = vshrl.u32 %v3036, 7
    %v3038 = vsub.s32 1, %v3037
    %v3039 = vrot.slane %v3030, %v3038
    %3042 = vrot.lane.b32.xlu0 %v3035, 1
    %v3043 = vpop.permute.xlu0 %3042
    %3044 = vrot.lane.b32.xlu0 %v3039, 1
    %v3045 = vpop.permute.xlu0 %3044
    %v3046 = vsel %vm300, %v3043, %v3045
    %v3047 = vsel %vm300, %v3045, %v3043
    %v3048 = vsel %vm319, %v3047, %v3035
    %v3049 = vsel %vm319, %v3046, %v3039
    %v3050 = vsel %vm320, %v3047, %v3035
    %v3051 = vsel %vm320, %v3046, %v3039
    %v3052 = vsel %vm321, %v3047, %v3035
    %v3053 = vsel %vm321, %v3046, %v3039
    %v3054 = vsel %vm322, %v3047, %v3035
    %v3055 = vsel %vm322, %v3046, %v3039
    %v3056 = vsel %vm323, %v3047, %v3035
    %v3057 = vsel %vm323, %v3046, %v3039
    %v3058 = vsel %vm324, %v3047, %v3035
    %v3059 = vsel %vm324, %v3046, %v3039
    %v3060 = vsel %vm325, %v3047, %v3035
    %v3061 = vsel %vm325, %v3046, %v3039
    %v3062 = vsel %vm326, %v3047, %v3035
    %v3063 = vsel %vm326, %v3046, %v3039
    %v3064 = vsel %vm327, %v3047, %v3035
    %v3065 = vsel %vm327, %v3046, %v3039
    %v3066 = vsel %vm328, %v3047, %v3035
    %v3067 = vsel %vm328, %v3046, %v3039
    %v3068 = vsel %vm329, %v3047, %v3035
    %v3069 = vsel %vm329, %v3046, %v3039
    %v3070 = vsel %vm330, %v3047, %v3035
    %v3071 = vsel %vm330, %v3046, %v3039
    %v3072 = vsel %vm331, %v3047, %v3035
    %v3073 = vsel %vm331, %v3046, %v3039
    %v3074 = vsel %vm332, %v3047, %v3035
    %v3075 = vsel %vm332, %v3046, %v3039
    %v3076 = vsel %vm333, %v3047, %v3035
    %v3077 = vsel %vm333, %v3046, %v3039
    %v3078 = vsel %vm334, %v3047, %v3035
    %v3079 = vsel %vm334, %v3046, %v3039
    %3080 = vrot.lane.b32.xlu0 %v3048, 2
    %v3081 = vpop.permute.xlu0 %3080
    %3082 = vrot.lane.b32.xlu0 %v3050, 2
    %v3083 = vpop.permute.xlu0 %3082
    %3084 = vrot.lane.b32.xlu0 %v3052, 2
    %v3085 = vpop.permute.xlu0 %3084
    %3086 = vrot.lane.b32.xlu0 %v3054, 2
    %v3087 = vpop.permute.xlu0 %3086
    %3088 = vrot.lane.b32.xlu0 %v3056, 2
    %v3089 = vpop.permute.xlu0 %3088
    %3090 = vrot.lane.b32.xlu0 %v3058, 2
    %v3091 = vpop.permute.xlu0 %3090
    %3092 = vrot.lane.b32.xlu0 %v3060, 2
    %v3093 = vpop.permute.xlu0 %3092
    %3094 = vrot.lane.b32.xlu0 %v3062, 2
    %v3095 = vpop.permute.xlu0 %3094
    %3096 = vrot.lane.b32.xlu0 %v3064, 2
    %v3097 = vpop.permute.xlu0 %3096
    %3098 = vrot.lane.b32.xlu0 %v3066, 2
    %v3099 = vpop.permute.xlu0 %3098
    %3100 = vrot.lane.b32.xlu0 %v3068, 2
    %v3101 = vpop.permute.xlu0 %3100
    %3102 = vrot.lane.b32.xlu0 %v3070, 2
    %v3103 = vpop.permute.xlu0 %3102
    %3104 = vrot.lane.b32.xlu0 %v3072, 2
    %v3105 = vpop.permute.xlu0 %3104
    %3106 = vrot.lane.b32.xlu0 %v3074, 2
    %v3107 = vpop.permute.xlu0 %3106
    %3108 = vrot.lane.b32.xlu0 %v3076, 2
    %v3109 = vpop.permute.xlu0 %3108
    %3110 = vrot.lane.b32.xlu0 %v3078, 2
    %v3111 = vpop.permute.xlu0 %3110
    %3112 = vrot.lane.b32.xlu0 %v3049, 2
    %v3113 = vpop.permute.xlu0 %3112
    %3114 = vrot.lane.b32.xlu0 %v3051, 2
    %v3115 = vpop.permute.xlu0 %3114
    %3116 = vrot.lane.b32.xlu0 %v3053, 2
    %v3117 = vpop.permute.xlu0 %3116
    %3118 = vrot.lane.b32.xlu0 %v3055, 2
    %v3119 = vpop.permute.xlu0 %3118
    %3120 = vrot.lane.b32.xlu0 %v3057, 2
    %v3121 = vpop.permute.xlu0 %3120
    %3122 = vrot.lane.b32.xlu0 %v3059, 2
    %v3123 = vpop.permute.xlu0 %3122
    %3124 = vrot.lane.b32.xlu0 %v3061, 2
    %v3125 = vpop.permute.xlu0 %3124
    %3126 = vrot.lane.b32.xlu0 %v3063, 2
    %v3127 = vpop.permute.xlu0 %3126
    %3128 = vrot.lane.b32.xlu0 %v3065, 2
    %v3129 = vpop.permute.xlu0 %3128
    %3130 = vrot.lane.b32.xlu0 %v3067, 2
    %v3131 = vpop.permute.xlu0 %3130
    %3132 = vrot.lane.b32.xlu0 %v3069, 2
    %v3133 = vpop.permute.xlu0 %3132
    %3134 = vrot.lane.b32.xlu0 %v3071, 2
    %v3135 = vpop.permute.xlu0 %3134
    %3136 = vrot.lane.b32.xlu0 %v3073, 2
    %v3137 = vpop.permute.xlu0 %3136
    %3138 = vrot.lane.b32.xlu0 %v3075, 2
    %v3139 = vpop.permute.xlu0 %3138
    %3140 = vrot.lane.b32.xlu0 %v3077, 2
    %v3141 = vpop.permute.xlu0 %3140
    %3142 = vrot.lane.b32.xlu0 %v3079, 2
    %v3143 = vpop.permute.xlu0 %3142
    %v3144 = vsel %vm431, %v3081, %v3113
    %v3145 = vsel %vm431, %v3083, %v3115
    %v3146 = vsel %vm431, %v3085, %v3117
    %v3147 = vsel %vm431, %v3087, %v3119
    %v3148 = vsel %vm431, %v3089, %v3121
    %v3149 = vsel %vm431, %v3091, %v3123
    %v3150 = vsel %vm431, %v3093, %v3125
    %v3151 = vsel %vm431, %v3095, %v3127
    %v3152 = vsel %vm431, %v3097, %v3129
    %v3153 = vsel %vm431, %v3099, %v3131
    %v3154 = vsel %vm431, %v3101, %v3133
    %v3155 = vsel %vm431, %v3103, %v3135
    %v3156 = vsel %vm431, %v3105, %v3137
    %v3157 = vsel %vm431, %v3107, %v3139
    %v3158 = vsel %vm431, %v3109, %v3141
    %v3159 = vsel %vm431, %v3111, %v3143
    %v3160 = vsel %vm431, %v3113, %v3081
    %v3161 = vsel %vm431, %v3115, %v3083
    %v3162 = vsel %vm431, %v3117, %v3085
    %v3163 = vsel %vm431, %v3119, %v3087
    %v3164 = vsel %vm431, %v3121, %v3089
    %v3165 = vsel %vm431, %v3123, %v3091
    %v3166 = vsel %vm431, %v3125, %v3093
    %v3167 = vsel %vm431, %v3127, %v3095
    %v3168 = vsel %vm431, %v3129, %v3097
    %v3169 = vsel %vm431, %v3131, %v3099
    %v3170 = vsel %vm431, %v3133, %v3101
    %v3171 = vsel %vm431, %v3135, %v3103
    %v3172 = vsel %vm431, %v3137, %v3105
    %v3173 = vsel %vm431, %v3139, %v3107
    %v3174 = vsel %vm431, %v3141, %v3109
    %v3175 = vsel %vm431, %v3143, %v3111
    %v3176 = vsel %vm480, %v3160, %v3048
    %v3177 = vsel %vm480, %v3144, %v3049
    %v3178 = vsel %vm481, %v3161, %v3050
    %v3179 = vsel %vm481, %v3145, %v3051
    %v3180 = vsel %vm482, %v3162, %v3052
    %v3181 = vsel %vm482, %v3146, %v3053
    %v3182 = vsel %vm483, %v3163, %v3054
    %v3183 = vsel %vm483, %v3147, %v3055
    %v3184 = vsel %vm484, %v3164, %v3056
    %v3185 = vsel %vm484, %v3148, %v3057
    %v3186 = vsel %vm485, %v3165, %v3058
    %v3187 = vsel %vm485, %v3149, %v3059
    %v3188 = vsel %vm486, %v3166, %v3060
    %v3189 = vsel %vm486, %v3150, %v3061
    %v3190 = vsel %vm487, %v3167, %v3062
    %v3191 = vsel %vm487, %v3151, %v3063
    %v3192 = vsel %vm488, %v3168, %v3064
    %v3193 = vsel %vm488, %v3152, %v3065
    %v3194 = vsel %vm489, %v3169, %v3066
    %v3195 = vsel %vm489, %v3153, %v3067
    %v3196 = vsel %vm490, %v3170, %v3068
    %v3197 = vsel %vm490, %v3154, %v3069
    %v3198 = vsel %vm491, %v3171, %v3070
    %v3199 = vsel %vm491, %v3155, %v3071
    %v3200 = vsel %vm492, %v3172, %v3072
    %v3201 = vsel %vm492, %v3156, %v3073
    %v3202 = vsel %vm493, %v3173, %v3074
    %v3203 = vsel %vm493, %v3157, %v3075
    %v3204 = vsel %vm494, %v3174, %v3076
    %v3205 = vsel %vm494, %v3158, %v3077
    %v3206 = vsel %vm495, %v3175, %v3078
    %v3207 = vsel %vm495, %v3159, %v3079
    %3208 = vrot.lane.b32.xlu0 %v3176, 4
    %v3209 = vpop.permute.xlu0 %3208
    %3210 = vrot.lane.b32.xlu0 %v3178, 4
    %v3211 = vpop.permute.xlu0 %3210
    %3212 = vrot.lane.b32.xlu0 %v3180, 4
    %v3213 = vpop.permute.xlu0 %3212
    %3214 = vrot.lane.b32.xlu0 %v3182, 4
    %v3215 = vpop.permute.xlu0 %3214
    %3216 = vrot.lane.b32.xlu0 %v3184, 4
    %v3217 = vpop.permute.xlu0 %3216
    %3218 = vrot.lane.b32.xlu0 %v3186, 4
    %v3219 = vpop.permute.xlu0 %3218
    %3220 = vrot.lane.b32.xlu0 %v3188, 4
    %v3221 = vpop.permute.xlu0 %3220
    %3222 = vrot.lane.b32.xlu0 %v3190, 4
    %v3223 = vpop.permute.xlu0 %3222
    %3224 = vrot.lane.b32.xlu0 %v3192, 4
    %v3225 = vpop.permute.xlu0 %3224
    %3226 = vrot.lane.b32.xlu0 %v3194, 4
    %v3227 = vpop.permute.xlu0 %3226
    %3228 = vrot.lane.b32.xlu0 %v3196, 4
    %v3229 = vpop.permute.xlu0 %3228
    %3230 = vrot.lane.b32.xlu0 %v3198, 4
    %v3231 = vpop.permute.xlu0 %3230
    %3232 = vrot.lane.b32.xlu0 %v3200, 4
    %v3233 = vpop.permute.xlu0 %3232
    %3234 = vrot.lane.b32.xlu0 %v3202, 4
    %v3235 = vpop.permute.xlu0 %3234
    %3236 = vrot.lane.b32.xlu0 %v3204, 4
    %v3237 = vpop.permute.xlu0 %3236
    %3238 = vrot.lane.b32.xlu0 %v3206, 4
    %v3239 = vpop.permute.xlu0 %3238
    %3240 = vrot.lane.b32.xlu0 %v3177, 4
    %v3241 = vpop.permute.xlu0 %3240
    %3242 = vrot.lane.b32.xlu0 %v3179, 4
    %v3243 = vpop.permute.xlu0 %3242
    %3244 = vrot.lane.b32.xlu0 %v3181, 4
    %v3245 = vpop.permute.xlu0 %3244
    %3246 = vrot.lane.b32.xlu0 %v3183, 4
    %v3247 = vpop.permute.xlu0 %3246
    %3248 = vrot.lane.b32.xlu0 %v3185, 4
    %v3249 = vpop.permute.xlu0 %3248
    %3250 = vrot.lane.b32.xlu0 %v3187, 4
    %v3251 = vpop.permute.xlu0 %3250
    %3252 = vrot.lane.b32.xlu0 %v3189, 4
    %v3253 = vpop.permute.xlu0 %3252
    %3254 = vrot.lane.b32.xlu0 %v3191, 4
    %v3255 = vpop.permute.xlu0 %3254
    %3256 = vrot.lane.b32.xlu0 %v3193, 4
    %v3257 = vpop.permute.xlu0 %3256
    %3258 = vrot.lane.b32.xlu0 %v3195, 4
    %v3259 = vpop.permute.xlu0 %3258
    %3260 = vrot.lane.b32.xlu0 %v3197, 4
    %v3261 = vpop.permute.xlu0 %3260
    %3262 = vrot.lane.b32.xlu0 %v3199, 4
    %v3263 = vpop.permute.xlu0 %3262
    %3264 = vrot.lane.b32.xlu0 %v3201, 4
    %v3265 = vpop.permute.xlu0 %3264
    %3266 = vrot.lane.b32.xlu0 %v3203, 4
    %v3267 = vpop.permute.xlu0 %3266
    %3268 = vrot.lane.b32.xlu0 %v3205, 4
    %v3269 = vpop.permute.xlu0 %3268
    %3270 = vrot.lane.b32.xlu0 %v3207, 4
    %v3271 = vpop.permute.xlu0 %3270
    %v3272 = vsel %vm592, %v3209, %v3241
    %v3273 = vsel %vm592, %v3211, %v3243
    %v3274 = vsel %vm592, %v3213, %v3245
    %v3275 = vsel %vm592, %v3215, %v3247
    %v3276 = vsel %vm592, %v3217, %v3249
    %v3277 = vsel %vm592, %v3219, %v3251
    %v3278 = vsel %vm592, %v3221, %v3253
    %v3279 = vsel %vm592, %v3223, %v3255
    %v3280 = vsel %vm592, %v3225, %v3257
    %v3281 = vsel %vm592, %v3227, %v3259
    %v3282 = vsel %vm592, %v3229, %v3261
    %v3283 = vsel %vm592, %v3231, %v3263
    %v3284 = vsel %vm592, %v3233, %v3265
    %v3285 = vsel %vm592, %v3235, %v3267
    %v3286 = vsel %vm592, %v3237, %v3269
    %v3287 = vsel %vm592, %v3239, %v3271
    %v3288 = vsel %vm592, %v3241, %v3209
    %v3289 = vsel %vm592, %v3243, %v3211
    %v3290 = vsel %vm592, %v3245, %v3213
    %v3291 = vsel %vm592, %v3247, %v3215
    %v3292 = vsel %vm592, %v3249, %v3217
    %v3293 = vsel %vm592, %v3251, %v3219
    %v3294 = vsel %vm592, %v3253, %v3221
    %v3295 = vsel %vm592, %v3255, %v3223
    %v3296 = vsel %vm592, %v3257, %v3225
    %v3297 = vsel %vm592, %v3259, %v3227
    %v3298 = vsel %vm592, %v3261, %v3229
    %v3299 = vsel %vm592, %v3263, %v3231
    %v3300 = vsel %vm592, %v3265, %v3233
    %v3301 = vsel %vm592, %v3267, %v3235
    %v3302 = vsel %vm592, %v3269, %v3237
    %v3303 = vsel %vm592, %v3271, %v3239
    %v3304 = vsel %vm641, %v3288, %v3176
    %v3305 = vsel %vm641, %v3272, %v3177
    %v3306 = vsel %vm642, %v3289, %v3178
    %v3307 = vsel %vm642, %v3273, %v3179
    %v3308 = vsel %vm643, %v3290, %v3180
    %v3309 = vsel %vm643, %v3274, %v3181
    %v3310 = vsel %vm644, %v3291, %v3182
    %v3311 = vsel %vm644, %v3275, %v3183
    %v3312 = vsel %vm645, %v3292, %v3184
    %v3313 = vsel %vm645, %v3276, %v3185
    %v3314 = vsel %vm646, %v3293, %v3186
    %v3315 = vsel %vm646, %v3277, %v3187
    %v3316 = vsel %vm647, %v3294, %v3188
    %v3317 = vsel %vm647, %v3278, %v3189
    %v3318 = vsel %vm648, %v3295, %v3190
    %v3319 = vsel %vm648, %v3279, %v3191
    %v3320 = vsel %vm649, %v3296, %v3192
    %v3321 = vsel %vm649, %v3280, %v3193
    %v3322 = vsel %vm650, %v3297, %v3194
    %v3323 = vsel %vm650, %v3281, %v3195
    %v3324 = vsel %vm651, %v3298, %v3196
    %v3325 = vsel %vm651, %v3282, %v3197
    %v3326 = vsel %vm652, %v3299, %v3198
    %v3327 = vsel %vm652, %v3283, %v3199
    %v3328 = vsel %vm653, %v3300, %v3200
    %v3329 = vsel %vm653, %v3284, %v3201
    %v3330 = vsel %vm654, %v3301, %v3202
    %v3331 = vsel %vm654, %v3285, %v3203
    %v3332 = vsel %vm655, %v3302, %v3204
    %v3333 = vsel %vm655, %v3286, %v3205
    %v3334 = vsel %vm656, %v3303, %v3206
    %v3335 = vsel %vm656, %v3287, %v3207
    %3336 = vrot.lane.b32.xlu0 %v3304, 8
    %v3337 = vpop.permute.xlu0 %3336
    %3338 = vrot.lane.b32.xlu0 %v3306, 8
    %v3339 = vpop.permute.xlu0 %3338
    %3340 = vrot.lane.b32.xlu0 %v3308, 8
    %v3341 = vpop.permute.xlu0 %3340
    %3342 = vrot.lane.b32.xlu0 %v3310, 8
    %v3343 = vpop.permute.xlu0 %3342
    %3344 = vrot.lane.b32.xlu0 %v3312, 8
    %v3345 = vpop.permute.xlu0 %3344
    %3346 = vrot.lane.b32.xlu0 %v3314, 8
    %v3347 = vpop.permute.xlu0 %3346
    %3348 = vrot.lane.b32.xlu0 %v3316, 8
    %v3349 = vpop.permute.xlu0 %3348
    %3350 = vrot.lane.b32.xlu0 %v3318, 8
    %v3351 = vpop.permute.xlu0 %3350
    %3352 = vrot.lane.b32.xlu0 %v3320, 8
    %v3353 = vpop.permute.xlu0 %3352
    %3354 = vrot.lane.b32.xlu0 %v3322, 8
    %v3355 = vpop.permute.xlu0 %3354
    %3356 = vrot.lane.b32.xlu0 %v3324, 8
    %v3357 = vpop.permute.xlu0 %3356
    %3358 = vrot.lane.b32.xlu0 %v3326, 8
    %v3359 = vpop.permute.xlu0 %3358
    %3360 = vrot.lane.b32.xlu0 %v3328, 8
    %v3361 = vpop.permute.xlu0 %3360
    %3362 = vrot.lane.b32.xlu0 %v3330, 8
    %v3363 = vpop.permute.xlu0 %3362
    %3364 = vrot.lane.b32.xlu0 %v3332, 8
    %v3365 = vpop.permute.xlu0 %3364
    %3366 = vrot.lane.b32.xlu0 %v3334, 8
    %v3367 = vpop.permute.xlu0 %3366
    %3368 = vrot.lane.b32.xlu0 %v3305, 8
    %v3369 = vpop.permute.xlu0 %3368
    %3370 = vrot.lane.b32.xlu0 %v3307, 8
    %v3371 = vpop.permute.xlu0 %3370
    %3372 = vrot.lane.b32.xlu0 %v3309, 8
    %v3373 = vpop.permute.xlu0 %3372
    %3374 = vrot.lane.b32.xlu0 %v3311, 8
    %v3375 = vpop.permute.xlu0 %3374
    %3376 = vrot.lane.b32.xlu0 %v3313, 8
    %v3377 = vpop.permute.xlu0 %3376
    %3378 = vrot.lane.b32.xlu0 %v3315, 8
    %v3379 = vpop.permute.xlu0 %3378
    %3380 = vrot.lane.b32.xlu0 %v3317, 8
    %v3381 = vpop.permute.xlu0 %3380
    %3382 = vrot.lane.b32.xlu0 %v3319, 8
    %v3383 = vpop.permute.xlu0 %3382
    %3384 = vrot.lane.b32.xlu0 %v3321, 8
    %v3385 = vpop.permute.xlu0 %3384
    %3386 = vrot.lane.b32.xlu0 %v3323, 8
    %v3387 = vpop.permute.xlu0 %3386
    %3388 = vrot.lane.b32.xlu0 %v3325, 8
    %v3389 = vpop.permute.xlu0 %3388
    %3390 = vrot.lane.b32.xlu0 %v3327, 8
    %v3391 = vpop.permute.xlu0 %3390
    %3392 = vrot.lane.b32.xlu0 %v3329, 8
    %v3393 = vpop.permute.xlu0 %3392
    %3394 = vrot.lane.b32.xlu0 %v3331, 8
    %v3395 = vpop.permute.xlu0 %3394
    %3396 = vrot.lane.b32.xlu0 %v3333, 8
    %v3397 = vpop.permute.xlu0 %3396
    %3398 = vrot.lane.b32.xlu0 %v3335, 8
    %v3399 = vpop.permute.xlu0 %3398
    %v3400 = vsel %vm753, %v3337, %v3369
    %v3401 = vsel %vm753, %v3339, %v3371
    %v3402 = vsel %vm753, %v3341, %v3373
    %v3403 = vsel %vm753, %v3343, %v3375
    %v3404 = vsel %vm753, %v3345, %v3377
    %v3405 = vsel %vm753, %v3347, %v3379
    %v3406 = vsel %vm753, %v3349, %v3381
    %v3407 = vsel %vm753, %v3351, %v3383
    %v3408 = vsel %vm753, %v3353, %v3385
    %v3409 = vsel %vm753, %v3355, %v3387
    %v3410 = vsel %vm753, %v3357, %v3389
    %v3411 = vsel %vm753, %v3359, %v3391
    %v3412 = vsel %vm753, %v3361, %v3393
    %v3413 = vsel %vm753, %v3363, %v3395
    %v3414 = vsel %vm753, %v3365, %v3397
    %v3415 = vsel %vm753, %v3367, %v3399
    %v3416 = vsel %vm753, %v3369, %v3337
    %v3417 = vsel %vm753, %v3371, %v3339
    %v3418 = vsel %vm753, %v3373, %v3341
    %v3419 = vsel %vm753, %v3375, %v3343
    %v3420 = vsel %vm753, %v3377, %v3345
    %v3421 = vsel %vm753, %v3379, %v3347
    %v3422 = vsel %vm753, %v3381, %v3349
    %v3423 = vsel %vm753, %v3383, %v3351
    %v3424 = vsel %vm753, %v3385, %v3353
    %v3425 = vsel %vm753, %v3387, %v3355
    %v3426 = vsel %vm753, %v3389, %v3357
    %v3427 = vsel %vm753, %v3391, %v3359
    %v3428 = vsel %vm753, %v3393, %v3361
    %v3429 = vsel %vm753, %v3395, %v3363
    %v3430 = vsel %vm753, %v3397, %v3365
    %v3431 = vsel %vm753, %v3399, %v3367
    %v3432 = vsel %vm802, %v3416, %v3304
    %v3433 = vsel %vm802, %v3400, %v3305
    %v3434 = vsel %vm803, %v3417, %v3306
    %v3435 = vsel %vm803, %v3401, %v3307
    %v3436 = vsel %vm804, %v3418, %v3308
    %v3437 = vsel %vm804, %v3402, %v3309
    %v3438 = vsel %vm805, %v3419, %v3310
    %v3439 = vsel %vm805, %v3403, %v3311
    %v3440 = vsel %vm806, %v3420, %v3312
    %v3441 = vsel %vm806, %v3404, %v3313
    %v3442 = vsel %vm807, %v3421, %v3314
    %v3443 = vsel %vm807, %v3405, %v3315
    %v3444 = vsel %vm808, %v3422, %v3316
    %v3445 = vsel %vm808, %v3406, %v3317
    %v3446 = vsel %vm809, %v3423, %v3318
    %v3447 = vsel %vm809, %v3407, %v3319
    %v3448 = vsel %vm810, %v3424, %v3320
    %v3449 = vsel %vm810, %v3408, %v3321
    %v3450 = vsel %vm811, %v3425, %v3322
    %v3451 = vsel %vm811, %v3409, %v3323
    %v3452 = vsel %vm812, %v3426, %v3324
    %v3453 = vsel %vm812, %v3410, %v3325
    %v3454 = vsel %vm813, %v3427, %v3326
    %v3455 = vsel %vm813, %v3411, %v3327
    %v3456 = vsel %vm814, %v3428, %v3328
    %v3457 = vsel %vm814, %v3412, %v3329
    %v3458 = vsel %vm815, %v3429, %v3330
    %v3459 = vsel %vm815, %v3413, %v3331
    %v3460 = vsel %vm816, %v3430, %v3332
    %v3461 = vsel %vm816, %v3414, %v3333
    %v3462 = vsel %vm817, %v3431, %v3334
    %v3463 = vsel %vm817, %v3415, %v3335
    %3464 = vrot.lane.b32.xlu0 %v3432, 16
    %v3465 = vpop.permute.xlu0 %3464
    %3466 = vrot.lane.b32.xlu0 %v3434, 16
    %v3467 = vpop.permute.xlu0 %3466
    %3468 = vrot.lane.b32.xlu0 %v3436, 16
    %v3469 = vpop.permute.xlu0 %3468
    %3470 = vrot.lane.b32.xlu0 %v3438, 16
    %v3471 = vpop.permute.xlu0 %3470
    %3472 = vrot.lane.b32.xlu0 %v3440, 16
    %v3473 = vpop.permute.xlu0 %3472
    %3474 = vrot.lane.b32.xlu0 %v3442, 16
    %v3475 = vpop.permute.xlu0 %3474
    %3476 = vrot.lane.b32.xlu0 %v3444, 16
    %v3477 = vpop.permute.xlu0 %3476
    %3478 = vrot.lane.b32.xlu0 %v3446, 16
    %v3479 = vpop.permute.xlu0 %3478
    %3480 = vrot.lane.b32.xlu0 %v3448, 16
    %v3481 = vpop.permute.xlu0 %3480
    %3482 = vrot.lane.b32.xlu0 %v3450, 16
    %v3483 = vpop.permute.xlu0 %3482
    %3484 = vrot.lane.b32.xlu0 %v3452, 16
    %v3485 = vpop.permute.xlu0 %3484
    %3486 = vrot.lane.b32.xlu0 %v3454, 16
    %v3487 = vpop.permute.xlu0 %3486
    %3488 = vrot.lane.b32.xlu0 %v3456, 16
    %v3489 = vpop.permute.xlu0 %3488
    %3490 = vrot.lane.b32.xlu0 %v3458, 16
    %v3491 = vpop.permute.xlu0 %3490
    %3492 = vrot.lane.b32.xlu0 %v3460, 16
    %v3493 = vpop.permute.xlu0 %3492
    %3494 = vrot.lane.b32.xlu0 %v3462, 16
    %v3495 = vpop.permute.xlu0 %3494
    %3496 = vrot.lane.b32.xlu0 %v3433, 16
    %v3497 = vpop.permute.xlu0 %3496
    %3498 = vrot.lane.b32.xlu0 %v3435, 16
    %v3499 = vpop.permute.xlu0 %3498
    %3500 = vrot.lane.b32.xlu0 %v3437, 16
    %v3501 = vpop.permute.xlu0 %3500
    %3502 = vrot.lane.b32.xlu0 %v3439, 16
    %v3503 = vpop.permute.xlu0 %3502
    %3504 = vrot.lane.b32.xlu0 %v3441, 16
    %v3505 = vpop.permute.xlu0 %3504
    %3506 = vrot.lane.b32.xlu0 %v3443, 16
    %v3507 = vpop.permute.xlu0 %3506
    %3508 = vrot.lane.b32.xlu0 %v3445, 16
    %v3509 = vpop.permute.xlu0 %3508
    %3510 = vrot.lane.b32.xlu0 %v3447, 16
    %v3511 = vpop.permute.xlu0 %3510
    %3512 = vrot.lane.b32.xlu0 %v3449, 16
    %v3513 = vpop.permute.xlu0 %3512
    %3514 = vrot.lane.b32.xlu0 %v3451, 16
    %v3515 = vpop.permute.xlu0 %3514
    %3516 = vrot.lane.b32.xlu0 %v3453, 16
    %v3517 = vpop.permute.xlu0 %3516
    %3518 = vrot.lane.b32.xlu0 %v3455, 16
    %v3519 = vpop.permute.xlu0 %3518
    %3520 = vrot.lane.b32.xlu0 %v3457, 16
    %v3521 = vpop.permute.xlu0 %3520
    %3522 = vrot.lane.b32.xlu0 %v3459, 16
    %v3523 = vpop.permute.xlu0 %3522
    %3524 = vrot.lane.b32.xlu0 %v3461, 16
    %v3525 = vpop.permute.xlu0 %3524
    %3526 = vrot.lane.b32.xlu0 %v3463, 16
    %v3527 = vpop.permute.xlu0 %3526
    %v3528 = vsel %vm914, %v3465, %v3497
    %v3529 = vsel %vm914, %v3467, %v3499
    %v3530 = vsel %vm914, %v3469, %v3501
    %v3531 = vsel %vm914, %v3471, %v3503
    %v3532 = vsel %vm914, %v3473, %v3505
    %v3533 = vsel %vm914, %v3475, %v3507
    %v3534 = vsel %vm914, %v3477, %v3509
    %v3535 = vsel %vm914, %v3479, %v3511
    %v3536 = vsel %vm914, %v3481, %v3513
    %v3537 = vsel %vm914, %v3483, %v3515
    %v3538 = vsel %vm914, %v3485, %v3517
    %v3539 = vsel %vm914, %v3487, %v3519
    %v3540 = vsel %vm914, %v3489, %v3521
    %v3541 = vsel %vm914, %v3491, %v3523
    %v3542 = vsel %vm914, %v3493, %v3525
    %v3543 = vsel %vm914, %v3495, %v3527
    %v3544 = vsel %vm914, %v3497, %v3465
    %v3545 = vsel %vm914, %v3499, %v3467
    %v3546 = vsel %vm914, %v3501, %v3469
    %v3547 = vsel %vm914, %v3503, %v3471
    %v3548 = vsel %vm914, %v3505, %v3473
    %v3549 = vsel %vm914, %v3507, %v3475
    %v3550 = vsel %vm914, %v3509, %v3477
    %v3551 = vsel %vm914, %v3511, %v3479
    %v3552 = vsel %vm914, %v3513, %v3481
    %v3553 = vsel %vm914, %v3515, %v3483
    %v3554 = vsel %vm914, %v3517, %v3485
    %v3555 = vsel %vm914, %v3519, %v3487
    %v3556 = vsel %vm914, %v3521, %v3489
    %v3557 = vsel %vm914, %v3523, %v3491
    %v3558 = vsel %vm914, %v3525, %v3493
    %v3559 = vsel %vm914, %v3527, %v3495
    %v3560 = vsel %vm963, %v3544, %v3432
    %v3561 = vsel %vm963, %v3528, %v3433
    %v3562 = vsel %vm964, %v3545, %v3434
    %v3563 = vsel %vm964, %v3529, %v3435
    %v3564 = vsel %vm965, %v3546, %v3436
    %v3565 = vsel %vm965, %v3530, %v3437
    %v3566 = vsel %vm966, %v3547, %v3438
    %v3567 = vsel %vm966, %v3531, %v3439
    %v3568 = vsel %vm967, %v3548, %v3440
    %v3569 = vsel %vm967, %v3532, %v3441
    %v3570 = vsel %vm968, %v3549, %v3442
    %v3571 = vsel %vm968, %v3533, %v3443
    %v3572 = vsel %vm969, %v3550, %v3444
    %v3573 = vsel %vm969, %v3534, %v3445
    %v3574 = vsel %vm970, %v3551, %v3446
    %v3575 = vsel %vm970, %v3535, %v3447
    %v3576 = vsel %vm971, %v3552, %v3448
    %v3577 = vsel %vm971, %v3536, %v3449
    %v3578 = vsel %vm972, %v3553, %v3450
    %v3579 = vsel %vm972, %v3537, %v3451
    %v3580 = vsel %vm973, %v3554, %v3452
    %v3581 = vsel %vm973, %v3538, %v3453
    %v3582 = vsel %vm974, %v3555, %v3454
    %v3583 = vsel %vm974, %v3539, %v3455
    %v3584 = vsel %vm975, %v3556, %v3456
    %v3585 = vsel %vm975, %v3540, %v3457
    %v3586 = vsel %vm976, %v3557, %v3458
    %v3587 = vsel %vm976, %v3541, %v3459
    %v3588 = vsel %vm977, %v3558, %v3460
    %v3589 = vsel %vm977, %v3542, %v3461
    %v3590 = vsel %vm978, %v3559, %v3462
    %v3591 = vsel %vm978, %v3543, %v3463
    %3592 = vrot.lane.b32.xlu0 %v3560, 32
    %v3593 = vpop.permute.xlu0 %3592
    %3594 = vrot.lane.b32.xlu0 %v3562, 32
    %v3595 = vpop.permute.xlu0 %3594
    %3596 = vrot.lane.b32.xlu0 %v3564, 32
    %v3597 = vpop.permute.xlu0 %3596
    %3598 = vrot.lane.b32.xlu0 %v3566, 32
    %v3599 = vpop.permute.xlu0 %3598
    %3600 = vrot.lane.b32.xlu0 %v3568, 32
    %v3601 = vpop.permute.xlu0 %3600
    %3602 = vrot.lane.b32.xlu0 %v3570, 32
    %v3603 = vpop.permute.xlu0 %3602
    %3604 = vrot.lane.b32.xlu0 %v3572, 32
    %v3605 = vpop.permute.xlu0 %3604
    %3606 = vrot.lane.b32.xlu0 %v3574, 32
    %v3607 = vpop.permute.xlu0 %3606
    %3608 = vrot.lane.b32.xlu0 %v3576, 32
    %v3609 = vpop.permute.xlu0 %3608
    %3610 = vrot.lane.b32.xlu0 %v3578, 32
    %v3611 = vpop.permute.xlu0 %3610
    %3612 = vrot.lane.b32.xlu0 %v3580, 32
    %v3613 = vpop.permute.xlu0 %3612
    %3614 = vrot.lane.b32.xlu0 %v3582, 32
    %v3615 = vpop.permute.xlu0 %3614
    %3616 = vrot.lane.b32.xlu0 %v3584, 32
    %v3617 = vpop.permute.xlu0 %3616
    %3618 = vrot.lane.b32.xlu0 %v3586, 32
    %v3619 = vpop.permute.xlu0 %3618
    %3620 = vrot.lane.b32.xlu0 %v3588, 32
    %v3621 = vpop.permute.xlu0 %3620
    %3622 = vrot.lane.b32.xlu0 %v3590, 32
    %v3623 = vpop.permute.xlu0 %3622
    %3624 = vrot.lane.b32.xlu0 %v3561, 32
    %v3625 = vpop.permute.xlu0 %3624
    %3626 = vrot.lane.b32.xlu0 %v3563, 32
    %v3627 = vpop.permute.xlu0 %3626
    %3628 = vrot.lane.b32.xlu0 %v3565, 32
    %v3629 = vpop.permute.xlu0 %3628
    %3630 = vrot.lane.b32.xlu0 %v3567, 32
    %v3631 = vpop.permute.xlu0 %3630
    %3632 = vrot.lane.b32.xlu0 %v3569, 32
    %v3633 = vpop.permute.xlu0 %3632
    %3634 = vrot.lane.b32.xlu0 %v3571, 32
    %v3635 = vpop.permute.xlu0 %3634
    %3636 = vrot.lane.b32.xlu0 %v3573, 32
    %v3637 = vpop.permute.xlu0 %3636
    %3638 = vrot.lane.b32.xlu0 %v3575, 32
    %v3639 = vpop.permute.xlu0 %3638
    %3640 = vrot.lane.b32.xlu0 %v3577, 32
    %v3641 = vpop.permute.xlu0 %3640
    %3642 = vrot.lane.b32.xlu0 %v3579, 32
    %v3643 = vpop.permute.xlu0 %3642
    %3644 = vrot.lane.b32.xlu0 %v3581, 32
    %v3645 = vpop.permute.xlu0 %3644
    %3646 = vrot.lane.b32.xlu0 %v3583, 32
    %v3647 = vpop.permute.xlu0 %3646
    %3648 = vrot.lane.b32.xlu0 %v3585, 32
    %v3649 = vpop.permute.xlu0 %3648
    %3650 = vrot.lane.b32.xlu0 %v3587, 32
    %v3651 = vpop.permute.xlu0 %3650
    %3652 = vrot.lane.b32.xlu0 %v3589, 32
    %v3653 = vpop.permute.xlu0 %3652
    %3654 = vrot.lane.b32.xlu0 %v3591, 32
    %v3655 = vpop.permute.xlu0 %3654
    %v3656 = vsel %vm1075, %v3593, %v3625
    %v3657 = vsel %vm1075, %v3595, %v3627
    %v3658 = vsel %vm1075, %v3597, %v3629
    %v3659 = vsel %vm1075, %v3599, %v3631
    %v3660 = vsel %vm1075, %v3601, %v3633
    %v3661 = vsel %vm1075, %v3603, %v3635
    %v3662 = vsel %vm1075, %v3605, %v3637
    %v3663 = vsel %vm1075, %v3607, %v3639
    %v3664 = vsel %vm1075, %v3609, %v3641
    %v3665 = vsel %vm1075, %v3611, %v3643
    %v3666 = vsel %vm1075, %v3613, %v3645
    %v3667 = vsel %vm1075, %v3615, %v3647
    %v3668 = vsel %vm1075, %v3617, %v3649
    %v3669 = vsel %vm1075, %v3619, %v3651
    %v3670 = vsel %vm1075, %v3621, %v3653
    %v3671 = vsel %vm1075, %v3623, %v3655
    %v3672 = vsel %vm1075, %v3625, %v3593
    %v3673 = vsel %vm1075, %v3627, %v3595
    %v3674 = vsel %vm1075, %v3629, %v3597
    %v3675 = vsel %vm1075, %v3631, %v3599
    %v3676 = vsel %vm1075, %v3633, %v3601
    %v3677 = vsel %vm1075, %v3635, %v3603
    %v3678 = vsel %vm1075, %v3637, %v3605
    %v3679 = vsel %vm1075, %v3639, %v3607
    %v3680 = vsel %vm1075, %v3641, %v3609
    %v3681 = vsel %vm1075, %v3643, %v3611
    %v3682 = vsel %vm1075, %v3645, %v3613
    %v3683 = vsel %vm1075, %v3647, %v3615
    %v3684 = vsel %vm1075, %v3649, %v3617
    %v3685 = vsel %vm1075, %v3651, %v3619
    %v3686 = vsel %vm1075, %v3653, %v3621
    %v3687 = vsel %vm1075, %v3655, %v3623
    %v3688 = vsel %vm1124, %v3672, %v3560
    %v3689 = vsel %vm1124, %v3656, %v3561
    %v3690 = vsel %vm1125, %v3673, %v3562
    %v3691 = vsel %vm1125, %v3657, %v3563
    %v3692 = vsel %vm1126, %v3674, %v3564
    %v3693 = vsel %vm1126, %v3658, %v3565
    %v3694 = vsel %vm1127, %v3675, %v3566
    %v3695 = vsel %vm1127, %v3659, %v3567
    %v3696 = vsel %vm1128, %v3676, %v3568
    %v3697 = vsel %vm1128, %v3660, %v3569
    %v3698 = vsel %vm1129, %v3677, %v3570
    %v3699 = vsel %vm1129, %v3661, %v3571
    %v3700 = vsel %vm1130, %v3678, %v3572
    %v3701 = vsel %vm1130, %v3662, %v3573
    %v3702 = vsel %vm1131, %v3679, %v3574
    %v3703 = vsel %vm1131, %v3663, %v3575
    %v3704 = vsel %vm1132, %v3680, %v3576
    %v3705 = vsel %vm1132, %v3664, %v3577
    %v3706 = vsel %vm1133, %v3681, %v3578
    %v3707 = vsel %vm1133, %v3665, %v3579
    %v3708 = vsel %vm1134, %v3682, %v3580
    %v3709 = vsel %vm1134, %v3666, %v3581
    %v3710 = vsel %vm1135, %v3683, %v3582
    %v3711 = vsel %vm1135, %v3667, %v3583
    %v3712 = vsel %vm1136, %v3684, %v3584
    %v3713 = vsel %vm1136, %v3668, %v3585
    %v3714 = vsel %vm1137, %v3685, %v3586
    %v3715 = vsel %vm1137, %v3669, %v3587
    %v3716 = vsel %vm1138, %v3686, %v3588
    %v3717 = vsel %vm1138, %v3670, %v3589
    %v3718 = vsel %vm1139, %v3687, %v3590
    %v3719 = vsel %vm1139, %v3671, %v3591
    %3720 = vrot.lane.b32.xlu0 %v3688, 64
    %v3721 = vpop.permute.xlu0 %3720
    %3722 = vrot.lane.b32.xlu0 %v3690, 64
    %v3723 = vpop.permute.xlu0 %3722
    %3724 = vrot.lane.b32.xlu0 %v3692, 64
    %v3725 = vpop.permute.xlu0 %3724
    %3726 = vrot.lane.b32.xlu0 %v3694, 64
    %v3727 = vpop.permute.xlu0 %3726
    %3728 = vrot.lane.b32.xlu0 %v3696, 64
    %v3729 = vpop.permute.xlu0 %3728
    %3730 = vrot.lane.b32.xlu0 %v3698, 64
    %v3731 = vpop.permute.xlu0 %3730
    %3732 = vrot.lane.b32.xlu0 %v3700, 64
    %v3733 = vpop.permute.xlu0 %3732
    %3734 = vrot.lane.b32.xlu0 %v3702, 64
    %v3735 = vpop.permute.xlu0 %3734
    %3736 = vrot.lane.b32.xlu0 %v3704, 64
    %v3737 = vpop.permute.xlu0 %3736
    %3738 = vrot.lane.b32.xlu0 %v3706, 64
    %v3739 = vpop.permute.xlu0 %3738
    %3740 = vrot.lane.b32.xlu0 %v3708, 64
    %v3741 = vpop.permute.xlu0 %3740
    %3742 = vrot.lane.b32.xlu0 %v3710, 64
    %v3743 = vpop.permute.xlu0 %3742
    %3744 = vrot.lane.b32.xlu0 %v3712, 64
    %v3745 = vpop.permute.xlu0 %3744
    %3746 = vrot.lane.b32.xlu0 %v3714, 64
    %v3747 = vpop.permute.xlu0 %3746
    %3748 = vrot.lane.b32.xlu0 %v3716, 64
    %v3749 = vpop.permute.xlu0 %3748
    %3750 = vrot.lane.b32.xlu0 %v3718, 64
    %v3751 = vpop.permute.xlu0 %3750
    %3752 = vrot.lane.b32.xlu0 %v3689, 64
    %v3753 = vpop.permute.xlu0 %3752
    %3754 = vrot.lane.b32.xlu0 %v3691, 64
    %v3755 = vpop.permute.xlu0 %3754
    %3756 = vrot.lane.b32.xlu0 %v3693, 64
    %v3757 = vpop.permute.xlu0 %3756
    %3758 = vrot.lane.b32.xlu0 %v3695, 64
    %v3759 = vpop.permute.xlu0 %3758
    %3760 = vrot.lane.b32.xlu0 %v3697, 64
    %v3761 = vpop.permute.xlu0 %3760
    %3762 = vrot.lane.b32.xlu0 %v3699, 64
    %v3763 = vpop.permute.xlu0 %3762
    %3764 = vrot.lane.b32.xlu0 %v3701, 64
    %v3765 = vpop.permute.xlu0 %3764
    %3766 = vrot.lane.b32.xlu0 %v3703, 64
    %v3767 = vpop.permute.xlu0 %3766
    %3768 = vrot.lane.b32.xlu0 %v3705, 64
    %v3769 = vpop.permute.xlu0 %3768
    %3770 = vrot.lane.b32.xlu0 %v3707, 64
    %v3771 = vpop.permute.xlu0 %3770
    %3772 = vrot.lane.b32.xlu0 %v3709, 64
    %v3773 = vpop.permute.xlu0 %3772
    %3774 = vrot.lane.b32.xlu0 %v3711, 64
    %v3775 = vpop.permute.xlu0 %3774
    %3776 = vrot.lane.b32.xlu0 %v3713, 64
    %v3777 = vpop.permute.xlu0 %3776
    %3778 = vrot.lane.b32.xlu0 %v3715, 64
    %v3779 = vpop.permute.xlu0 %3778
    %3780 = vrot.lane.b32.xlu0 %v3717, 64
    %v3781 = vpop.permute.xlu0 %3780
    %3782 = vrot.lane.b32.xlu0 %v3719, 64
    %v3783 = vpop.permute.xlu0 %3782
    %v3784 = vsel %vm1236, %v3721, %v3753
    %v3785 = vsel %vm1236, %v3723, %v3755
    %v3786 = vsel %vm1236, %v3725, %v3757
    %v3787 = vsel %vm1236, %v3727, %v3759
    %v3788 = vsel %vm1236, %v3729, %v3761
    %v3789 = vsel %vm1236, %v3731, %v3763
    %v3790 = vsel %vm1236, %v3733, %v3765
    %v3791 = vsel %vm1236, %v3735, %v3767
    %v3792 = vsel %vm1236, %v3737, %v3769
    %v3793 = vsel %vm1236, %v3739, %v3771
    %v3794 = vsel %vm1236, %v3741, %v3773
    %v3795 = vsel %vm1236, %v3743, %v3775
    %v3796 = vsel %vm1236, %v3745, %v3777
    %v3797 = vsel %vm1236, %v3747, %v3779
    %v3798 = vsel %vm1236, %v3749, %v3781
    %v3799 = vsel %vm1236, %v3751, %v3783
    %v3800 = vsel %vm1269, %v3784, %v3689
    %v3801 = vsel %vm1270, %v3785, %v3691
    %v3802 = vsel %vm1271, %v3786, %v3693
    %v3803 = vsel %vm1272, %v3787, %v3695
    %v3804 = vsel %vm1273, %v3788, %v3697
    %v3805 = vsel %vm1274, %v3789, %v3699
    %v3806 = vsel %vm1275, %v3790, %v3701
    %v3807 = vsel %vm1276, %v3791, %v3703
    %v3808 = vsel %vm1277, %v3792, %v3705
    %v3809 = vsel %vm1278, %v3793, %v3707
    %v3810 = vsel %vm1279, %v3794, %v3709
    %v3811 = vsel %vm1280, %v3795, %v3711
    %v3812 = vsel %vm1281, %v3796, %v3713
    %v3813 = vsel %vm1282, %v3797, %v3715
    %v3814 = vsel %vm1283, %v3798, %v3717
    %v3815 = vsel %vm1284, %v3799, %v3719
    %s3816 = scalar_lea.vmem [#allocation2], 3
    %v3817 = vld [vmem:[%s3816] sm:$0x1]
    %v3818 = vpack.c.bf16 %v3801, %v3800
    %v3819 = vpack.c.bf16 %v3803, %v3802
    %v3820 = vpack.c.bf16 %v3805, %v3804
    %v3821 = vpack.c.bf16 %v3807, %v3806
    %v3822 = vpack.c.bf16 %v3809, %v3808
    %v3823 = vpack.c.bf16 %v3811, %v3810
    %v3824 = vpack.c.bf16 %v3813, %v3812
    %v3825 = vpack.c.bf16 %v3815, %v3814
    %3826 = vmatprep.subr.bf16.mxu0 0
    %3827 = vmatpush1.bf16.msra.mxu0 %v3818
    %3828 = vmatprep.subr.bf16.mxu0 0
    %3829 = vmatpush1.bf16.msra.mxu0 %v3819
    %3830 = vmatprep.subr.bf16.mxu0 0
    %3831 = vmatpush1.bf16.msra.mxu0 %v3820
    %3832 = vmatprep.subr.bf16.mxu0 0
    %3833 = vmatpush1.bf16.msra.mxu0 %v3821
    %3834 = vmatprep.subr.bf16.mxu0 0
    %3835 = vmatpush1.bf16.msra.mxu0 %v3822
    %3836 = vmatprep.subr.bf16.mxu0 0
    %3837 = vmatpush1.bf16.msra.mxu0 %v3823
    %3838 = vmatprep.subr.bf16.mxu0 0
    %3839 = vmatpush1.bf16.msra.mxu0 %v3824
    %3840 = vmatprep.subr.bf16.mxu0 0
    %3841 = vmatpush1.bf16.msra.mxu0 %v3825
    %3842 = vmatprep.subr.bf16.mxu0 0
    %3843 = vmatpush1.bf16.msra.mxu0 0
    %3844 = vmatprep.subr.bf16.mxu0 0
    %3845 = vmatpush1.bf16.msra.mxu0 0
    %3846 = vmatprep.subr.bf16.mxu0 0
    %3847 = vmatpush1.bf16.msra.mxu0 0
    %3848 = vmatprep.subr.bf16.mxu0 0
    %3849 = vmatpush1.bf16.msra.mxu0 0
    %3850 = vmatprep.subr.bf16.mxu0 0
    %3851 = vmatpush1.bf16.msra.mxu0 0
    %3852 = vmatprep.subr.bf16.mxu0 0
    %3853 = vmatpush1.bf16.msra.mxu0 0
    %3854 = vmatprep.subr.bf16.mxu0 0
    %3855 = vmatpush1.bf16.msra.mxu0 0
    %3856 = vmatprep.subr.bf16.mxu0 0
    %3857 = vmatpush1.bf16.msra.mxu0 0
    %3858 = vmatprep.mubr.bf16.mxu0 0
    %3859 = vmatmul.mubr.bf16.gmra.mrb[0].mxu0 %v3817
    %v3860 = vpop.f32.mrb[0].mxu0
    %v3861 = vadd.f32 0.0, %v3860
    %v3862 = vpop.f32.mrb[0].mxu0
    %v3863 = vpop.f32.mrb[0].mxu0
    %v3864 = vpop.f32.mrb[0].mxu0
    %3865 = vdwg.mxu0
    %s3866 = scalar_lea.vmem [#allocation7], 6
    %3867 = vst [vmem:[%s3866] sm:$0x3] %v3861
    // Predicated region
    $region18: #{tpu_custom_call.1} parent=1 // pred_check
      _
    $region19: #{tpu_custom_call.1} parent=1 // pred_check_branch
      %3869 = sbr.rel (0) target = $region21
    $region20: #{tpu_custom_call.1} parent=1 // pred_region
      %s3871 = ssub.s32 128, 128
      %3872 = vsyncadd [#allocation4], %s3871
      %s3873 = sshll.u32 [#allocation7], 4
      %s3874 = int_to_ptr.vmem [resolvable:$true] %s3873
      %3879 = dma.vmem_to_hbm [thread:$0]  %s3874, 128, %s2, [#allocation4], 32, 32, 2
    $region21: #{tpu_custom_call.1} parent=1 // pred_fallthru
      _
    // Predicated region
    $region22: #{tpu_custom_call.1} parent=1 // pred_check
      _
    $region23: #{tpu_custom_call.1} parent=1 // pred_check_branch
      %3881 = sbr.rel (0) target = $region25
    $region24: #{tpu_custom_call.1} parent=1 // pred_region
      %3882 = dma.done [#allocation4], 128
    $region25: #{tpu_custom_call.1} parent=1 // pred_fallthru
      _
    %3883 = vsyncpa [#allocation3], 1
    %3884 = vsyncpa [#allocation6], 1
    %3885 = vsyncpa [#allocation4], 1

</llo_original>
